<compile_context>
chip_gen: v5e
topology: v5e:2x2
jax: 0.10.0
libtpu: 0.0.40
codegen_flags: <defaults>
</compile_context>

<pallas_src>
import math
import numpy as np
import jax
import jax.numpy as jnp
from jax import lax
from jax.experimental import pallas as pl
from jax.experimental.pallas import tpu as pltpu

# ----------------------------- configuration --------------------------------
SEQ = 8            # sentence length
HID = 32           # hidden size (stand-in for 768)
N_HEADS = 4
HEAD_DIM = HID // N_HEADS
FFN = 4 * HID
N_LAYERS = 2
VOCAB = 100
MAX_POS = 16

START_TOK = "<START>"
STOP_TOK = "<STOP>"
TAG_TO_IX = {"B": 0, "I": 1, "O": 2, START_TOK: 3, STOP_TOK: 4}
TAGSET = len(TAG_TO_IX)
START_IDX = TAG_TO_IX[START_TOK]
STOP_IDX = TAG_TO_IX[STOP_TOK]

ATTN_SCALE = 1.0 / math.sqrt(HEAD_DIM)
LN_EPS = 1e-12
NEG_INF = -10000.0

VMEM_SPEC = pl.BlockSpec(memory_space=pltpu.MemorySpace.VMEM)
SMEM_SPEC = pl.BlockSpec(memory_space=pltpu.MemorySpace.SMEM)


# ----------------------------- in-kernel helpers -----------------------------
def _layernorm(x, gamma, beta):
    mean = jnp.mean(x, axis=-1, keepdims=True)
    var = jnp.mean((x - mean) ** 2, axis=-1, keepdims=True)
    return (x - mean) * lax.rsqrt(var + LN_EPS) * gamma + beta


def _gelu(x):
    # tanh-approximation GELU (BERT's gelu); tanh runs on the EUP slot.
    c = math.sqrt(2.0 / math.pi)
    return 0.5 * x * (1.0 + jnp.tanh(c * (x + 0.044715 * x * x * x)))


# ----------------------------- fused forward kernel --------------------------
def fused_kernel(ids_ref,                                   # SMEM (SEQ,) int32
                 tok_emb_ref, pos_emb_ref, type_emb_ref,    # embeddings
                 embg_ref, embb_ref,                        # embedding LayerNorm
                 wq_ref, bq_ref, wk_ref, bk_ref, wv_ref, bv_ref,
                 wo_ref, bo_ref, ln1g_ref, ln1b_ref,
                 w1_ref, b1_ref, w2_ref, b2_ref, ln2g_ref, ln2b_ref,
                 fcw_ref, fcb_ref, trans_ref,
                 logits_ref, path_ref, score_ref, start_ref):
    # ---------------- embeddings: one-hot gather on the MXU + LayerNorm ------
    rows_s1 = lax.broadcasted_iota(jnp.int32, (SEQ, 1), 0)
    ids_col = jnp.zeros((SEQ, 1), jnp.int32)
    for i in range(SEQ):                         # static unroll; SMEM scalar reads
        ids_col = jnp.where(rows_s1 == i, ids_ref[i], ids_col)
    vocab_lanes = lax.broadcasted_iota(jnp.int32, (SEQ, VOCAB), 1)
    onehot = (vocab_lanes == ids_col).astype(jnp.float32)            # (SEQ, VOCAB)
    tok = jnp.dot(onehot, tok_emb_ref[...], preferred_element_type=jnp.float32)
    emb = tok + pos_emb_ref[0:SEQ, :] + type_emb_ref[0:1, :]
    x = _layernorm(emb, embg_ref[...], embb_ref[...])                # (SEQ, HID)

    # ---------------- transformer encoder layers (statically unrolled) -------
    for l in range(N_LAYERS):
        xb = jnp.broadcast_to(x, (N_HEADS, SEQ, HID))                # (H, S, D_model)
        q = jnp.einsum('hsd,hdk->hsk', xb, wq_ref[l],
                       preferred_element_type=jnp.float32) + bq_ref[l]
        k = jnp.einsum('hsd,hdk->hsk', xb, wk_ref[l],
                       preferred_element_type=jnp.float32) + bk_ref[l]
        v = jnp.einsum('hsd,hdk->hsk', xb, wv_ref[l],
                       preferred_element_type=jnp.float32) + bv_ref[l]

        s = jnp.einsum('hqd,hkd->hqk', q, k,
                       preferred_element_type=jnp.float32) * ATTN_SCALE
        s = s - jnp.max(s, axis=-1, keepdims=True)
        p = jnp.exp(s)
        p = p * pl.reciprocal(jnp.sum(p, axis=-1, keepdims=True), approx=True)

        ctx = jnp.einsum('hqk,hkd->hqd', p, v,
                         preferred_element_type=jnp.float32)         # (H, S, Dh)
        proj = jnp.einsum('hqd,hdm->hqm', ctx, wo_ref[l],
                          preferred_element_type=jnp.float32)        # (H, S, HID)
        attn = proj[0]
        for h in range(1, N_HEADS):
            attn = attn + proj[h]
        attn = attn + bo_ref[l]

        h1 = _layernorm(x + attn, ln1g_ref[l], ln1b_ref[l])

        ff = jnp.dot(h1, w1_ref[l], preferred_element_type=jnp.float32) + b1_ref[l]
        ff = _gelu(ff)
        ff = jnp.dot(ff, w2_ref[l], preferred_element_type=jnp.float32) + b2_ref[l]

        x = _layernorm(h1 + ff, ln2g_ref[l], ln2b_ref[l])

    # ---------------- emission logits ----------------------------------------
    logits = jnp.dot(x, fcw_ref[...], preferred_element_type=jnp.float32) + fcb_ref[...]
    logits_ref[...] = logits                                          # (SEQ, TAGSET)

    # ---------------- CRF Viterbi forward recursion ---------------------------
    trans = trans_ref[...]                                            # (T, T), [next, prev]
    lanes_T = lax.broadcasted_iota(jnp.int32, (1, TAGSET), 1)
    lanes_TT = lax.broadcasted_iota(jnp.int32, (TAGSET, TAGSET), 1)
    rows_seq = lax.broadcasted_iota(jnp.int32, (SEQ, 1), 0)
    lanes_seq = lax.broadcasted_iota(jnp.int32, (1, SEQ), 1)

    fv0 = jnp.where(lanes_T == START_IDX, 0.0, NEG_INF).astype(jnp.float32)
    bp0 = jnp.zeros((SEQ, TAGSET), jnp.int32)

    def fwd_body(t, carry):
        fv, bp = carry
        # M[next, prev] = forward_var[prev] + transitions[next, prev]
        M = fv + trans
        maxv = jnp.max(M, axis=1, keepdims=True)                      # (T, 1)
        is_max = M == maxv
        # first-occurrence argmax (matches torch.max index semantics)
        bp_row = jnp.min(jnp.where(is_max, lanes_TT, TAGSET), axis=1).astype(jnp.int32)
        bp = jnp.where(rows_seq == t, bp_row[None, :], bp)            # vreg-resident update
        feat = jnp.sum(jnp.where(rows_seq == t, logits, 0.0),
                       axis=0, keepdims=True)                          # (1, T) row t
        fv = maxv.T + feat                                             # emission after max
        return fv, bp

    fv, bp = lax.fori_loop(0, SEQ, fwd_body, (fv0, bp0))

    term = fv + trans[STOP_IDX:STOP_IDX + 1, :]                        # (1, T)
    best_score = jnp.max(term, axis=1, keepdims=True)                  # (1, 1)
    best_tag = jnp.min(jnp.where(term == best_score, lanes_T, TAGSET),
                       axis=1, keepdims=True).astype(jnp.int32)        # (1, 1)
    score_ref[...] = best_score

    # ---------------- in-kernel backpointer walk ------------------------------
    path0 = jnp.where(lanes_seq == SEQ - 1, best_tag, 0)               # (1, SEQ)

    def bt_body(i, carry):
        cur, path = carry
        t = SEQ - 1 - i                                                # t = SEQ-1 .. 1
        bp_row = jnp.sum(jnp.where(rows_seq == t, bp, 0),
                         axis=0, keepdims=True)                        # (1, T) row t
        prev = jnp.sum(jnp.where(lanes_T == cur, bp_row, 0),
                       axis=1, keepdims=True)                          # (1, 1)
        path = jnp.where(lanes_seq == t - 1, prev, path)
        return prev, path

    cur, path = lax.fori_loop(0, SEQ - 1, bt_body, (best_tag, path0))

    bp_row0 = jnp.sum(jnp.where(rows_seq == 0, bp, 0), axis=0, keepdims=True)
    start_tag = jnp.sum(jnp.where(lanes_T == cur, bp_row0, 0),
                        axis=1, keepdims=True)                         # should be START_IDX

    path_ref[...] = path
    start_ref[...] = start_tag


def _forward_impl(params, token_ids):
    return pl.pallas_call(
        fused_kernel,
        out_shape=(
            jax.ShapeDtypeStruct((SEQ, TAGSET), jnp.float32),   # logits
            jax.ShapeDtypeStruct((1, SEQ), jnp.int32),          # decoded path
            jax.ShapeDtypeStruct((1, 1), jnp.float32),          # path score
            jax.ShapeDtypeStruct((1, 1), jnp.int32),            # start-tag check
        ),
        in_specs=[SMEM_SPEC] + [VMEM_SPEC] * 24,
        out_specs=(VMEM_SPEC, VMEM_SPEC, VMEM_SPEC, VMEM_SPEC),
    )(token_ids,
      params["tok_emb"], params["pos_emb"], params["type_emb"],
      params["emb_ln_g"], params["emb_ln_b"],
      params["wq"], params["bq"], params["wk"], params["bk"],
      params["wv"], params["bv"], params["wo"], params["bo"],
      params["ln1_g"], params["ln1_b"], params["w1"], params["b1"],
      params["w2"], params["b2"], params["ln2_g"], params["ln2_b"],
      params["fc_w"], params["fc_b"], params["transitions"])


bert_crf_forward = jax.jit(_forward_impl)


# ----------------------------- parameter init (deterministic) -----------------
def init_params(key):
    def nrm(k, shape, std=0.02):
        return (std * jax.random.normal(k, shape)).astype(jnp.float32)

    def head_split_in(w):   # (HID, HID) -> (N_HEADS, HID, HEAD_DIM)
        return w.reshape(HID, N_HEADS, HEAD_DIM).transpose(1, 0, 2)

    keys = iter(jax.random.split(key, 64))
    p = {
        "tok_emb": nrm(next(keys), (VOCAB, HID)),
        "pos_emb": nrm(next(keys), (MAX_POS, HID)),
        "type_emb": nrm(next(keys), (2, HID)),
        "emb_ln_g": jnp.ones((1, HID), jnp.float32),
        "emb_ln_b": jnp.zeros((1, HID), jnp.float32),
    }

    names = ["wq", "bq", "wk", "bk", "wv", "bv", "wo", "bo",
             "ln1_g", "ln1_b", "w1", "b1", "w2", "b2", "ln2_g", "ln2_b"]
    L = {n: [] for n in names}
    for _ in range(N_LAYERS):
        L["wq"].append(head_split_in(nrm(next(keys), (HID, HID))))
        L["bq"].append(jnp.zeros((N_HEADS, 1, HEAD_DIM), jnp.float32))
        L["wk"].append(head_split_in(nrm(next(keys), (HID, HID))))
        L["bk"].append(jnp.zeros((N_HEADS, 1, HEAD_DIM), jnp.float32))
        L["wv"].append(head_split_in(nrm(next(keys), (HID, HID))))
        L["bv"].append(jnp.zeros((N_HEADS, 1, HEAD_DIM), jnp.float32))
        # output projection: wo[h] = Wo[h*Dh:(h+1)*Dh, :]
        L["wo"].append(nrm(next(keys), (HID, HID)).reshape(N_HEADS, HEAD_DIM, HID))
        L["bo"].append(jnp.zeros((1, HID), jnp.float32))
        L["ln1_g"].append(jnp.ones((1, HID), jnp.float32))
        L["ln1_b"].append(jnp.zeros((1, HID), jnp.float32))
        L["w1"].append(nrm(next(keys), (HID, FFN)))
        L["b1"].append(jnp.zeros((1, FFN), jnp.float32))
        L["w2"].append(nrm(next(keys), (FFN, HID)))
        L["b2"].append(jnp.zeros((1, HID), jnp.float32))
        L["ln2_g"].append(jnp.ones((1, HID), jnp.float32))
        L["ln2_b"].append(jnp.zeros((1, HID), jnp.float32))
    for n in names:
        p[n] = jnp.stack(L[n], axis=0)

    # fc: stored (in, out) == transpose of nn.Linear.weight
    p["fc_w"] = nrm(next(keys), (HID, TAGSET), std=0.1)
    p["fc_b"] = jnp.zeros((1, TAGSET), jnp.float32)

    # CRF transitions: transitions[i, j] = score of j -> i
    trans = jax.random.normal(next(keys), (TAGSET, TAGSET)).astype(jnp.float32)
    trans = trans.at[START_IDX, :].set(NEG_INF)
    trans = trans.at[:, STOP_IDX].set(NEG_INF)
    p["transitions"] = trans
    return p


# ----------------------------- main -------------------------------------------
if __name__ == "__main__":
    key = jax.random.PRNGKey(0)
    pkey, skey = jax.random.split(key)
    params = init_params(pkey)

    # deterministic small "sentence" of token ids (shape (SEQ,))
    sentence = jax.random.randint(skey, (SEQ,), 0, VOCAB, dtype=jnp.int32)

    logits, path, score, start_tag = bert_crf_forward(params, sentence)
    jax.block_until_ready((logits, path, score, start_tag))

    path_list = [int(t) for t in np.asarray(path)[0]]
    path_score = float(np.asarray(score)[0, 0])

    assert int(np.asarray(start_tag)[0, 0]) == START_IDX
    assert len(path_list) == SEQ
    assert all(0 <= t < TAGSET for t in path_list)
    assert np.isfinite(path_score)
    print("KERNEL_OK")
</pallas_src>

<mosaic_0001>
module attributes {stable_mosaic.version = 11 : i64} {
  func.func @fused_kernel(%arg0: memref<8xi32, #tpu.memory_space<smem>>, %arg1: memref<100x32xf32, #tpu.memory_space<vmem>>, %arg2: memref<16x32xf32, #tpu.memory_space<vmem>>, %arg3: memref<2x32xf32, #tpu.memory_space<vmem>>, %arg4: memref<1x32xf32, #tpu.memory_space<vmem>>, %arg5: memref<1x32xf32, #tpu.memory_space<vmem>>, %arg6: memref<2x4x32x8xf32, #tpu.memory_space<vmem>>, %arg7: memref<2x4x1x8xf32, #tpu.memory_space<vmem>>, %arg8: memref<2x4x32x8xf32, #tpu.memory_space<vmem>>, %arg9: memref<2x4x1x8xf32, #tpu.memory_space<vmem>>, %arg10: memref<2x4x32x8xf32, #tpu.memory_space<vmem>>, %arg11: memref<2x4x1x8xf32, #tpu.memory_space<vmem>>, %arg12: memref<2x4x8x32xf32, #tpu.memory_space<vmem>>, %arg13: memref<2x1x32xf32, #tpu.memory_space<vmem>>, %arg14: memref<2x1x32xf32, #tpu.memory_space<vmem>>, %arg15: memref<2x1x32xf32, #tpu.memory_space<vmem>>, %arg16: memref<2x32x128xf32, #tpu.memory_space<vmem>>, %arg17: memref<2x1x128xf32, #tpu.memory_space<vmem>>, %arg18: memref<2x128x32xf32, #tpu.memory_space<vmem>>, %arg19: memref<2x1x32xf32, #tpu.memory_space<vmem>>, %arg20: memref<2x1x32xf32, #tpu.memory_space<vmem>>, %arg21: memref<2x1x32xf32, #tpu.memory_space<vmem>>, %arg22: memref<32x5xf32, #tpu.memory_space<vmem>>, %arg23: memref<1x5xf32, #tpu.memory_space<vmem>>, %arg24: memref<5x5xf32, #tpu.memory_space<vmem>>, %arg25: memref<8x5xf32, #tpu.memory_space<vmem>>, %arg26: memref<1x8xi32, #tpu.memory_space<vmem>>, %arg27: memref<1x1xf32, #tpu.memory_space<vmem>>, %arg28: memref<1x1xi32, #tpu.memory_space<vmem>>) attributes {dimension_semantics = [], scalar_prefetch = 0 : i64, scratch_operands = 0 : i64, tpu.core_type = #tpu.core_type<tc>} {
    %0 = tpu.iota {dimensions = array<i32: 0>} : vector<8x1xi32>
    %c0_i32 = arith.constant 0 : i32
    %1 = vector.broadcast %c0_i32 : i32 to vector<8x1xi32>
    %c0_i32_0 = arith.constant 0 : i32
    %2 = vector.broadcast %c0_i32_0 : i32 to vector<8x1xi32>
    %3 = arith.cmpi eq, %0, %2 : vector<8x1xi32>
    %c0 = arith.constant 0 : index
    %4 = memref.load %arg0[%c0] : memref<8xi32, #tpu.memory_space<smem>>
    %5 = vector.broadcast %4 : i32 to vector<8x1xi32>
    %6 = arith.select %3, %5, %1 : vector<8x1xi1>, vector<8x1xi32>
    %c1_i32 = arith.constant 1 : i32
    %7 = vector.broadcast %c1_i32 : i32 to vector<8x1xi32>
    %8 = arith.cmpi eq, %0, %7 : vector<8x1xi32>
    %c1 = arith.constant 1 : index
    %9 = memref.load %arg0[%c1] : memref<8xi32, #tpu.memory_space<smem>>
    %10 = vector.broadcast %9 : i32 to vector<8x1xi32>
    %11 = arith.select %8, %10, %6 : vector<8x1xi1>, vector<8x1xi32>
    %c2_i32 = arith.constant 2 : i32
    %12 = vector.broadcast %c2_i32 : i32 to vector<8x1xi32>
    %13 = arith.cmpi eq, %0, %12 : vector<8x1xi32>
    %c2 = arith.constant 2 : index
    %14 = memref.load %arg0[%c2] : memref<8xi32, #tpu.memory_space<smem>>
    %15 = vector.broadcast %14 : i32 to vector<8x1xi32>
    %16 = arith.select %13, %15, %11 : vector<8x1xi1>, vector<8x1xi32>
    %c3_i32 = arith.constant 3 : i32
    %17 = vector.broadcast %c3_i32 : i32 to vector<8x1xi32>
    %18 = arith.cmpi eq, %0, %17 : vector<8x1xi32>
    %c3 = arith.constant 3 : index
    %19 = memref.load %arg0[%c3] : memref<8xi32, #tpu.memory_space<smem>>
    %20 = vector.broadcast %19 : i32 to vector<8x1xi32>
    %21 = arith.select %18, %20, %16 : vector<8x1xi1>, vector<8x1xi32>
    %c4_i32 = arith.constant 4 : i32
    %22 = vector.broadcast %c4_i32 : i32 to vector<8x1xi32>
    %23 = arith.cmpi eq, %0, %22 : vector<8x1xi32>
    %c4 = arith.constant 4 : index
    %24 = memref.load %arg0[%c4] : memref<8xi32, #tpu.memory_space<smem>>
    %25 = vector.broadcast %24 : i32 to vector<8x1xi32>
    %26 = arith.select %23, %25, %21 : vector<8x1xi1>, vector<8x1xi32>
    %c5_i32 = arith.constant 5 : i32
    %27 = vector.broadcast %c5_i32 : i32 to vector<8x1xi32>
    %28 = arith.cmpi eq, %0, %27 : vector<8x1xi32>
    %c5 = arith.constant 5 : index
    %29 = memref.load %arg0[%c5] : memref<8xi32, #tpu.memory_space<smem>>
    %30 = vector.broadcast %29 : i32 to vector<8x1xi32>
    %31 = arith.select %28, %30, %26 : vector<8x1xi1>, vector<8x1xi32>
    %c6_i32 = arith.constant 6 : i32
    %32 = vector.broadcast %c6_i32 : i32 to vector<8x1xi32>
    %33 = arith.cmpi eq, %0, %32 : vector<8x1xi32>
    %c6 = arith.constant 6 : index
    %34 = memref.load %arg0[%c6] : memref<8xi32, #tpu.memory_space<smem>>
    %35 = vector.broadcast %34 : i32 to vector<8x1xi32>
    %36 = arith.select %33, %35, %31 : vector<8x1xi1>, vector<8x1xi32>
    %c7_i32 = arith.constant 7 : i32
    %37 = vector.broadcast %c7_i32 : i32 to vector<8x1xi32>
    %38 = arith.cmpi eq, %0, %37 : vector<8x1xi32>
    %c7 = arith.constant 7 : index
    %39 = memref.load %arg0[%c7] : memref<8xi32, #tpu.memory_space<smem>>
    %40 = vector.broadcast %39 : i32 to vector<8x1xi32>
    %41 = arith.select %38, %40, %36 : vector<8x1xi1>, vector<8x1xi32>
    %42 = tpu.iota {dimensions = array<i32: 1>} : vector<8x100xi32>
    %43 = vector.broadcast %41 : vector<8x1xi32> to vector<8x100xi32>
    %44 = arith.cmpi eq, %42, %43 : vector<8x100xi32>
    %45 = arith.extui %44 : vector<8x100xi1> to vector<8x100xi32>
    %46 = arith.sitofp %45 : vector<8x100xi32> to vector<8x100xf32>
    %c0_1 = arith.constant 0 : index
    %c0_2 = arith.constant 0 : index
    %47 = vector.load %arg1[%c0_1, %c0_2] : memref<100x32xf32, #tpu.memory_space<vmem>>, vector<100x32xf32>
    %cst = arith.constant dense<0.000000e+00> : vector<8x32xf32>
    %48 = tpu.matmul %46, %47, %cst {dimension_numbers = #tpu.dot_dimension_numbers<[1], [0], [0], [1], [0, 0, 1, 1], [], []>} : vector<8x100xf32>, vector<100x32xf32>, vector<8x32xf32> -> vector<8x32xf32>
    %c0_3 = arith.constant 0 : index
    %c0_4 = arith.constant 0 : index
    %49 = vector.load %arg2[%c0_3, %c0_4] : memref<16x32xf32, #tpu.memory_space<vmem>>, vector<8x32xf32>
    %50 = arith.addf %48, %49 : vector<8x32xf32>
    %c0_5 = arith.constant 0 : index
    %c0_6 = arith.constant 0 : index
    %51 = vector.load %arg3[%c0_5, %c0_6] : memref<2x32xf32, #tpu.memory_space<vmem>>, vector<1x32xf32>
    %52 = vector.broadcast %51 : vector<1x32xf32> to vector<8x32xf32>
    %53 = arith.addf %50, %52 : vector<8x32xf32>
    %c0_7 = arith.constant 0 : index
    %c0_8 = arith.constant 0 : index
    %54 = vector.load %arg4[%c0_7, %c0_8] : memref<1x32xf32, #tpu.memory_space<vmem>>, vector<1x32xf32>
    %c0_9 = arith.constant 0 : index
    %c0_10 = arith.constant 0 : index
    %55 = vector.load %arg5[%c0_9, %c0_10] : memref<1x32xf32, #tpu.memory_space<vmem>>, vector<1x32xf32>
    %cst_11 = arith.constant dense<0.000000e+00> : vector<8xf32>
    %56 = vector.multi_reduction <add>, %53, %cst_11 [1] : vector<8x32xf32> to vector<8xf32>
    %57 = vector.shape_cast %56 : vector<8xf32> to vector<8x1xf32>
    %cst_12 = arith.constant 3.200000e+01 : f32
    %58 = vector.broadcast %cst_12 : f32 to vector<8x1xf32>
    %59 = arith.divf %57, %58 : vector<8x1xf32>
    %60 = vector.broadcast %59 : vector<8x1xf32> to vector<8x32xf32>
    %61 = arith.subf %53, %60 : vector<8x32xf32>
    %62 = arith.mulf %61, %61 : vector<8x32xf32>
    %cst_13 = arith.constant dense<0.000000e+00> : vector<8xf32>
    %63 = vector.multi_reduction <add>, %62, %cst_13 [1] : vector<8x32xf32> to vector<8xf32>
    %64 = vector.shape_cast %63 : vector<8xf32> to vector<8x1xf32>
    %cst_14 = arith.constant 3.200000e+01 : f32
    %65 = vector.broadcast %cst_14 : f32 to vector<8x1xf32>
    %66 = arith.divf %64, %65 : vector<8x1xf32>
    %67 = vector.broadcast %59 : vector<8x1xf32> to vector<8x32xf32>
    %68 = arith.subf %53, %67 : vector<8x32xf32>
    %cst_15 = arith.constant 9.99999996E-13 : f32
    %69 = vector.broadcast %cst_15 : f32 to vector<8x1xf32>
    %70 = arith.addf %66, %69 : vector<8x1xf32>
    %71 = math.rsqrt %70 : vector<8x1xf32>
    %72 = vector.broadcast %71 : vector<8x1xf32> to vector<8x32xf32>
    %73 = arith.mulf %68, %72 : vector<8x32xf32>
    %74 = vector.broadcast %54 : vector<1x32xf32> to vector<8x32xf32>
    %75 = arith.mulf %73, %74 : vector<8x32xf32>
    %76 = vector.broadcast %55 : vector<1x32xf32> to vector<8x32xf32>
    %77 = arith.addf %75, %76 : vector<8x32xf32>
    %78 = vector.shape_cast %77 : vector<8x32xf32> to vector<1x8x32xf32>
    %79 = vector.broadcast %78 : vector<1x8x32xf32> to vector<4x8x32xf32>
    %c0_16 = arith.constant 0 : index
    %c0_17 = arith.constant 0 : index
    %c0_18 = arith.constant 0 : index
    %c0_19 = arith.constant 0 : index
    %80 = vector.load %arg6[%c0_16, %c0_17, %c0_18, %c0_19] : memref<2x4x32x8xf32, #tpu.memory_space<vmem>>, vector<1x4x32x8xf32>
    %81 = vector.shape_cast %80 : vector<1x4x32x8xf32> to vector<4x32x8xf32>
    "tpu.trace_start"() <{level = 10 : i32, message = "hsd,hdk->hsk"}> : () -> ()
    %cst_20 = arith.constant dense<0.000000e+00> : vector<4x8x8xf32>
    %82 = tpu.matmul %79, %81, %cst_20 {dimension_numbers = #tpu.dot_dimension_numbers<[2], [1], [1], [2], [0, 0, 0, 1, 1, 2], [0], [0]>} : vector<4x8x32xf32>, vector<4x32x8xf32>, vector<4x8x8xf32> -> vector<4x8x8xf32>
    "tpu.trace_stop"() : () -> ()
    %c0_21 = arith.constant 0 : index
    %c0_22 = arith.constant 0 : index
    %c0_23 = arith.constant 0 : index
    %c0_24 = arith.constant 0 : index
    %83 = vector.load %arg7[%c0_21, %c0_22, %c0_23, %c0_24] : memref<2x4x1x8xf32, #tpu.memory_space<vmem>>, vector<1x4x1x8xf32>
    %84 = vector.shape_cast %83 : vector<1x4x1x8xf32> to vector<4x1x8xf32>
    %85 = vector.broadcast %84 : vector<4x1x8xf32> to vector<4x8x8xf32>
    %86 = arith.addf %82, %85 : vector<4x8x8xf32>
    %c0_25 = arith.constant 0 : index
    %c0_26 = arith.constant 0 : index
    %c0_27 = arith.constant 0 : index
    %c0_28 = arith.constant 0 : index
    %87 = vector.load %arg8[%c0_25, %c0_26, %c0_27, %c0_28] : memref<2x4x32x8xf32, #tpu.memory_space<vmem>>, vector<1x4x32x8xf32>
    %88 = vector.shape_cast %87 : vector<1x4x32x8xf32> to vector<4x32x8xf32>
    "tpu.trace_start"() <{level = 10 : i32, message = "hsd,hdk->hsk"}> : () -> ()
    %cst_29 = arith.constant dense<0.000000e+00> : vector<4x8x8xf32>
    %89 = tpu.matmul %79, %88, %cst_29 {dimension_numbers = #tpu.dot_dimension_numbers<[2], [1], [1], [2], [0, 0, 0, 1, 1, 2], [0], [0]>} : vector<4x8x32xf32>, vector<4x32x8xf32>, vector<4x8x8xf32> -> vector<4x8x8xf32>
    "tpu.trace_stop"() : () -> ()
    %c0_30 = arith.constant 0 : index
    %c0_31 = arith.constant 0 : index
    %c0_32 = arith.constant 0 : index
    %c0_33 = arith.constant 0 : index
    %90 = vector.load %arg9[%c0_30, %c0_31, %c0_32, %c0_33] : memref<2x4x1x8xf32, #tpu.memory_space<vmem>>, vector<1x4x1x8xf32>
    %91 = vector.shape_cast %90 : vector<1x4x1x8xf32> to vector<4x1x8xf32>
    %92 = vector.broadcast %91 : vector<4x1x8xf32> to vector<4x8x8xf32>
    %93 = arith.addf %89, %92 : vector<4x8x8xf32>
    %c0_34 = arith.constant 0 : index
    %c0_35 = arith.constant 0 : index
    %c0_36 = arith.constant 0 : index
    %c0_37 = arith.constant 0 : index
    %94 = vector.load %arg10[%c0_34, %c0_35, %c0_36, %c0_37] : memref<2x4x32x8xf32, #tpu.memory_space<vmem>>, vector<1x4x32x8xf32>
    %95 = vector.shape_cast %94 : vector<1x4x32x8xf32> to vector<4x32x8xf32>
    "tpu.trace_start"() <{level = 10 : i32, message = "hsd,hdk->hsk"}> : () -> ()
    %cst_38 = arith.constant dense<0.000000e+00> : vector<4x8x8xf32>
    %96 = tpu.matmul %79, %95, %cst_38 {dimension_numbers = #tpu.dot_dimension_numbers<[2], [1], [1], [2], [0, 0, 0, 1, 1, 2], [0], [0]>} : vector<4x8x32xf32>, vector<4x32x8xf32>, vector<4x8x8xf32> -> vector<4x8x8xf32>
    "tpu.trace_stop"() : () -> ()
    %c0_39 = arith.constant 0 : index
    %c0_40 = arith.constant 0 : index
    %c0_41 = arith.constant 0 : index
    %c0_42 = arith.constant 0 : index
    %97 = vector.load %arg11[%c0_39, %c0_40, %c0_41, %c0_42] : memref<2x4x1x8xf32, #tpu.memory_space<vmem>>, vector<1x4x1x8xf32>
    %98 = vector.shape_cast %97 : vector<1x4x1x8xf32> to vector<4x1x8xf32>
    %99 = vector.broadcast %98 : vector<4x1x8xf32> to vector<4x8x8xf32>
    %100 = arith.addf %96, %99 : vector<4x8x8xf32>
    "tpu.trace_start"() <{level = 10 : i32, message = "hqd,hkd->hqk"}> : () -> ()
    %cst_43 = arith.constant dense<0.000000e+00> : vector<4x8x8xf32>
    %101 = tpu.matmul %86, %93, %cst_43 {dimension_numbers = #tpu.dot_dimension_numbers<[2], [2], [1], [1], [0, 0, 0, 1, 1, 1], [0], [0]>} : vector<4x8x8xf32>, vector<4x8x8xf32>, vector<4x8x8xf32> -> vector<4x8x8xf32>
    "tpu.trace_stop"() : () -> ()
    %cst_44 = arith.constant 0.353553385 : f32
    %102 = vector.broadcast %cst_44 : f32 to vector<4x8x8xf32>
    %103 = arith.mulf %101, %102 : vector<4x8x8xf32>
    %cst_45 = arith.constant dense<0xFF800000> : vector<4x8xf32>
    %104 = vector.multi_reduction <maximumf>, %103, %cst_45 [2] : vector<4x8x8xf32> to vector<4x8xf32>
    %105 = vector.shape_cast %104 : vector<4x8xf32> to vector<4x8x1xf32>
    %106 = vector.broadcast %105 : vector<4x8x1xf32> to vector<4x8x8xf32>
    %107 = arith.subf %103, %106 : vector<4x8x8xf32>
    %108 = math.exp %107 : vector<4x8x8xf32>
    %cst_46 = arith.constant dense<0.000000e+00> : vector<4x8xf32>
    %109 = vector.multi_reduction <add>, %108, %cst_46 [2] : vector<4x8x8xf32> to vector<4x8xf32>
    %110 = vector.shape_cast %109 : vector<4x8xf32> to vector<4x8x1xf32>
    %111 = tpu.reciprocal %110 {approx = true} : vector<4x8x1xf32> -> vector<4x8x1xf32>
    %112 = vector.broadcast %111 : vector<4x8x1xf32> to vector<4x8x8xf32>
    %113 = arith.mulf %108, %112 : vector<4x8x8xf32>
    "tpu.trace_start"() <{level = 10 : i32, message = "hqk,hkd->hqd"}> : () -> ()
    %cst_47 = arith.constant dense<0.000000e+00> : vector<4x8x8xf32>
    %114 = tpu.matmul %113, %100, %cst_47 {dimension_numbers = #tpu.dot_dimension_numbers<[2], [1], [1], [2], [0, 0, 0, 1, 1, 2], [0], [0]>} : vector<4x8x8xf32>, vector<4x8x8xf32>, vector<4x8x8xf32> -> vector<4x8x8xf32>
    "tpu.trace_stop"() : () -> ()
    %c0_48 = arith.constant 0 : index
    %c0_49 = arith.constant 0 : index
    %c0_50 = arith.constant 0 : index
    %c0_51 = arith.constant 0 : index
    %115 = vector.load %arg12[%c0_48, %c0_49, %c0_50, %c0_51] : memref<2x4x8x32xf32, #tpu.memory_space<vmem>>, vector<1x4x8x32xf32>
    %116 = vector.shape_cast %115 : vector<1x4x8x32xf32> to vector<4x8x32xf32>
    "tpu.trace_start"() <{level = 10 : i32, message = "hqd,hdm->hqm"}> : () -> ()
    %cst_52 = arith.constant dense<0.000000e+00> : vector<4x8x32xf32>
    %117 = tpu.matmul %114, %116, %cst_52 {dimension_numbers = #tpu.dot_dimension_numbers<[2], [1], [1], [2], [0, 0, 0, 1, 1, 2], [0], [0]>} : vector<4x8x8xf32>, vector<4x8x32xf32>, vector<4x8x32xf32> -> vector<4x8x32xf32>
    "tpu.trace_stop"() : () -> ()
    %118 = vector.extract_strided_slice %117 {offsets = [0, 0, 0], sizes = [1, 8, 32], strides = [1, 1, 1]} : vector<4x8x32xf32> to vector<1x8x32xf32>
    %119 = vector.shape_cast %118 : vector<1x8x32xf32> to vector<8x32xf32>
    %120 = vector.extract_strided_slice %117 {offsets = [1, 0, 0], sizes = [1, 8, 32], strides = [1, 1, 1]} : vector<4x8x32xf32> to vector<1x8x32xf32>
    %121 = vector.shape_cast %120 : vector<1x8x32xf32> to vector<8x32xf32>
    %122 = arith.addf %119, %121 : vector<8x32xf32>
    %123 = vector.extract_strided_slice %117 {offsets = [2, 0, 0], sizes = [1, 8, 32], strides = [1, 1, 1]} : vector<4x8x32xf32> to vector<1x8x32xf32>
    %124 = vector.shape_cast %123 : vector<1x8x32xf32> to vector<8x32xf32>
    %125 = arith.addf %122, %124 : vector<8x32xf32>
    %126 = vector.extract_strided_slice %117 {offsets = [3, 0, 0], sizes = [1, 8, 32], strides = [1, 1, 1]} : vector<4x8x32xf32> to vector<1x8x32xf32>
    %127 = vector.shape_cast %126 : vector<1x8x32xf32> to vector<8x32xf32>
    %128 = arith.addf %125, %127 : vector<8x32xf32>
    %c0_53 = arith.constant 0 : index
    %c0_54 = arith.constant 0 : index
    %c0_55 = arith.constant 0 : index
    %129 = vector.load %arg13[%c0_53, %c0_54, %c0_55] : memref<2x1x32xf32, #tpu.memory_space<vmem>>, vector<1x1x32xf32>
    %130 = vector.shape_cast %129 : vector<1x1x32xf32> to vector<1x32xf32>
    %131 = vector.broadcast %130 : vector<1x32xf32> to vector<8x32xf32>
    %132 = arith.addf %128, %131 : vector<8x32xf32>
    %133 = arith.addf %77, %132 : vector<8x32xf32>
    %c0_56 = arith.constant 0 : index
    %c0_57 = arith.constant 0 : index
    %c0_58 = arith.constant 0 : index
    %134 = vector.load %arg14[%c0_56, %c0_57, %c0_58] : memref<2x1x32xf32, #tpu.memory_space<vmem>>, vector<1x1x32xf32>
    %135 = vector.shape_cast %134 : vector<1x1x32xf32> to vector<1x32xf32>
    %c0_59 = arith.constant 0 : index
    %c0_60 = arith.constant 0 : index
    %c0_61 = arith.constant 0 : index
    %136 = vector.load %arg15[%c0_59, %c0_60, %c0_61] : memref<2x1x32xf32, #tpu.memory_space<vmem>>, vector<1x1x32xf32>
    %137 = vector.shape_cast %136 : vector<1x1x32xf32> to vector<1x32xf32>
    %cst_62 = arith.constant dense<0.000000e+00> : vector<8xf32>
    %138 = vector.multi_reduction <add>, %133, %cst_62 [1] : vector<8x32xf32> to vector<8xf32>
    %139 = vector.shape_cast %138 : vector<8xf32> to vector<8x1xf32>
    %cst_63 = arith.constant 3.200000e+01 : f32
    %140 = vector.broadcast %cst_63 : f32 to vector<8x1xf32>
    %141 = arith.divf %139, %140 : vector<8x1xf32>
    %142 = vector.broadcast %141 : vector<8x1xf32> to vector<8x32xf32>
    %143 = arith.subf %133, %142 : vector<8x32xf32>
    %144 = arith.mulf %143, %143 : vector<8x32xf32>
    %cst_64 = arith.constant dense<0.000000e+00> : vector<8xf32>
    %145 = vector.multi_reduction <add>, %144, %cst_64 [1] : vector<8x32xf32> to vector<8xf32>
    %146 = vector.shape_cast %145 : vector<8xf32> to vector<8x1xf32>
    %cst_65 = arith.constant 3.200000e+01 : f32
    %147 = vector.broadcast %cst_65 : f32 to vector<8x1xf32>
    %148 = arith.divf %146, %147 : vector<8x1xf32>
    %149 = vector.broadcast %141 : vector<8x1xf32> to vector<8x32xf32>
    %150 = arith.subf %133, %149 : vector<8x32xf32>
    %cst_66 = arith.constant 9.99999996E-13 : f32
    %151 = vector.broadcast %cst_66 : f32 to vector<8x1xf32>
    %152 = arith.addf %148, %151 : vector<8x1xf32>
    %153 = math.rsqrt %152 : vector<8x1xf32>
    %154 = vector.broadcast %153 : vector<8x1xf32> to vector<8x32xf32>
    %155 = arith.mulf %150, %154 : vector<8x32xf32>
    %156 = vector.broadcast %135 : vector<1x32xf32> to vector<8x32xf32>
    %157 = arith.mulf %155, %156 : vector<8x32xf32>
    %158 = vector.broadcast %137 : vector<1x32xf32> to vector<8x32xf32>
    %159 = arith.addf %157, %158 : vector<8x32xf32>
    %c0_67 = arith.constant 0 : index
    %c0_68 = arith.constant 0 : index
    %c0_69 = arith.constant 0 : index
    %160 = vector.load %arg16[%c0_67, %c0_68, %c0_69] : memref<2x32x128xf32, #tpu.memory_space<vmem>>, vector<1x32x128xf32>
    %161 = vector.shape_cast %160 : vector<1x32x128xf32> to vector<32x128xf32>
    %cst_70 = arith.constant dense<0.000000e+00> : vector<8x128xf32>
    %162 = tpu.matmul %159, %161, %cst_70 {dimension_numbers = #tpu.dot_dimension_numbers<[1], [0], [0], [1], [0, 0, 1, 1], [], []>} : vector<8x32xf32>, vector<32x128xf32>, vector<8x128xf32> -> vector<8x128xf32>
    %c0_71 = arith.constant 0 : index
    %c0_72 = arith.constant 0 : index
    %c0_73 = arith.constant 0 : index
    %163 = vector.load %arg17[%c0_71, %c0_72, %c0_73] : memref<2x1x128xf32, #tpu.memory_space<vmem>>, vector<1x1x128xf32>
    %164 = vector.shape_cast %163 : vector<1x1x128xf32> to vector<1x128xf32>
    %165 = vector.broadcast %164 : vector<1x128xf32> to vector<8x128xf32>
    %166 = arith.addf %162, %165 : vector<8x128xf32>
    %cst_74 = arith.constant 5.000000e-01 : f32
    %167 = vector.broadcast %cst_74 : f32 to vector<8x128xf32>
    %168 = arith.mulf %167, %166 : vector<8x128xf32>
    %cst_75 = arith.constant 4.471500e-02 : f32
    %169 = vector.broadcast %cst_75 : f32 to vector<8x128xf32>
    %170 = arith.mulf %169, %166 : vector<8x128xf32>
    %171 = arith.mulf %170, %166 : vector<8x128xf32>
    %172 = arith.mulf %171, %166 : vector<8x128xf32>
    %173 = arith.addf %166, %172 : vector<8x128xf32>
    %cst_76 = arith.constant 0.797884583 : f32
    %174 = vector.broadcast %cst_76 : f32 to vector<8x128xf32>
    %175 = arith.mulf %174, %173 : vector<8x128xf32>
    %176 = math.tanh %175 : vector<8x128xf32>
    %cst_77 = arith.constant 1.000000e+00 : f32
    %177 = vector.broadcast %cst_77 : f32 to vector<8x128xf32>
    %178 = arith.addf %177, %176 : vector<8x128xf32>
    %179 = arith.mulf %168, %178 : vector<8x128xf32>
    %c0_78 = arith.constant 0 : index
    %c0_79 = arith.constant 0 : index
    %c0_80 = arith.constant 0 : index
    %180 = vector.load %arg18[%c0_78, %c0_79, %c0_80] : memref<2x128x32xf32, #tpu.memory_space<vmem>>, vector<1x128x32xf32>
    %181 = vector.shape_cast %180 : vector<1x128x32xf32> to vector<128x32xf32>
    %cst_81 = arith.constant dense<0.000000e+00> : vector<8x32xf32>
    %182 = tpu.matmul %179, %181, %cst_81 {dimension_numbers = #tpu.dot_dimension_numbers<[1], [0], [0], [1], [0, 0, 1, 1], [], []>} : vector<8x128xf32>, vector<128x32xf32>, vector<8x32xf32> -> vector<8x32xf32>
    %c0_82 = arith.constant 0 : index
    %c0_83 = arith.constant 0 : index
    %c0_84 = arith.constant 0 : index
    %183 = vector.load %arg19[%c0_82, %c0_83, %c0_84] : memref<2x1x32xf32, #tpu.memory_space<vmem>>, vector<1x1x32xf32>
    %184 = vector.shape_cast %183 : vector<1x1x32xf32> to vector<1x32xf32>
    %185 = vector.broadcast %184 : vector<1x32xf32> to vector<8x32xf32>
    %186 = arith.addf %182, %185 : vector<8x32xf32>
    %187 = arith.addf %159, %186 : vector<8x32xf32>
    %c0_85 = arith.constant 0 : index
    %c0_86 = arith.constant 0 : index
    %c0_87 = arith.constant 0 : index
    %188 = vector.load %arg20[%c0_85, %c0_86, %c0_87] : memref<2x1x32xf32, #tpu.memory_space<vmem>>, vector<1x1x32xf32>
    %189 = vector.shape_cast %188 : vector<1x1x32xf32> to vector<1x32xf32>
    %c0_88 = arith.constant 0 : index
    %c0_89 = arith.constant 0 : index
    %c0_90 = arith.constant 0 : index
    %190 = vector.load %arg21[%c0_88, %c0_89, %c0_90] : memref<2x1x32xf32, #tpu.memory_space<vmem>>, vector<1x1x32xf32>
    %191 = vector.shape_cast %190 : vector<1x1x32xf32> to vector<1x32xf32>
    %cst_91 = arith.constant dense<0.000000e+00> : vector<8xf32>
    %192 = vector.multi_reduction <add>, %187, %cst_91 [1] : vector<8x32xf32> to vector<8xf32>
    %193 = vector.shape_cast %192 : vector<8xf32> to vector<8x1xf32>
    %cst_92 = arith.constant 3.200000e+01 : f32
    %194 = vector.broadcast %cst_92 : f32 to vector<8x1xf32>
    %195 = arith.divf %193, %194 : vector<8x1xf32>
    %196 = vector.broadcast %195 : vector<8x1xf32> to vector<8x32xf32>
    %197 = arith.subf %187, %196 : vector<8x32xf32>
    %198 = arith.mulf %197, %197 : vector<8x32xf32>
    %cst_93 = arith.constant dense<0.000000e+00> : vector<8xf32>
    %199 = vector.multi_reduction <add>, %198, %cst_93 [1] : vector<8x32xf32> to vector<8xf32>
    %200 = vector.shape_cast %199 : vector<8xf32> to vector<8x1xf32>
    %cst_94 = arith.constant 3.200000e+01 : f32
    %201 = vector.broadcast %cst_94 : f32 to vector<8x1xf32>
    %202 = arith.divf %200, %201 : vector<8x1xf32>
    %203 = vector.broadcast %195 : vector<8x1xf32> to vector<8x32xf32>
    %204 = arith.subf %187, %203 : vector<8x32xf32>
    %cst_95 = arith.constant 9.99999996E-13 : f32
    %205 = vector.broadcast %cst_95 : f32 to vector<8x1xf32>
    %206 = arith.addf %202, %205 : vector<8x1xf32>
    %207 = math.rsqrt %206 : vector<8x1xf32>
    %208 = vector.broadcast %207 : vector<8x1xf32> to vector<8x32xf32>
    %209 = arith.mulf %204, %208 : vector<8x32xf32>
    %210 = vector.broadcast %189 : vector<1x32xf32> to vector<8x32xf32>
    %211 = arith.mulf %209, %210 : vector<8x32xf32>
    %212 = vector.broadcast %191 : vector<1x32xf32> to vector<8x32xf32>
    %213 = arith.addf %211, %212 : vector<8x32xf32>
    %214 = vector.shape_cast %213 : vector<8x32xf32> to vector<1x8x32xf32>
    %215 = vector.broadcast %214 : vector<1x8x32xf32> to vector<4x8x32xf32>
    %c1_96 = arith.constant 1 : index
    %c0_97 = arith.constant 0 : index
    %c0_98 = arith.constant 0 : index
    %c0_99 = arith.constant 0 : index
    %216 = vector.load %arg6[%c1_96, %c0_97, %c0_98, %c0_99] : memref<2x4x32x8xf32, #tpu.memory_space<vmem>>, vector<1x4x32x8xf32>
    %217 = vector.shape_cast %216 : vector<1x4x32x8xf32> to vector<4x32x8xf32>
    "tpu.trace_start"() <{level = 10 : i32, message = "hsd,hdk->hsk"}> : () -> ()
    %cst_100 = arith.constant dense<0.000000e+00> : vector<4x8x8xf32>
    %218 = tpu.matmul %215, %217, %cst_100 {dimension_numbers = #tpu.dot_dimension_numbers<[2], [1], [1], [2], [0, 0, 0, 1, 1, 2], [0], [0]>} : vector<4x8x32xf32>, vector<4x32x8xf32>, vector<4x8x8xf32> -> vector<4x8x8xf32>
    "tpu.trace_stop"() : () -> ()
    %c1_101 = arith.constant 1 : index
    %c0_102 = arith.constant 0 : index
    %c0_103 = arith.constant 0 : index
    %c0_104 = arith.constant 0 : index
    %219 = vector.load %arg7[%c1_101, %c0_102, %c0_103, %c0_104] : memref<2x4x1x8xf32, #tpu.memory_space<vmem>>, vector<1x4x1x8xf32>
    %220 = vector.shape_cast %219 : vector<1x4x1x8xf32> to vector<4x1x8xf32>
    %221 = vector.broadcast %220 : vector<4x1x8xf32> to vector<4x8x8xf32>
    %222 = arith.addf %218, %221 : vector<4x8x8xf32>
    %c1_105 = arith.constant 1 : index
    %c0_106 = arith.constant 0 : index
    %c0_107 = arith.constant 0 : index
    %c0_108 = arith.constant 0 : index
    %223 = vector.load %arg8[%c1_105, %c0_106, %c0_107, %c0_108] : memref<2x4x32x8xf32, #tpu.memory_space<vmem>>, vector<1x4x32x8xf32>
    %224 = vector.shape_cast %223 : vector<1x4x32x8xf32> to vector<4x32x8xf32>
    "tpu.trace_start"() <{level = 10 : i32, message = "hsd,hdk->hsk"}> : () -> ()
    %cst_109 = arith.constant dense<0.000000e+00> : vector<4x8x8xf32>
    %225 = tpu.matmul %215, %224, %cst_109 {dimension_numbers = #tpu.dot_dimension_numbers<[2], [1], [1], [2], [0, 0, 0, 1, 1, 2], [0], [0]>} : vector<4x8x32xf32>, vector<4x32x8xf32>, vector<4x8x8xf32> -> vector<4x8x8xf32>
    "tpu.trace_stop"() : () -> ()
    %c1_110 = arith.constant 1 : index
    %c0_111 = arith.constant 0 : index
    %c0_112 = arith.constant 0 : index
    %c0_113 = arith.constant 0 : index
    %226 = vector.load %arg9[%c1_110, %c0_111, %c0_112, %c0_113] : memref<2x4x1x8xf32, #tpu.memory_space<vmem>>, vector<1x4x1x8xf32>
    %227 = vector.shape_cast %226 : vector<1x4x1x8xf32> to vector<4x1x8xf32>
    %228 = vector.broadcast %227 : vector<4x1x8xf32> to vector<4x8x8xf32>
    %229 = arith.addf %225, %228 : vector<4x8x8xf32>
    %c1_114 = arith.constant 1 : index
    %c0_115 = arith.constant 0 : index
    %c0_116 = arith.constant 0 : index
    %c0_117 = arith.constant 0 : index
    %230 = vector.load %arg10[%c1_114, %c0_115, %c0_116, %c0_117] : memref<2x4x32x8xf32, #tpu.memory_space<vmem>>, vector<1x4x32x8xf32>
    %231 = vector.shape_cast %230 : vector<1x4x32x8xf32> to vector<4x32x8xf32>
    "tpu.trace_start"() <{level = 10 : i32, message = "hsd,hdk->hsk"}> : () -> ()
    %cst_118 = arith.constant dense<0.000000e+00> : vector<4x8x8xf32>
    %232 = tpu.matmul %215, %231, %cst_118 {dimension_numbers = #tpu.dot_dimension_numbers<[2], [1], [1], [2], [0, 0, 0, 1, 1, 2], [0], [0]>} : vector<4x8x32xf32>, vector<4x32x8xf32>, vector<4x8x8xf32> -> vector<4x8x8xf32>
    "tpu.trace_stop"() : () -> ()
    %c1_119 = arith.constant 1 : index
    %c0_120 = arith.constant 0 : index
    %c0_121 = arith.constant 0 : index
    %c0_122 = arith.constant 0 : index
    %233 = vector.load %arg11[%c1_119, %c0_120, %c0_121, %c0_122] : memref<2x4x1x8xf32, #tpu.memory_space<vmem>>, vector<1x4x1x8xf32>
    %234 = vector.shape_cast %233 : vector<1x4x1x8xf32> to vector<4x1x8xf32>
    %235 = vector.broadcast %234 : vector<4x1x8xf32> to vector<4x8x8xf32>
    %236 = arith.addf %232, %235 : vector<4x8x8xf32>
    "tpu.trace_start"() <{level = 10 : i32, message = "hqd,hkd->hqk"}> : () -> ()
    %cst_123 = arith.constant dense<0.000000e+00> : vector<4x8x8xf32>
    %237 = tpu.matmul %222, %229, %cst_123 {dimension_numbers = #tpu.dot_dimension_numbers<[2], [2], [1], [1], [0, 0, 0, 1, 1, 1], [0], [0]>} : vector<4x8x8xf32>, vector<4x8x8xf32>, vector<4x8x8xf32> -> vector<4x8x8xf32>
    "tpu.trace_stop"() : () -> ()
    %cst_124 = arith.constant 0.353553385 : f32
    %238 = vector.broadcast %cst_124 : f32 to vector<4x8x8xf32>
    %239 = arith.mulf %237, %238 : vector<4x8x8xf32>
    %cst_125 = arith.constant dense<0xFF800000> : vector<4x8xf32>
    %240 = vector.multi_reduction <maximumf>, %239, %cst_125 [2] : vector<4x8x8xf32> to vector<4x8xf32>
    %241 = vector.shape_cast %240 : vector<4x8xf32> to vector<4x8x1xf32>
    %242 = vector.broadcast %241 : vector<4x8x1xf32> to vector<4x8x8xf32>
    %243 = arith.subf %239, %242 : vector<4x8x8xf32>
    %244 = math.exp %243 : vector<4x8x8xf32>
    %cst_126 = arith.constant dense<0.000000e+00> : vector<4x8xf32>
    %245 = vector.multi_reduction <add>, %244, %cst_126 [2] : vector<4x8x8xf32> to vector<4x8xf32>
    %246 = vector.shape_cast %245 : vector<4x8xf32> to vector<4x8x1xf32>
    %247 = tpu.reciprocal %246 {approx = true} : vector<4x8x1xf32> -> vector<4x8x1xf32>
    %248 = vector.broadcast %247 : vector<4x8x1xf32> to vector<4x8x8xf32>
    %249 = arith.mulf %244, %248 : vector<4x8x8xf32>
    "tpu.trace_start"() <{level = 10 : i32, message = "hqk,hkd->hqd"}> : () -> ()
    %cst_127 = arith.constant dense<0.000000e+00> : vector<4x8x8xf32>
    %250 = tpu.matmul %249, %236, %cst_127 {dimension_numbers = #tpu.dot_dimension_numbers<[2], [1], [1], [2], [0, 0, 0, 1, 1, 2], [0], [0]>} : vector<4x8x8xf32>, vector<4x8x8xf32>, vector<4x8x8xf32> -> vector<4x8x8xf32>
    "tpu.trace_stop"() : () -> ()
    %c1_128 = arith.constant 1 : index
    %c0_129 = arith.constant 0 : index
    %c0_130 = arith.constant 0 : index
    %c0_131 = arith.constant 0 : index
    %251 = vector.load %arg12[%c1_128, %c0_129, %c0_130, %c0_131] : memref<2x4x8x32xf32, #tpu.memory_space<vmem>>, vector<1x4x8x32xf32>
    %252 = vector.shape_cast %251 : vector<1x4x8x32xf32> to vector<4x8x32xf32>
    "tpu.trace_start"() <{level = 10 : i32, message = "hqd,hdm->hqm"}> : () -> ()
    %cst_132 = arith.constant dense<0.000000e+00> : vector<4x8x32xf32>
    %253 = tpu.matmul %250, %252, %cst_132 {dimension_numbers = #tpu.dot_dimension_numbers<[2], [1], [1], [2], [0, 0, 0, 1, 1, 2], [0], [0]>} : vector<4x8x8xf32>, vector<4x8x32xf32>, vector<4x8x32xf32> -> vector<4x8x32xf32>
    "tpu.trace_stop"() : () -> ()
    %254 = vector.extract_strided_slice %253 {offsets = [0, 0, 0], sizes = [1, 8, 32], strides = [1, 1, 1]} : vector<4x8x32xf32> to vector<1x8x32xf32>
    %255 = vector.shape_cast %254 : vector<1x8x32xf32> to vector<8x32xf32>
    %256 = vector.extract_strided_slice %253 {offsets = [1, 0, 0], sizes = [1, 8, 32], strides = [1, 1, 1]} : vector<4x8x32xf32> to vector<1x8x32xf32>
    %257 = vector.shape_cast %256 : vector<1x8x32xf32> to vector<8x32xf32>
    %258 = arith.addf %255, %257 : vector<8x32xf32>
    %259 = vector.extract_strided_slice %253 {offsets = [2, 0, 0], sizes = [1, 8, 32], strides = [1, 1, 1]} : vector<4x8x32xf32> to vector<1x8x32xf32>
    %260 = vector.shape_cast %259 : vector<1x8x32xf32> to vector<8x32xf32>
    %261 = arith.addf %258, %260 : vector<8x32xf32>
    %262 = vector.extract_strided_slice %253 {offsets = [3, 0, 0], sizes = [1, 8, 32], strides = [1, 1, 1]} : vector<4x8x32xf32> to vector<1x8x32xf32>
    %263 = vector.shape_cast %262 : vector<1x8x32xf32> to vector<8x32xf32>
    %264 = arith.addf %261, %263 : vector<8x32xf32>
    %c1_133 = arith.constant 1 : index
    %c0_134 = arith.constant 0 : index
    %c0_135 = arith.constant 0 : index
    %265 = vector.load %arg13[%c1_133, %c0_134, %c0_135] : memref<2x1x32xf32, #tpu.memory_space<vmem>>, vector<1x1x32xf32>
    %266 = vector.shape_cast %265 : vector<1x1x32xf32> to vector<1x32xf32>
    %267 = vector.broadcast %266 : vector<1x32xf32> to vector<8x32xf32>
    %268 = arith.addf %264, %267 : vector<8x32xf32>
    %269 = arith.addf %213, %268 : vector<8x32xf32>
    %c1_136 = arith.constant 1 : index
    %c0_137 = arith.constant 0 : index
    %c0_138 = arith.constant 0 : index
    %270 = vector.load %arg14[%c1_136, %c0_137, %c0_138] : memref<2x1x32xf32, #tpu.memory_space<vmem>>, vector<1x1x32xf32>
    %271 = vector.shape_cast %270 : vector<1x1x32xf32> to vector<1x32xf32>
    %c1_139 = arith.constant 1 : index
    %c0_140 = arith.constant 0 : index
    %c0_141 = arith.constant 0 : index
    %272 = vector.load %arg15[%c1_139, %c0_140, %c0_141] : memref<2x1x32xf32, #tpu.memory_space<vmem>>, vector<1x1x32xf32>
    %273 = vector.shape_cast %272 : vector<1x1x32xf32> to vector<1x32xf32>
    %cst_142 = arith.constant dense<0.000000e+00> : vector<8xf32>
    %274 = vector.multi_reduction <add>, %269, %cst_142 [1] : vector<8x32xf32> to vector<8xf32>
    %275 = vector.shape_cast %274 : vector<8xf32> to vector<8x1xf32>
    %cst_143 = arith.constant 3.200000e+01 : f32
    %276 = vector.broadcast %cst_143 : f32 to vector<8x1xf32>
    %277 = arith.divf %275, %276 : vector<8x1xf32>
    %278 = vector.broadcast %277 : vector<8x1xf32> to vector<8x32xf32>
    %279 = arith.subf %269, %278 : vector<8x32xf32>
    %280 = arith.mulf %279, %279 : vector<8x32xf32>
    %cst_144 = arith.constant dense<0.000000e+00> : vector<8xf32>
    %281 = vector.multi_reduction <add>, %280, %cst_144 [1] : vector<8x32xf32> to vector<8xf32>
    %282 = vector.shape_cast %281 : vector<8xf32> to vector<8x1xf32>
    %cst_145 = arith.constant 3.200000e+01 : f32
    %283 = vector.broadcast %cst_145 : f32 to vector<8x1xf32>
    %284 = arith.divf %282, %283 : vector<8x1xf32>
    %285 = vector.broadcast %277 : vector<8x1xf32> to vector<8x32xf32>
    %286 = arith.subf %269, %285 : vector<8x32xf32>
    %cst_146 = arith.constant 9.99999996E-13 : f32
    %287 = vector.broadcast %cst_146 : f32 to vector<8x1xf32>
    %288 = arith.addf %284, %287 : vector<8x1xf32>
    %289 = math.rsqrt %288 : vector<8x1xf32>
    %290 = vector.broadcast %289 : vector<8x1xf32> to vector<8x32xf32>
    %291 = arith.mulf %286, %290 : vector<8x32xf32>
    %292 = vector.broadcast %271 : vector<1x32xf32> to vector<8x32xf32>
    %293 = arith.mulf %291, %292 : vector<8x32xf32>
    %294 = vector.broadcast %273 : vector<1x32xf32> to vector<8x32xf32>
    %295 = arith.addf %293, %294 : vector<8x32xf32>
    %c1_147 = arith.constant 1 : index
    %c0_148 = arith.constant 0 : index
    %c0_149 = arith.constant 0 : index
    %296 = vector.load %arg16[%c1_147, %c0_148, %c0_149] : memref<2x32x128xf32, #tpu.memory_space<vmem>>, vector<1x32x128xf32>
    %297 = vector.shape_cast %296 : vector<1x32x128xf32> to vector<32x128xf32>
    %cst_150 = arith.constant dense<0.000000e+00> : vector<8x128xf32>
    %298 = tpu.matmul %295, %297, %cst_150 {dimension_numbers = #tpu.dot_dimension_numbers<[1], [0], [0], [1], [0, 0, 1, 1], [], []>} : vector<8x32xf32>, vector<32x128xf32>, vector<8x128xf32> -> vector<8x128xf32>
    %c1_151 = arith.constant 1 : index
    %c0_152 = arith.constant 0 : index
    %c0_153 = arith.constant 0 : index
    %299 = vector.load %arg17[%c1_151, %c0_152, %c0_153] : memref<2x1x128xf32, #tpu.memory_space<vmem>>, vector<1x1x128xf32>
    %300 = vector.shape_cast %299 : vector<1x1x128xf32> to vector<1x128xf32>
    %301 = vector.broadcast %300 : vector<1x128xf32> to vector<8x128xf32>
    %302 = arith.addf %298, %301 : vector<8x128xf32>
    %cst_154 = arith.constant 5.000000e-01 : f32
    %303 = vector.broadcast %cst_154 : f32 to vector<8x128xf32>
    %304 = arith.mulf %303, %302 : vector<8x128xf32>
    %cst_155 = arith.constant 4.471500e-02 : f32
    %305 = vector.broadcast %cst_155 : f32 to vector<8x128xf32>
    %306 = arith.mulf %305, %302 : vector<8x128xf32>
    %307 = arith.mulf %306, %302 : vector<8x128xf32>
    %308 = arith.mulf %307, %302 : vector<8x128xf32>
    %309 = arith.addf %302, %308 : vector<8x128xf32>
    %cst_156 = arith.constant 0.797884583 : f32
    %310 = vector.broadcast %cst_156 : f32 to vector<8x128xf32>
    %311 = arith.mulf %310, %309 : vector<8x128xf32>
    %312 = math.tanh %311 : vector<8x128xf32>
    %cst_157 = arith.constant 1.000000e+00 : f32
    %313 = vector.broadcast %cst_157 : f32 to vector<8x128xf32>
    %314 = arith.addf %313, %312 : vector<8x128xf32>
    %315 = arith.mulf %304, %314 : vector<8x128xf32>
    %c1_158 = arith.constant 1 : index
    %c0_159 = arith.constant 0 : index
    %c0_160 = arith.constant 0 : index
    %316 = vector.load %arg18[%c1_158, %c0_159, %c0_160] : memref<2x128x32xf32, #tpu.memory_space<vmem>>, vector<1x128x32xf32>
    %317 = vector.shape_cast %316 : vector<1x128x32xf32> to vector<128x32xf32>
    %cst_161 = arith.constant dense<0.000000e+00> : vector<8x32xf32>
    %318 = tpu.matmul %315, %317, %cst_161 {dimension_numbers = #tpu.dot_dimension_numbers<[1], [0], [0], [1], [0, 0, 1, 1], [], []>} : vector<8x128xf32>, vector<128x32xf32>, vector<8x32xf32> -> vector<8x32xf32>
    %c1_162 = arith.constant 1 : index
    %c0_163 = arith.constant 0 : index
    %c0_164 = arith.constant 0 : index
    %319 = vector.load %arg19[%c1_162, %c0_163, %c0_164] : memref<2x1x32xf32, #tpu.memory_space<vmem>>, vector<1x1x32xf32>
    %320 = vector.shape_cast %319 : vector<1x1x32xf32> to vector<1x32xf32>
    %321 = vector.broadcast %320 : vector<1x32xf32> to vector<8x32xf32>
    %322 = arith.addf %318, %321 : vector<8x32xf32>
    %323 = arith.addf %295, %322 : vector<8x32xf32>
    %c1_165 = arith.constant 1 : index
    %c0_166 = arith.constant 0 : index
    %c0_167 = arith.constant 0 : index
    %324 = vector.load %arg20[%c1_165, %c0_166, %c0_167] : memref<2x1x32xf32, #tpu.memory_space<vmem>>, vector<1x1x32xf32>
    %325 = vector.shape_cast %324 : vector<1x1x32xf32> to vector<1x32xf32>
    %c1_168 = arith.constant 1 : index
    %c0_169 = arith.constant 0 : index
    %c0_170 = arith.constant 0 : index
    %326 = vector.load %arg21[%c1_168, %c0_169, %c0_170] : memref<2x1x32xf32, #tpu.memory_space<vmem>>, vector<1x1x32xf32>
    %327 = vector.shape_cast %326 : vector<1x1x32xf32> to vector<1x32xf32>
    %cst_171 = arith.constant dense<0.000000e+00> : vector<8xf32>
    %328 = vector.multi_reduction <add>, %323, %cst_171 [1] : vector<8x32xf32> to vector<8xf32>
    %329 = vector.shape_cast %328 : vector<8xf32> to vector<8x1xf32>
    %cst_172 = arith.constant 3.200000e+01 : f32
    %330 = vector.broadcast %cst_172 : f32 to vector<8x1xf32>
    %331 = arith.divf %329, %330 : vector<8x1xf32>
    %332 = vector.broadcast %331 : vector<8x1xf32> to vector<8x32xf32>
    %333 = arith.subf %323, %332 : vector<8x32xf32>
    %334 = arith.mulf %333, %333 : vector<8x32xf32>
    %cst_173 = arith.constant dense<0.000000e+00> : vector<8xf32>
    %335 = vector.multi_reduction <add>, %334, %cst_173 [1] : vector<8x32xf32> to vector<8xf32>
    %336 = vector.shape_cast %335 : vector<8xf32> to vector<8x1xf32>
    %cst_174 = arith.constant 3.200000e+01 : f32
    %337 = vector.broadcast %cst_174 : f32 to vector<8x1xf32>
    %338 = arith.divf %336, %337 : vector<8x1xf32>
    %339 = vector.broadcast %331 : vector<8x1xf32> to vector<8x32xf32>
    %340 = arith.subf %323, %339 : vector<8x32xf32>
    %cst_175 = arith.constant 9.99999996E-13 : f32
    %341 = vector.broadcast %cst_175 : f32 to vector<8x1xf32>
    %342 = arith.addf %338, %341 : vector<8x1xf32>
    %343 = math.rsqrt %342 : vector<8x1xf32>
    %344 = vector.broadcast %343 : vector<8x1xf32> to vector<8x32xf32>
    %345 = arith.mulf %340, %344 : vector<8x32xf32>
    %346 = vector.broadcast %325 : vector<1x32xf32> to vector<8x32xf32>
    %347 = arith.mulf %345, %346 : vector<8x32xf32>
    %348 = vector.broadcast %327 : vector<1x32xf32> to vector<8x32xf32>
    %349 = arith.addf %347, %348 : vector<8x32xf32>
    %c0_176 = arith.constant 0 : index
    %c0_177 = arith.constant 0 : index
    %350 = vector.load %arg22[%c0_176, %c0_177] : memref<32x5xf32, #tpu.memory_space<vmem>>, vector<32x5xf32>
    %cst_178 = arith.constant dense<0.000000e+00> : vector<8x5xf32>
    %351 = tpu.matmul %349, %350, %cst_178 {dimension_numbers = #tpu.dot_dimension_numbers<[1], [0], [0], [1], [0, 0, 1, 1], [], []>} : vector<8x32xf32>, vector<32x5xf32>, vector<8x5xf32> -> vector<8x5xf32>
    %c0_179 = arith.constant 0 : index
    %c0_180 = arith.constant 0 : index
    %352 = vector.load %arg23[%c0_179, %c0_180] : memref<1x5xf32, #tpu.memory_space<vmem>>, vector<1x5xf32>
    %353 = vector.broadcast %352 : vector<1x5xf32> to vector<8x5xf32>
    %354 = arith.addf %351, %353 : vector<8x5xf32>
    %c0_181 = arith.constant 0 : index
    %c0_182 = arith.constant 0 : index
    %355 = vector.load %arg25[%c0_181, %c0_182] : memref<8x5xf32, #tpu.memory_space<vmem>>, vector<8x5xf32>
    tpu.vector_store %arg25[%c0_181, %c0_182], %354 {strides = array<i32>} : memref<8x5xf32, #tpu.memory_space<vmem>>, vector<8x5xf32>,
    %c0_183 = arith.constant 0 : index
    %c0_184 = arith.constant 0 : index
    %356 = vector.load %arg24[%c0_183, %c0_184] : memref<5x5xf32, #tpu.memory_space<vmem>>, vector<5x5xf32>
    %357 = tpu.iota {dimensions = array<i32: 1>} : vector<1x5xi32>
    %358 = tpu.iota {dimensions = array<i32: 1>} : vector<5x5xi32>
    %359 = tpu.iota {dimensions = array<i32: 0>} : vector<8x1xi32>
    %360 = tpu.iota {dimensions = array<i32: 1>} : vector<1x8xi32>
    %c3_i32_185 = arith.constant 3 : i32
    %361 = vector.broadcast %c3_i32_185 : i32 to vector<1x5xi32>
    %362 = arith.cmpi eq, %357, %361 : vector<1x5xi32>
    %cst_186 = arith.constant 0.000000e+00 : f32
    %cst_187 = arith.constant -1.000000e+04 : f32
    %363 = vector.broadcast %cst_186 : f32 to vector<1x5xf32>
    %364 = vector.broadcast %cst_187 : f32 to vector<1x5xf32>
    %365 = arith.select %362, %363, %364 : vector<1x5xi1>, vector<1x5xf32>
    %c0_i32_188 = arith.constant 0 : i32
    %366 = vector.broadcast %c0_i32_188 : i32 to vector<8x5xi32>
    %c0_i32_189 = arith.constant 0 : i32
    %c8_i32 = arith.constant 8 : i32
    %367 = arith.addi %c0_i32_189, %c8_i32 : i32
    %c1_i32_190 = arith.constant 1 : i32
    %368:2 = scf.for %arg29 = %c0_i32_189 to %367 step %c1_i32_190 iter_args(%arg30 = %365, %arg31 = %366) -> (vector<1x5xf32>, vector<8x5xi32>)  : i32 {
      %404 = vector.broadcast %arg30 : vector<1x5xf32> to vector<5x5xf32>
      %405 = arith.addf %404, %356 : vector<5x5xf32>
      %cst_212 = arith.constant dense<0xFF800000> : vector<5xf32>
      %406 = vector.multi_reduction <maximumf>, %405, %cst_212 [1] : vector<5x5xf32> to vector<5xf32>
      %407 = vector.shape_cast %406 : vector<5xf32> to vector<5x1xf32>
      %408 = vector.broadcast %407 : vector<5x1xf32> to vector<5x5xf32>
      %409 = arith.cmpf oeq, %405, %408 : vector<5x5xf32>
      %c5_i32_213 = arith.constant 5 : i32
      %410 = vector.broadcast %c5_i32_213 : i32 to vector<5x5xi32>
      %411 = arith.select %409, %358, %410 : vector<5x5xi1>, vector<5x5xi32>
      %cst_214 = arith.constant dense<2147483647> : vector<5xi32>
      %412 = vector.multi_reduction <minsi>, %411, %cst_214 [1] : vector<5x5xi32> to vector<5xi32>
      %413 = vector.broadcast %arg29 : i32 to vector<8x1xi32>
      %414 = arith.cmpi eq, %359, %413 : vector<8x1xi32>
      %415 = vector.shape_cast %412 : vector<5xi32> to vector<1x5xi32>
      %416 = vector.shape_cast %414 : vector<8x1xi1> to vector<8x1xi1>
      %417 = vector.broadcast %416 : vector<8x1xi1> to vector<8x5xi1>
      %418 = vector.shape_cast %415 : vector<1x5xi32> to vector<1x5xi32>
      %419 = vector.broadcast %418 : vector<1x5xi32> to vector<8x5xi32>
      %420 = arith.select %417, %419, %arg31 : vector<8x5xi1>, vector<8x5xi32>
      %421 = vector.broadcast %arg29 : i32 to vector<8x1xi32>
      %422 = arith.cmpi eq, %359, %421 : vector<8x1xi32>
      %cst_215 = arith.constant 0.000000e+00 : f32
      %423 = vector.shape_cast %422 : vector<8x1xi1> to vector<8x1xi1>
      %424 = vector.broadcast %423 : vector<8x1xi1> to vector<8x5xi1>
      %425 = vector.broadcast %cst_215 : f32 to vector<8x5xf32>
      %426 = arith.select %424, %354, %425 : vector<8x5xi1>, vector<8x5xf32>
      %cst_216 = arith.constant dense<0.000000e+00> : vector<5xf32>
      %427 = vector.multi_reduction <add>, %426, %cst_216 [0] : vector<8x5xf32> to vector<5xf32>
      %428 = vector.shape_cast %427 : vector<5xf32> to vector<1x5xf32>
      %429 = tpu.transpose %407, [1, 0] : vector<5x1xf32> -> vector<1x5xf32>
      %430 = arith.addf %429, %428 : vector<1x5xf32>
      scf.yield %430, %420 : vector<1x5xf32>, vector<8x5xi32>
    }
    %c8_i32_191 = arith.constant 8 : i32
    %369 = vector.extract_strided_slice %356 {offsets = [4, 0], sizes = [1, 5], strides = [1, 1]} : vector<5x5xf32> to vector<1x5xf32>
    %370 = arith.addf %368#0, %369 : vector<1x5xf32>
    %cst_192 = arith.constant dense<0xFF800000> : vector<1xf32>
    %371 = vector.multi_reduction <maximumf>, %370, %cst_192 [1] : vector<1x5xf32> to vector<1xf32>
    %372 = vector.shape_cast %371 : vector<1xf32> to vector<1x1xf32>
    %373 = vector.broadcast %372 : vector<1x1xf32> to vector<1x5xf32>
    %374 = arith.cmpf oeq, %370, %373 : vector<1x5xf32>
    %c5_i32_193 = arith.constant 5 : i32
    %375 = vector.broadcast %c5_i32_193 : i32 to vector<1x5xi32>
    %376 = arith.select %374, %357, %375 : vector<1x5xi1>, vector<1x5xi32>
    %cst_194 = arith.constant dense<2147483647> : vector<1xi32>
    %377 = vector.multi_reduction <minsi>, %376, %cst_194 [1] : vector<1x5xi32> to vector<1xi32>
    %378 = vector.shape_cast %377 : vector<1xi32> to vector<1x1xi32>
    %c0_195 = arith.constant 0 : index
    %c0_196 = arith.constant 0 : index
    %379 = vector.load %arg27[%c0_195, %c0_196] : memref<1x1xf32, #tpu.memory_space<vmem>>, vector<1x1xf32>
    tpu.vector_store %arg27[%c0_195, %c0_196], %372 {strides = array<i32>} : memref<1x1xf32, #tpu.memory_space<vmem>>, vector<1x1xf32>,
    %c7_i32_197 = arith.constant 7 : i32
    %380 = vector.broadcast %c7_i32_197 : i32 to vector<1x8xi32>
    %381 = arith.cmpi eq, %360, %380 : vector<1x8xi32>
    %c0_i32_198 = arith.constant 0 : i32
    %382 = vector.shape_cast %378 : vector<1x1xi32> to vector<1x1xi32>
    %383 = vector.broadcast %382 : vector<1x1xi32> to vector<1x8xi32>
    %384 = vector.broadcast %c0_i32_198 : i32 to vector<1x8xi32>
    %385 = arith.select %381, %383, %384 : vector<1x8xi1>, vector<1x8xi32>
    %c0_i32_199 = arith.constant 0 : i32
    %c7_i32_200 = arith.constant 7 : i32
    %386 = arith.addi %c0_i32_199, %c7_i32_200 : i32
    %c1_i32_201 = arith.constant 1 : i32
    %387:2 = scf.for %arg29 = %c0_i32_199 to %386 step %c1_i32_201 iter_args(%arg30 = %378, %arg31 = %385) -> (vector<1x1xi32>, vector<1x8xi32>)  : i32 {
      %c7_i32_212 = arith.constant 7 : i32
      %404 = arith.subi %c7_i32_212, %arg29 : i32
      %405 = vector.broadcast %404 : i32 to vector<8x1xi32>
      %406 = arith.cmpi eq, %359, %405 : vector<8x1xi32>
      %c0_i32_213 = arith.constant 0 : i32
      %407 = vector.shape_cast %406 : vector<8x1xi1> to vector<8x1xi1>
      %408 = vector.broadcast %407 : vector<8x1xi1> to vector<8x5xi1>
      %409 = vector.broadcast %c0_i32_213 : i32 to vector<8x5xi32>
      %410 = arith.select %408, %368#1, %409 : vector<8x5xi1>, vector<8x5xi32>
      %cst_214 = arith.constant dense<0> : vector<5xi32>
      %411 = vector.multi_reduction <add>, %410, %cst_214 [0] : vector<8x5xi32> to vector<5xi32>
      %412 = vector.shape_cast %411 : vector<5xi32> to vector<1x5xi32>
      %413 = vector.broadcast %arg30 : vector<1x1xi32> to vector<1x5xi32>
      %414 = arith.cmpi eq, %357, %413 : vector<1x5xi32>
      %c0_i32_215 = arith.constant 0 : i32
      %415 = vector.broadcast %c0_i32_215 : i32 to vector<1x5xi32>
      %416 = arith.select %414, %412, %415 : vector<1x5xi1>, vector<1x5xi32>
      %cst_216 = arith.constant dense<0> : vector<1xi32>
      %417 = vector.multi_reduction <add>, %416, %cst_216 [1] : vector<1x5xi32> to vector<1xi32>
      %418 = vector.shape_cast %417 : vector<1xi32> to vector<1x1xi32>
      %c1_i32_217 = arith.constant 1 : i32
      %419 = arith.subi %404, %c1_i32_217 : i32
      %420 = vector.broadcast %419 : i32 to vector<1x8xi32>
      %421 = arith.cmpi eq, %360, %420 : vector<1x8xi32>
      %422 = vector.shape_cast %418 : vector<1x1xi32> to vector<1x1xi32>
      %423 = vector.broadcast %422 : vector<1x1xi32> to vector<1x8xi32>
      %424 = arith.select %421, %423, %arg31 : vector<1x8xi1>, vector<1x8xi32>
      scf.yield %418, %424 : vector<1x1xi32>, vector<1x8xi32>
    }
    %c7_i32_202 = arith.constant 7 : i32
    %c0_i32_203 = arith.constant 0 : i32
    %388 = vector.broadcast %c0_i32_203 : i32 to vector<8x1xi32>
    %389 = arith.cmpi eq, %359, %388 : vector<8x1xi32>
    %c0_i32_204 = arith.constant 0 : i32
    %390 = vector.shape_cast %389 : vector<8x1xi1> to vector<8x1xi1>
    %391 = vector.broadcast %390 : vector<8x1xi1> to vector<8x5xi1>
    %392 = vector.broadcast %c0_i32_204 : i32 to vector<8x5xi32>
    %393 = arith.select %391, %368#1, %392 : vector<8x5xi1>, vector<8x5xi32>
    %cst_205 = arith.constant dense<0> : vector<5xi32>
    %394 = vector.multi_reduction <add>, %393, %cst_205 [0] : vector<8x5xi32> to vector<5xi32>
    %395 = vector.shape_cast %394 : vector<5xi32> to vector<1x5xi32>
    %396 = vector.broadcast %387#0 : vector<1x1xi32> to vector<1x5xi32>
    %397 = arith.cmpi eq, %357, %396 : vector<1x5xi32>
    %c0_i32_206 = arith.constant 0 : i32
    %398 = vector.broadcast %c0_i32_206 : i32 to vector<1x5xi32>
    %399 = arith.select %397, %395, %398 : vector<1x5xi1>, vector<1x5xi32>
    %cst_207 = arith.constant dense<0> : vector<1xi32>
    %400 = vector.multi_reduction <add>, %399, %cst_207 [1] : vector<1x5xi32> to vector<1xi32>
    %401 = vector.shape_cast %400 : vector<1xi32> to vector<1x1xi32>
    %c0_208 = arith.constant 0 : index
    %c0_209 = arith.constant 0 : index
    %402 = vector.load %arg26[%c0_208, %c0_209] : memref<1x8xi32, #tpu.memory_space<vmem>>, vector<1x8xi32>
    tpu.vector_store %arg26[%c0_208, %c0_209], %387#1 {strides = array<i32>} : memref<1x8xi32, #tpu.memory_space<vmem>>, vector<1x8xi32>,
    %c0_210 = arith.constant 0 : index
    %c0_211 = arith.constant 0 : index
    %403 = vector.load %arg28[%c0_210, %c0_211] : memref<1x1xi32, #tpu.memory_space<vmem>>, vector<1x1xi32>
    tpu.vector_store %arg28[%c0_210, %c0_211], %401 {strides = array<i32>} : memref<1x1xi32, #tpu.memory_space<vmem>>, vector<1x1xi32>,
    return
  }
}

</mosaic_0001>

<llo_original>
// kernel: _forward_impl.1
$region0: #{_forward_impl.1}
  #allocation0 [shape = 'u32[]', space=smem, size = 0x4, offset = 0x4, fixed_abs, tag = 'smem constant byte address 0x4 - core index']
  #allocation1 [shape = 'u32[72,128]{1,0:T(1,128)}', space=vmem, size = 0x9000, scoped, tag = 'internal scratch']
  %s0 = inlined_call_operand.vmem [shape: s32[8], index: 0, kind: input, shape index: {}]
  %s1 = inlined_call_operand.vmem [shape: f32[100,32], index: 1, kind: input, shape index: {}]
  %s2 = inlined_call_operand.vmem [shape: f32[16,32], index: 2, kind: input, shape index: {}]
  %s3 = inlined_call_operand.vmem [shape: f32[2,32], index: 3, kind: input, shape index: {}]
  %s4 = inlined_call_operand.vmem [shape: f32[1,32], index: 4, kind: input, shape index: {}]
  %s5 = inlined_call_operand.vmem [shape: f32[1,32], index: 5, kind: input, shape index: {}]
  %s6 = inlined_call_operand.vmem [shape: f32[2,4,32,8], index: 6, kind: input, shape index: {}]
  %s7 = inlined_call_operand.vmem [shape: f32[2,4,1,8], index: 7, kind: input, shape index: {}]
  %s8 = inlined_call_operand.vmem [shape: f32[2,4,32,8], index: 8, kind: input, shape index: {}]
  %s9 = inlined_call_operand.vmem [shape: f32[2,4,1,8], index: 9, kind: input, shape index: {}]
  %s10 = inlined_call_operand.vmem [shape: f32[2,4,32,8], index: 10, kind: input, shape index: {}]
  %s11 = inlined_call_operand.vmem [shape: f32[2,4,1,8], index: 11, kind: input, shape index: {}]
  %s12 = inlined_call_operand.vmem [shape: f32[2,4,8,32], index: 12, kind: input, shape index: {}]
  %s13 = inlined_call_operand.vmem [shape: f32[2,1,32], index: 13, kind: input, shape index: {}]
  %s14 = inlined_call_operand.vmem [shape: f32[2,1,32], index: 14, kind: input, shape index: {}]
  %s15 = inlined_call_operand.vmem [shape: f32[2,1,32], index: 15, kind: input, shape index: {}]
  %s16 = inlined_call_operand.vmem [shape: f32[2,32,128], index: 16, kind: input, shape index: {}]
  %s17 = inlined_call_operand.vmem [shape: f32[2,1,128], index: 17, kind: input, shape index: {}]
  %s18 = inlined_call_operand.vmem [shape: f32[2,128,32], index: 18, kind: input, shape index: {}]
  %s19 = inlined_call_operand.vmem [shape: f32[2,1,32], index: 19, kind: input, shape index: {}]
  %s20 = inlined_call_operand.vmem [shape: f32[2,1,32], index: 20, kind: input, shape index: {}]
  %s21 = inlined_call_operand.vmem [shape: f32[2,1,32], index: 21, kind: input, shape index: {}]
  %s22 = inlined_call_operand.vmem [shape: f32[32,5], index: 22, kind: input, shape index: {}]
  %s23 = inlined_call_operand.vmem [shape: f32[1,5], index: 23, kind: input, shape index: {}]
  %s24 = inlined_call_operand.vmem [shape: f32[5,5], index: 24, kind: input, shape index: {}]
  %s25 = inlined_call_operand.hbm [shape: f32[8,5], index: 25, kind: output, shape index: {0}]
  %s26 = inlined_call_operand.hbm [shape: s32[1,8], index: 26, kind: output, shape index: {1}]
  %s27 = inlined_call_operand.hbm [shape: f32[1,1], index: 27, kind: output, shape index: {2}]
  %s28 = inlined_call_operand.hbm [shape: s32[1,1], index: 28, kind: output, shape index: {3}]
  %29 = xla_tuple %s25, %s26, %s27, %s28
  %s30 = sld [smem:[#allocation0]]
  $region152: #{_forward_impl.1} parent=0
    _
  %s32 = ssub.s32 1, %s30
  %s33 = scalar_select 0, %s32, %s30
  $region1: #{_forward_impl.1} parent=0
    #allocation2 [shape = 'u8[512]{0}', space=smem, size = 0x200, scoped, tag = 'input window, operand 0, single buffered']
    #allocation3 [shape = 's32[1]{0}', space=sflag, size = 0x4, scoped, tag = 'scoped memory for _forward_impl.1']
    #allocation4 [shape = 's32[1]{0}', space=sflag, size = 0x4, scoped, tag = 'scoped memory for _forward_impl.1']
    #allocation5 [shape = 'u8[4096]{0}', space=vmem, size = 0x1000, scoped, tag = 'output window, operand 0, single buffered']
    #allocation6 [shape = 'u8[512]{0}', space=vmem, size = 0x400, scoped, tag = 'output window, operand 1, single buffered']
    #allocation7 [shape = 's32[1]{0}', space=sflag, size = 0x4, scoped, tag = 'scoped memory for _forward_impl.1']
    #allocation8 [shape = 'u8[512]{0}', space=vmem, size = 0x400, scoped, tag = 'output window, operand 2, single buffered']
    #allocation9 [shape = 'u8[512]{0}', space=vmem, size = 0x400, scoped, tag = 'output window, operand 3, single buffered']
    #allocation10 [shape = 's32[1]{0}', space=sflag, size = 0x4, scoped, tag = 'scoped memory for _forward_impl.1']
    %34 = vsyncpa [#allocation4], 0
    %35 = vsyncpa [#allocation3], 0
    %36 = vsyncpa [#allocation7], 0
    %37 = vsyncpa [#allocation10], 0
    // Predicated region
    $region2: #{_forward_impl.1} parent=1 // pred_check
      _
    $region3: #{_forward_impl.1} parent=1 // pred_check_branch
      %39 = sbr.rel (0) target = $region5
    $region4: #{_forward_impl.1} parent=1 // pred_region
      %41 = vsyncadd [#allocation4], 0
      %s43 = sshll.u32 %s0, 4
      %s44 = int_to_ptr.vmem [resolvable:$true] %s43
      %46 = dma.vmem_to_smem %s44, 16, [#allocation2], [#allocation4]
    $region5: #{_forward_impl.1} parent=1 // pred_fallthru
      _
    // Predicated region
    $region6: #{_forward_impl.1} parent=1 // pred_check
      _
    $region7: #{_forward_impl.1} parent=1 // pred_check_branch
      %48 = sbr.rel (0) target = $region9
    $region8: #{_forward_impl.1} parent=1 // pred_region
      _
    $region9: #{_forward_impl.1} parent=1 // pred_fallthru
      _
    // Predicated region
    $region10: #{_forward_impl.1} parent=1 // pred_check
      _
    $region11: #{_forward_impl.1} parent=1 // pred_check_branch
      %50 = sbr.rel (0) target = $region13
    $region12: #{_forward_impl.1} parent=1 // pred_region
      _
    $region13: #{_forward_impl.1} parent=1 // pred_fallthru
      _
    // Predicated region
    $region14: #{_forward_impl.1} parent=1 // pred_check
      _
    $region15: #{_forward_impl.1} parent=1 // pred_check_branch
      %52 = sbr.rel (0) target = $region17
    $region16: #{_forward_impl.1} parent=1 // pred_region
      _
    $region17: #{_forward_impl.1} parent=1 // pred_fallthru
      _
    // Predicated region
    $region18: #{_forward_impl.1} parent=1 // pred_check
      _
    $region19: #{_forward_impl.1} parent=1 // pred_check_branch
      %54 = sbr.rel (0) target = $region21
    $region20: #{_forward_impl.1} parent=1 // pred_region
      _
    $region21: #{_forward_impl.1} parent=1 // pred_fallthru
      _
    // Predicated region
    $region22: #{_forward_impl.1} parent=1 // pred_check
      _
    $region23: #{_forward_impl.1} parent=1 // pred_check_branch
      %56 = sbr.rel (0) target = $region25
    $region24: #{_forward_impl.1} parent=1 // pred_region
      _
    $region25: #{_forward_impl.1} parent=1 // pred_fallthru
      _
    // Predicated region
    $region26: #{_forward_impl.1} parent=1 // pred_check
      _
    $region27: #{_forward_impl.1} parent=1 // pred_check_branch
      %58 = sbr.rel (0) target = $region29
    $region28: #{_forward_impl.1} parent=1 // pred_region
      _
    $region29: #{_forward_impl.1} parent=1 // pred_fallthru
      _
    // Predicated region
    $region30: #{_forward_impl.1} parent=1 // pred_check
      _
    $region31: #{_forward_impl.1} parent=1 // pred_check_branch
      %60 = sbr.rel (0) target = $region33
    $region32: #{_forward_impl.1} parent=1 // pred_region
      _
    $region33: #{_forward_impl.1} parent=1 // pred_fallthru
      _
    // Predicated region
    $region34: #{_forward_impl.1} parent=1 // pred_check
      _
    $region35: #{_forward_impl.1} parent=1 // pred_check_branch
      %62 = sbr.rel (0) target = $region37
    $region36: #{_forward_impl.1} parent=1 // pred_region
      _
    $region37: #{_forward_impl.1} parent=1 // pred_fallthru
      _
    // Predicated region
    $region38: #{_forward_impl.1} parent=1 // pred_check
      _
    $region39: #{_forward_impl.1} parent=1 // pred_check_branch
      %64 = sbr.rel (0) target = $region41
    $region40: #{_forward_impl.1} parent=1 // pred_region
      _
    $region41: #{_forward_impl.1} parent=1 // pred_fallthru
      _
    // Predicated region
    $region42: #{_forward_impl.1} parent=1 // pred_check
      _
    $region43: #{_forward_impl.1} parent=1 // pred_check_branch
      %66 = sbr.rel (0) target = $region45
    $region44: #{_forward_impl.1} parent=1 // pred_region
      _
    $region45: #{_forward_impl.1} parent=1 // pred_fallthru
      _
    // Predicated region
    $region46: #{_forward_impl.1} parent=1 // pred_check
      _
    $region47: #{_forward_impl.1} parent=1 // pred_check_branch
      %68 = sbr.rel (0) target = $region49
    $region48: #{_forward_impl.1} parent=1 // pred_region
      _
    $region49: #{_forward_impl.1} parent=1 // pred_fallthru
      _
    // Predicated region
    $region50: #{_forward_impl.1} parent=1 // pred_check
      _
    $region51: #{_forward_impl.1} parent=1 // pred_check_branch
      %70 = sbr.rel (0) target = $region53
    $region52: #{_forward_impl.1} parent=1 // pred_region
      _
    $region53: #{_forward_impl.1} parent=1 // pred_fallthru
      _
    // Predicated region
    $region54: #{_forward_impl.1} parent=1 // pred_check
      _
    $region55: #{_forward_impl.1} parent=1 // pred_check_branch
      %72 = sbr.rel (0) target = $region57
    $region56: #{_forward_impl.1} parent=1 // pred_region
      _
    $region57: #{_forward_impl.1} parent=1 // pred_fallthru
      _
    // Predicated region
    $region58: #{_forward_impl.1} parent=1 // pred_check
      _
    $region59: #{_forward_impl.1} parent=1 // pred_check_branch
      %74 = sbr.rel (0) target = $region61
    $region60: #{_forward_impl.1} parent=1 // pred_region
      _
    $region61: #{_forward_impl.1} parent=1 // pred_fallthru
      _
    // Predicated region
    $region62: #{_forward_impl.1} parent=1 // pred_check
      _
    $region63: #{_forward_impl.1} parent=1 // pred_check_branch
      %76 = sbr.rel (0) target = $region65
    $region64: #{_forward_impl.1} parent=1 // pred_region
      _
    $region65: #{_forward_impl.1} parent=1 // pred_fallthru
      _
    // Predicated region
    $region66: #{_forward_impl.1} parent=1 // pred_check
      _
    $region67: #{_forward_impl.1} parent=1 // pred_check_branch
      %78 = sbr.rel (0) target = $region69
    $region68: #{_forward_impl.1} parent=1 // pred_region
      _
    $region69: #{_forward_impl.1} parent=1 // pred_fallthru
      _
    // Predicated region
    $region70: #{_forward_impl.1} parent=1 // pred_check
      _
    $region71: #{_forward_impl.1} parent=1 // pred_check_branch
      %80 = sbr.rel (0) target = $region73
    $region72: #{_forward_impl.1} parent=1 // pred_region
      _
    $region73: #{_forward_impl.1} parent=1 // pred_fallthru
      _
    // Predicated region
    $region74: #{_forward_impl.1} parent=1 // pred_check
      _
    $region75: #{_forward_impl.1} parent=1 // pred_check_branch
      %82 = sbr.rel (0) target = $region77
    $region76: #{_forward_impl.1} parent=1 // pred_region
      _
    $region77: #{_forward_impl.1} parent=1 // pred_fallthru
      _
    // Predicated region
    $region78: #{_forward_impl.1} parent=1 // pred_check
      _
    $region79: #{_forward_impl.1} parent=1 // pred_check_branch
      %84 = sbr.rel (0) target = $region81
    $region80: #{_forward_impl.1} parent=1 // pred_region
      _
    $region81: #{_forward_impl.1} parent=1 // pred_fallthru
      _
    // Predicated region
    $region82: #{_forward_impl.1} parent=1 // pred_check
      _
    $region83: #{_forward_impl.1} parent=1 // pred_check_branch
      %86 = sbr.rel (0) target = $region85
    $region84: #{_forward_impl.1} parent=1 // pred_region
      _
    $region85: #{_forward_impl.1} parent=1 // pred_fallthru
      _
    // Predicated region
    $region86: #{_forward_impl.1} parent=1 // pred_check
      _
    $region87: #{_forward_impl.1} parent=1 // pred_check_branch
      %88 = sbr.rel (0) target = $region89
    $region88: #{_forward_impl.1} parent=1 // pred_region
      _
    $region89: #{_forward_impl.1} parent=1 // pred_fallthru
      _
    // Predicated region
    $region90: #{_forward_impl.1} parent=1 // pred_check
      _
    $region91: #{_forward_impl.1} parent=1 // pred_check_branch
      %90 = sbr.rel (0) target = $region93
    $region92: #{_forward_impl.1} parent=1 // pred_region
      _
    $region93: #{_forward_impl.1} parent=1 // pred_fallthru
      _
    // Predicated region
    $region94: #{_forward_impl.1} parent=1 // pred_check
      _
    $region95: #{_forward_impl.1} parent=1 // pred_check_branch
      %92 = sbr.rel (0) target = $region97
    $region96: #{_forward_impl.1} parent=1 // pred_region
      _
    $region97: #{_forward_impl.1} parent=1 // pred_fallthru
      _
    // Predicated region
    $region98: #{_forward_impl.1} parent=1 // pred_check
      _
    $region99: #{_forward_impl.1} parent=1 // pred_check_branch
      %94 = sbr.rel (0) target = $region101
    $region100: #{_forward_impl.1} parent=1 // pred_region
      _
    $region101: #{_forward_impl.1} parent=1 // pred_fallthru
      _
    // Predicated region
    $region102: #{_forward_impl.1} parent=1 // pred_check
      _
    $region103: #{_forward_impl.1} parent=1 // pred_check_branch
      %96 = sbr.rel (0) target = $region105
    $region104: #{_forward_impl.1} parent=1 // pred_region
      %98 = dma.done [#allocation4], 16
    $region105: #{_forward_impl.1} parent=1 // pred_fallthru
      _
    %99 = sfence
    %v100 = vlaneseq
    %v101 = vshrl.u32 %v100, 7
    %vm102 = vcmp.eq.s32.totalorder %v101, 0
    %s103 = sld [smem:[#allocation2]]
    %v104 = vstv %s103
    %v105 = vsel %vm102, %v104, 0
    %vm106 = vcmp.eq.s32.totalorder %v101, 1
    %s107 = sld [smem:[#allocation2 + $0x1]]
    %v108 = vstv %s107
    %v109 = vsel %vm106, %v108, %v105
    %vm110 = vcmp.eq.s32.totalorder %v101, 2
    %s111 = sld [smem:[#allocation2 + $0x2]]
    %v112 = vstv %s111
    %v113 = vsel %vm110, %v112, %v109
    %vm114 = vcmp.eq.s32.totalorder %v101, 3
    %s115 = sld [smem:[#allocation2 + $0x3]]
    %v116 = vstv %s115
    %v117 = vsel %vm114, %v116, %v113
    %vm118 = vcmp.eq.s32.totalorder %v101, 4
    %s119 = sld [smem:[#allocation2 + $0x4]]
    %v120 = vstv %s119
    %v121 = vsel %vm118, %v120, %v117
    %vm122 = vcmp.eq.s32.totalorder %v101, 5
    %s123 = sld [smem:[#allocation2 + $0x5]]
    %v124 = vstv %s123
    %v125 = vsel %vm122, %v124, %v121
    %vm126 = vcmp.eq.s32.totalorder %v101, 6
    %s127 = sld [smem:[#allocation2 + $0x6]]
    %v128 = vstv %s127
    %v129 = vsel %vm126, %v128, %v125
    %vm130 = vcmp.eq.s32.totalorder %v101, 7
    %s131 = sld [smem:[#allocation2 + $0x7]]
    %v132 = vstv %s131
    %v133 = vsel %vm130, %v132, %v129
    %v134 = vlaneseq
    %v135 = vand.u32 %v134, 127
    %vm136 = vcmp.eq.s32.totalorder %v135, %v133
    %v137 = vsel %vm136, 1, 0
    %v138 = vcvt.s32.f32 %v137
    %v139 = vld [vmem:[%s1] sm:$0xff]
    %v140 = vld [vmem:[%s1 + $0x8] sm:$0xff]
    %v141 = vld [vmem:[%s1 + $0x10] sm:$0xff]
    %v142 = vld [vmem:[%s1 + $0x18] sm:$0xff]
    %v143 = vld [vmem:[%s1 + $0x20] sm:$0xff]
    %v144 = vld [vmem:[%s1 + $0x28] sm:$0xff]
    %v145 = vld [vmem:[%s1 + $0x30] sm:$0xff]
    %v146 = vld [vmem:[%s1 + $0x38] sm:$0xff]
    %v147 = vld [vmem:[%s1 + $0x40] sm:$0xff]
    %v148 = vld [vmem:[%s1 + $0x48] sm:$0xff]
    %v149 = vld [vmem:[%s1 + $0x50] sm:$0xff]
    %v150 = vld [vmem:[%s1 + $0x58] sm:$0xff]
    %v151 = vld [vmem:[%s1 + $0x60] sm:$0xf]
    %v152 = vld [vmem:[%s2] sm:$0xff]
    %vm153 = vcmask 818176
    %v155 = vsel %vm153, %v138, 0
    %vm157 = vcmask 1043456
    %v159 = vsel %vm157, %v151, 0
    %161 = vmatpush.msra.mxu0 0.0
    %162 = vmatpush.msra.mxu0 0.0
    %163 = vmatpush.msra.mxu0 0.0
    %164 = vmatpush.msra.mxu0 %v159
    %165 = vmatpush.msra.mxu0 %v150
    %166 = vmatpush.msra.mxu0 %v149
    %167 = vmatpush.msra.mxu0 %v148
    %168 = vmatpush.msra.mxu0 %v147
    %169 = vmatpush.msra.mxu0 %v146
    %170 = vmatpush.msra.mxu0 %v145
    %171 = vmatpush.msra.mxu0 %v144
    %172 = vmatpush.msra.mxu0 %v143
    %173 = vmatpush.msra.mxu0 %v142
    %174 = vmatpush.msra.mxu0 %v141
    %175 = vmatpush.msra.mxu0 %v140
    %176 = vmatpush.msra.mxu0 %v139
    %177 = vmatmul.f32.gmra.mxu0 %v155
    %v178 = vpop.f32.mrf.mxu0
    %v179 = vadd.f32 %v152, %v178
    %180 = vdwg.mxu0
    %v181 = vld [vmem:[%s3] sm:$0x1]
    %v182 = vperm.slane %v181, 0
    %v183 = vadd.f32 %v179, %v182
    %v184 = vld [vmem:[%s4] sm:$0x1]
    %v185 = vld [vmem:[%s5] sm:$0x1]
    %vm186 = vcmask 261120
    %v187 = vsel %vm186, %v183, 0.0
    %188 = vadd.xlane.f32.xlu0 %v187
    %v189 = vpop.xlane.xlu0 %188
    %v190 = vrcp.pop 32.0
    %v191 = vmul.f32 32.0, %v190
    %v192 = vsub.f32 1.0, %v191
    %v193 = vmul.f32 %v190, %v192
    %v194 = vadd.f32 %v190, %v193
    %vm195 = vweird.f32 %v190
    %v196 = vsel %vm195, %v190, %v194
    %v197 = vmul.f32 %v189, %v196
    %v198 = vsub.f32 %v183, %v197
    %v199 = vmul.f32 %v198, %v198
    %v200 = vsel %vm186, %v199, 0.0
    %201 = vadd.xlane.f32.xlu0 %v200
    %v202 = vpop.xlane.xlu0 %201
    %v203 = vmul.f32 %v202, %v196
    %v204 = vadd.f32 %v203, 1e-12
    %v205 = vrsqrt.pop %v204
    %v206 = vmul.f32 %v205, %v204
    %v207 = vmul.f32 %v206, %v205
    %v208 = vmul.f32 0.5, %v207
    %v209 = vsub.f32 1.5, %v208
    %v210 = vmul.f32 %v205, %v209
    %vm211 = vweird.f32 %v204
    %vm212 = vweird.f32 %v205
    %vm213 = vmor %vm211, %vm212
    %v214 = vsel %vm213, %v205, %v210
    %v215 = vmul.f32 %v198, %v214
    %v217 = vperm.slane %v184, 0
    %v219 = vmul.f32 %v215, %v217
    %v221 = vperm.slane %v185, 0
    %v223 = vadd.f32 %v219, %v221
    %v224 = vld [vmem:[%s6] sm:$0xff]
    %v225 = vld [vmem:[%s6 + $0x8] sm:$0xff]
    %v226 = vld [vmem:[%s6 + $0x10] sm:$0xff]
    %v227 = vld [vmem:[%s6 + $0x18] sm:$0xff]
    %v228 = vld [vmem:[%s6 + $0x20] sm:$0xff]
    %v229 = vld [vmem:[%s6 + $0x28] sm:$0xff]
    %v230 = vld [vmem:[%s6 + $0x30] sm:$0xff]
    %v231 = vld [vmem:[%s6 + $0x38] sm:$0xff]
    %v232 = vld [vmem:[%s6 + $0x40] sm:$0xff]
    %v233 = vld [vmem:[%s6 + $0x48] sm:$0xff]
    %v234 = vld [vmem:[%s6 + $0x50] sm:$0xff]
    %v235 = vld [vmem:[%s6 + $0x58] sm:$0xff]
    %v236 = vld [vmem:[%s6 + $0x60] sm:$0xff]
    %v237 = vld [vmem:[%s6 + $0x68] sm:$0xff]
    %v238 = vld [vmem:[%s6 + $0x70] sm:$0xff]
    %v239 = vld [vmem:[%s6 + $0x78] sm:$0xff]
    %v240 = vld [vmem:[%s7] sm:$0x1]
    %v241 = vld [vmem:[%s7 + $0x1] sm:$0x1]
    %v242 = vld [vmem:[%s7 + $0x2] sm:$0x1]
    %v243 = vld [vmem:[%s7 + $0x3] sm:$0x1]
    %v248 = vperm.slane %v240, 0
    %v249 = vperm.slane %v241, 0
    %v250 = vperm.slane %v242, 0
    %v251 = vperm.slane %v243, 0
    %v257 = vsel %vm186, %v223, 0
    %259 = vmatpush.msra.mxu0 0.0
    %260 = vmatpush.msra.mxu0 0.0
    %261 = vmatpush.msra.mxu0 0.0
    %262 = vmatpush.msra.mxu0 0.0
    %263 = vmatpush.msra.mxu0 0.0
    %264 = vmatpush.msra.mxu0 0.0
    %265 = vmatpush.msra.mxu0 0.0
    %266 = vmatpush.msra.mxu0 0.0
    %267 = vmatpush.msra.mxu0 0.0
    %268 = vmatpush.msra.mxu0 0.0
    %269 = vmatpush.msra.mxu0 0.0
    %270 = vmatpush.msra.mxu0 0.0
    %271 = vmatpush.msra.mxu0 %v227
    %272 = vmatpush.msra.mxu0 %v226
    %273 = vmatpush.msra.mxu0 %v225
    %274 = vmatpush.msra.mxu0 %v224
    %275 = vmatmul.f32.gmra.mxu0 %v257
    %v276 = vpop.f32.mrf.mxu0
    %v277 = vadd.f32 %v248, %v276
    %278 = vdwg.mxu0
    %279 = vmatpush.msra.mxu0 0.0
    %280 = vmatpush.msra.mxu0 0.0
    %281 = vmatpush.msra.mxu0 0.0
    %282 = vmatpush.msra.mxu0 0.0
    %283 = vmatpush.msra.mxu0 0.0
    %284 = vmatpush.msra.mxu0 0.0
    %285 = vmatpush.msra.mxu0 0.0
    %286 = vmatpush.msra.mxu0 0.0
    %287 = vmatpush.msra.mxu0 0.0
    %288 = vmatpush.msra.mxu0 0.0
    %289 = vmatpush.msra.mxu0 0.0
    %290 = vmatpush.msra.mxu0 0.0
    %291 = vmatpush.msra.mxu0 %v231
    %292 = vmatpush.msra.mxu0 %v230
    %293 = vmatpush.msra.mxu0 %v229
    %294 = vmatpush.msra.mxu0 %v228
    %295 = vmatmul.f32.gmra.mxu0 %v257
    %v296 = vpop.f32.mrf.mxu0
    %v297 = vadd.f32 %v249, %v296
    %298 = vdwg.mxu0
    %299 = vmatpush.msra.mxu0 0.0
    %300 = vmatpush.msra.mxu0 0.0
    %301 = vmatpush.msra.mxu0 0.0
    %302 = vmatpush.msra.mxu0 0.0
    %303 = vmatpush.msra.mxu0 0.0
    %304 = vmatpush.msra.mxu0 0.0
    %305 = vmatpush.msra.mxu0 0.0
    %306 = vmatpush.msra.mxu0 0.0
    %307 = vmatpush.msra.mxu0 0.0
    %308 = vmatpush.msra.mxu0 0.0
    %309 = vmatpush.msra.mxu0 0.0
    %310 = vmatpush.msra.mxu0 0.0
    %311 = vmatpush.msra.mxu0 %v235
    %312 = vmatpush.msra.mxu0 %v234
    %313 = vmatpush.msra.mxu0 %v233
    %314 = vmatpush.msra.mxu0 %v232
    %315 = vmatmul.f32.gmra.mxu0 %v257
    %v316 = vpop.f32.mrf.mxu0
    %v317 = vadd.f32 %v250, %v316
    %318 = vdwg.mxu0
    %319 = vmatpush.msra.mxu0 0.0
    %320 = vmatpush.msra.mxu0 0.0
    %321 = vmatpush.msra.mxu0 0.0
    %322 = vmatpush.msra.mxu0 0.0
    %323 = vmatpush.msra.mxu0 0.0
    %324 = vmatpush.msra.mxu0 0.0
    %325 = vmatpush.msra.mxu0 0.0
    %326 = vmatpush.msra.mxu0 0.0
    %327 = vmatpush.msra.mxu0 0.0
    %328 = vmatpush.msra.mxu0 0.0
    %329 = vmatpush.msra.mxu0 0.0
    %330 = vmatpush.msra.mxu0 0.0
    %331 = vmatpush.msra.mxu0 %v239
    %332 = vmatpush.msra.mxu0 %v238
    %333 = vmatpush.msra.mxu0 %v237
    %334 = vmatpush.msra.mxu0 %v236
    %335 = vmatmul.f32.gmra.mxu0 %v257
    %v336 = vpop.f32.mrf.mxu0
    %v337 = vadd.f32 %v251, %v336
    %338 = vdwg.mxu0
    %v339 = vld [vmem:[%s8] sm:$0xff]
    %v340 = vld [vmem:[%s8 + $0x8] sm:$0xff]
    %v341 = vld [vmem:[%s8 + $0x10] sm:$0xff]
    %v342 = vld [vmem:[%s8 + $0x18] sm:$0xff]
    %v343 = vld [vmem:[%s8 + $0x20] sm:$0xff]
    %v344 = vld [vmem:[%s8 + $0x28] sm:$0xff]
    %v345 = vld [vmem:[%s8 + $0x30] sm:$0xff]
    %v346 = vld [vmem:[%s8 + $0x38] sm:$0xff]
    %v347 = vld [vmem:[%s8 + $0x40] sm:$0xff]
    %v348 = vld [vmem:[%s8 + $0x48] sm:$0xff]
    %v349 = vld [vmem:[%s8 + $0x50] sm:$0xff]
    %v350 = vld [vmem:[%s8 + $0x58] sm:$0xff]
    %v351 = vld [vmem:[%s8 + $0x60] sm:$0xff]
    %v352 = vld [vmem:[%s8 + $0x68] sm:$0xff]
    %v353 = vld [vmem:[%s8 + $0x70] sm:$0xff]
    %v354 = vld [vmem:[%s8 + $0x78] sm:$0xff]
    %v355 = vld [vmem:[%s9] sm:$0x1]
    %v356 = vld [vmem:[%s9 + $0x1] sm:$0x1]
    %v357 = vld [vmem:[%s9 + $0x2] sm:$0x1]
    %v358 = vld [vmem:[%s9 + $0x3] sm:$0x1]
    %v363 = vperm.slane %v355, 0
    %v364 = vperm.slane %v356, 0
    %v365 = vperm.slane %v357, 0
    %v366 = vperm.slane %v358, 0
    %371 = vmatpush.msra.mxu0 0.0
    %372 = vmatpush.msra.mxu0 0.0
    %373 = vmatpush.msra.mxu0 0.0
    %374 = vmatpush.msra.mxu0 0.0
    %375 = vmatpush.msra.mxu0 0.0
    %376 = vmatpush.msra.mxu0 0.0
    %377 = vmatpush.msra.mxu0 0.0
    %378 = vmatpush.msra.mxu0 0.0
    %379 = vmatpush.msra.mxu0 0.0
    %380 = vmatpush.msra.mxu0 0.0
    %381 = vmatpush.msra.mxu0 0.0
    %382 = vmatpush.msra.mxu0 0.0
    %383 = vmatpush.msra.mxu0 %v342
    %384 = vmatpush.msra.mxu0 %v341
    %385 = vmatpush.msra.mxu0 %v340
    %386 = vmatpush.msra.mxu0 %v339
    %387 = vmatmul.f32.gmra.mxu0 %v257
    %v388 = vpop.f32.mrf.mxu0
    %v389 = vadd.f32 %v363, %v388
    %390 = vdwg.mxu0
    %391 = vmatpush.msra.mxu0 0.0
    %392 = vmatpush.msra.mxu0 0.0
    %393 = vmatpush.msra.mxu0 0.0
    %394 = vmatpush.msra.mxu0 0.0
    %395 = vmatpush.msra.mxu0 0.0
    %396 = vmatpush.msra.mxu0 0.0
    %397 = vmatpush.msra.mxu0 0.0
    %398 = vmatpush.msra.mxu0 0.0
    %399 = vmatpush.msra.mxu0 0.0
    %400 = vmatpush.msra.mxu0 0.0
    %401 = vmatpush.msra.mxu0 0.0
    %402 = vmatpush.msra.mxu0 0.0
    %403 = vmatpush.msra.mxu0 %v346
    %404 = vmatpush.msra.mxu0 %v345
    %405 = vmatpush.msra.mxu0 %v344
    %406 = vmatpush.msra.mxu0 %v343
    %407 = vmatmul.f32.gmra.mxu0 %v257
    %v408 = vpop.f32.mrf.mxu0
    %v409 = vadd.f32 %v364, %v408
    %410 = vdwg.mxu0
    %411 = vmatpush.msra.mxu0 0.0
    %412 = vmatpush.msra.mxu0 0.0
    %413 = vmatpush.msra.mxu0 0.0
    %414 = vmatpush.msra.mxu0 0.0
    %415 = vmatpush.msra.mxu0 0.0
    %416 = vmatpush.msra.mxu0 0.0
    %417 = vmatpush.msra.mxu0 0.0
    %418 = vmatpush.msra.mxu0 0.0
    %419 = vmatpush.msra.mxu0 0.0
    %420 = vmatpush.msra.mxu0 0.0
    %421 = vmatpush.msra.mxu0 0.0
    %422 = vmatpush.msra.mxu0 0.0
    %423 = vmatpush.msra.mxu0 %v350
    %424 = vmatpush.msra.mxu0 %v349
    %425 = vmatpush.msra.mxu0 %v348
    %426 = vmatpush.msra.mxu0 %v347
    %427 = vmatmul.f32.gmra.mxu0 %v257
    %v428 = vpop.f32.mrf.mxu0
    %v429 = vadd.f32 %v365, %v428
    %430 = vdwg.mxu0
    %431 = vmatpush.msra.mxu0 0.0
    %432 = vmatpush.msra.mxu0 0.0
    %433 = vmatpush.msra.mxu0 0.0
    %434 = vmatpush.msra.mxu0 0.0
    %435 = vmatpush.msra.mxu0 0.0
    %436 = vmatpush.msra.mxu0 0.0
    %437 = vmatpush.msra.mxu0 0.0
    %438 = vmatpush.msra.mxu0 0.0
    %439 = vmatpush.msra.mxu0 0.0
    %440 = vmatpush.msra.mxu0 0.0
    %441 = vmatpush.msra.mxu0 0.0
    %442 = vmatpush.msra.mxu0 0.0
    %443 = vmatpush.msra.mxu0 %v354
    %444 = vmatpush.msra.mxu0 %v353
    %445 = vmatpush.msra.mxu0 %v352
    %446 = vmatpush.msra.mxu0 %v351
    %447 = vmatmul.f32.gmra.mxu0 %v257
    %v448 = vpop.f32.mrf.mxu0
    %v449 = vadd.f32 %v366, %v448
    %450 = vdwg.mxu0
    %v451 = vld [vmem:[%s10] sm:$0xff]
    %v452 = vld [vmem:[%s10 + $0x8] sm:$0xff]
    %v453 = vld [vmem:[%s10 + $0x10] sm:$0xff]
    %v454 = vld [vmem:[%s10 + $0x18] sm:$0xff]
    %v455 = vld [vmem:[%s10 + $0x20] sm:$0xff]
    %v456 = vld [vmem:[%s10 + $0x28] sm:$0xff]
    %v457 = vld [vmem:[%s10 + $0x30] sm:$0xff]
    %v458 = vld [vmem:[%s10 + $0x38] sm:$0xff]
    %v459 = vld [vmem:[%s10 + $0x40] sm:$0xff]
    %v460 = vld [vmem:[%s10 + $0x48] sm:$0xff]
    %v461 = vld [vmem:[%s10 + $0x50] sm:$0xff]
    %v462 = vld [vmem:[%s10 + $0x58] sm:$0xff]
    %v463 = vld [vmem:[%s10 + $0x60] sm:$0xff]
    %v464 = vld [vmem:[%s10 + $0x68] sm:$0xff]
    %v465 = vld [vmem:[%s10 + $0x70] sm:$0xff]
    %v466 = vld [vmem:[%s10 + $0x78] sm:$0xff]
    %v467 = vld [vmem:[%s11] sm:$0x1]
    %v468 = vld [vmem:[%s11 + $0x1] sm:$0x1]
    %v469 = vld [vmem:[%s11 + $0x2] sm:$0x1]
    %v470 = vld [vmem:[%s11 + $0x3] sm:$0x1]
    %v475 = vperm.slane %v467, 0
    %v476 = vperm.slane %v468, 0
    %v477 = vperm.slane %v469, 0
    %v478 = vperm.slane %v470, 0
    %483 = vmatpush.msra.mxu0 0.0
    %484 = vmatpush.msra.mxu0 0.0
    %485 = vmatpush.msra.mxu0 0.0
    %486 = vmatpush.msra.mxu0 0.0
    %487 = vmatpush.msra.mxu0 0.0
    %488 = vmatpush.msra.mxu0 0.0
    %489 = vmatpush.msra.mxu0 0.0
    %490 = vmatpush.msra.mxu0 0.0
    %491 = vmatpush.msra.mxu0 0.0
    %492 = vmatpush.msra.mxu0 0.0
    %493 = vmatpush.msra.mxu0 0.0
    %494 = vmatpush.msra.mxu0 0.0
    %495 = vmatpush.msra.mxu0 %v454
    %496 = vmatpush.msra.mxu0 %v453
    %497 = vmatpush.msra.mxu0 %v452
    %498 = vmatpush.msra.mxu0 %v451
    %499 = vmatmul.f32.gmra.mxu0 %v257
    %v500 = vpop.f32.mrf.mxu0
    %v501 = vadd.f32 %v475, %v500
    %502 = vdwg.mxu0
    %503 = vmatpush.msra.mxu0 0.0
    %504 = vmatpush.msra.mxu0 0.0
    %505 = vmatpush.msra.mxu0 0.0
    %506 = vmatpush.msra.mxu0 0.0
    %507 = vmatpush.msra.mxu0 0.0
    %508 = vmatpush.msra.mxu0 0.0
    %509 = vmatpush.msra.mxu0 0.0
    %510 = vmatpush.msra.mxu0 0.0
    %511 = vmatpush.msra.mxu0 0.0
    %512 = vmatpush.msra.mxu0 0.0
    %513 = vmatpush.msra.mxu0 0.0
    %514 = vmatpush.msra.mxu0 0.0
    %515 = vmatpush.msra.mxu0 %v458
    %516 = vmatpush.msra.mxu0 %v457
    %517 = vmatpush.msra.mxu0 %v456
    %518 = vmatpush.msra.mxu0 %v455
    %519 = vmatmul.f32.gmra.mxu0 %v257
    %v520 = vpop.f32.mrf.mxu0
    %v521 = vadd.f32 %v476, %v520
    %522 = vdwg.mxu0
    %523 = vmatpush.msra.mxu0 0.0
    %524 = vmatpush.msra.mxu0 0.0
    %525 = vmatpush.msra.mxu0 0.0
    %526 = vmatpush.msra.mxu0 0.0
    %527 = vmatpush.msra.mxu0 0.0
    %528 = vmatpush.msra.mxu0 0.0
    %529 = vmatpush.msra.mxu0 0.0
    %530 = vmatpush.msra.mxu0 0.0
    %531 = vmatpush.msra.mxu0 0.0
    %532 = vmatpush.msra.mxu0 0.0
    %533 = vmatpush.msra.mxu0 0.0
    %534 = vmatpush.msra.mxu0 0.0
    %535 = vmatpush.msra.mxu0 %v462
    %536 = vmatpush.msra.mxu0 %v461
    %537 = vmatpush.msra.mxu0 %v460
    %538 = vmatpush.msra.mxu0 %v459
    %539 = vmatmul.f32.gmra.mxu0 %v257
    %v540 = vpop.f32.mrf.mxu0
    %v541 = vadd.f32 %v477, %v540
    %542 = vdwg.mxu0
    %543 = vmatpush.msra.mxu0 0.0
    %544 = vmatpush.msra.mxu0 0.0
    %545 = vmatpush.msra.mxu0 0.0
    %546 = vmatpush.msra.mxu0 0.0
    %547 = vmatpush.msra.mxu0 0.0
    %548 = vmatpush.msra.mxu0 0.0
    %549 = vmatpush.msra.mxu0 0.0
    %550 = vmatpush.msra.mxu0 0.0
    %551 = vmatpush.msra.mxu0 0.0
    %552 = vmatpush.msra.mxu0 0.0
    %553 = vmatpush.msra.mxu0 0.0
    %554 = vmatpush.msra.mxu0 0.0
    %555 = vmatpush.msra.mxu0 %v466
    %556 = vmatpush.msra.mxu0 %v465
    %557 = vmatpush.msra.mxu0 %v464
    %558 = vmatpush.msra.mxu0 %v463
    %559 = vmatmul.f32.gmra.mxu0 %v257
    %v560 = vpop.f32.mrf.mxu0
    %v561 = vadd.f32 %v478, %v560
    %562 = vdwg.mxu0
    %vm563 = vcmask 64512
    %v565 = vsel %vm563, %v277, 0
    %v568 = vsel %vm563, %v389, 0
    %570 = vmatpush.xpose.msra.mxu0 0.0
    %571 = vmatpush.xpose.msra.mxu0 0.0
    %572 = vmatpush.xpose.msra.mxu0 0.0
    %573 = vmatpush.xpose.msra.mxu0 0.0
    %574 = vmatpush.xpose.msra.mxu0 0.0
    %575 = vmatpush.xpose.msra.mxu0 0.0
    %576 = vmatpush.xpose.msra.mxu0 0.0
    %577 = vmatpush.xpose.msra.mxu0 0.0
    %578 = vmatpush.xpose.msra.mxu0 0.0
    %579 = vmatpush.xpose.msra.mxu0 0.0
    %580 = vmatpush.xpose.msra.mxu0 0.0
    %581 = vmatpush.xpose.msra.mxu0 0.0
    %582 = vmatpush.xpose.msra.mxu0 0.0
    %583 = vmatpush.xpose.msra.mxu0 0.0
    %584 = vmatpush.xpose.msra.mxu0 0.0
    %585 = vmatpush.xpose.msra.mxu0 %v568
    %586 = vmatmul.f32.gmra.mxu0 %v565
    %v587 = vpop.f32.mrf.mxu0
    %v588 = vadd.f32 0.0, %v587
    %589 = vdwg.mxu0
    %v591 = vsel %vm563, %v297, 0
    %v594 = vsel %vm563, %v409, 0
    %596 = vmatpush.xpose.msra.mxu0 0.0
    %597 = vmatpush.xpose.msra.mxu0 0.0
    %598 = vmatpush.xpose.msra.mxu0 0.0
    %599 = vmatpush.xpose.msra.mxu0 0.0
    %600 = vmatpush.xpose.msra.mxu0 0.0
    %601 = vmatpush.xpose.msra.mxu0 0.0
    %602 = vmatpush.xpose.msra.mxu0 0.0
    %603 = vmatpush.xpose.msra.mxu0 0.0
    %604 = vmatpush.xpose.msra.mxu0 0.0
    %605 = vmatpush.xpose.msra.mxu0 0.0
    %606 = vmatpush.xpose.msra.mxu0 0.0
    %607 = vmatpush.xpose.msra.mxu0 0.0
    %608 = vmatpush.xpose.msra.mxu0 0.0
    %609 = vmatpush.xpose.msra.mxu0 0.0
    %610 = vmatpush.xpose.msra.mxu0 0.0
    %611 = vmatpush.xpose.msra.mxu0 %v594
    %612 = vmatmul.f32.gmra.mxu0 %v591
    %v613 = vpop.f32.mrf.mxu0
    %v614 = vadd.f32 0.0, %v613
    %615 = vdwg.mxu0
    %v617 = vsel %vm563, %v317, 0
    %v620 = vsel %vm563, %v429, 0
    %622 = vmatpush.xpose.msra.mxu0 0.0
    %623 = vmatpush.xpose.msra.mxu0 0.0
    %624 = vmatpush.xpose.msra.mxu0 0.0
    %625 = vmatpush.xpose.msra.mxu0 0.0
    %626 = vmatpush.xpose.msra.mxu0 0.0
    %627 = vmatpush.xpose.msra.mxu0 0.0
    %628 = vmatpush.xpose.msra.mxu0 0.0
    %629 = vmatpush.xpose.msra.mxu0 0.0
    %630 = vmatpush.xpose.msra.mxu0 0.0
    %631 = vmatpush.xpose.msra.mxu0 0.0
    %632 = vmatpush.xpose.msra.mxu0 0.0
    %633 = vmatpush.xpose.msra.mxu0 0.0
    %634 = vmatpush.xpose.msra.mxu0 0.0
    %635 = vmatpush.xpose.msra.mxu0 0.0
    %636 = vmatpush.xpose.msra.mxu0 0.0
    %637 = vmatpush.xpose.msra.mxu0 %v620
    %638 = vmatmul.f32.gmra.mxu0 %v617
    %v639 = vpop.f32.mrf.mxu0
    %v640 = vadd.f32 0.0, %v639
    %641 = vdwg.mxu0
    %v643 = vsel %vm563, %v337, 0
    %v646 = vsel %vm563, %v449, 0
    %648 = vmatpush.xpose.msra.mxu0 0.0
    %649 = vmatpush.xpose.msra.mxu0 0.0
    %650 = vmatpush.xpose.msra.mxu0 0.0
    %651 = vmatpush.xpose.msra.mxu0 0.0
    %652 = vmatpush.xpose.msra.mxu0 0.0
    %653 = vmatpush.xpose.msra.mxu0 0.0
    %654 = vmatpush.xpose.msra.mxu0 0.0
    %655 = vmatpush.xpose.msra.mxu0 0.0
    %656 = vmatpush.xpose.msra.mxu0 0.0
    %657 = vmatpush.xpose.msra.mxu0 0.0
    %658 = vmatpush.xpose.msra.mxu0 0.0
    %659 = vmatpush.xpose.msra.mxu0 0.0
    %660 = vmatpush.xpose.msra.mxu0 0.0
    %661 = vmatpush.xpose.msra.mxu0 0.0
    %662 = vmatpush.xpose.msra.mxu0 0.0
    %663 = vmatpush.xpose.msra.mxu0 %v646
    %664 = vmatmul.f32.gmra.mxu0 %v643
    %v665 = vpop.f32.mrf.mxu0
    %v666 = vadd.f32 0.0, %v665
    %667 = vdwg.mxu0
    %v668 = vmul.f32 %v588, 0.35355338
    %v669 = vmul.f32 %v614, 0.35355338
    %v670 = vmul.f32 %v640, 0.35355338
    %v671 = vmul.f32 %v666, 0.35355338
    %v672 = vsel %vm563, %v668, -inf
    %673 = vmax.xlane.f32.xlu0 %v672
    %v674 = vpop.xlane.xlu0 %673
    %v675 = vsel %vm563, %v669, -inf
    %676 = vmax.xlane.f32.xlu0 %v675
    %v677 = vpop.xlane.xlu0 %676
    %v678 = vsel %vm563, %v670, -inf
    %679 = vmax.xlane.f32.xlu0 %v678
    %v680 = vpop.xlane.xlu0 %679
    %v681 = vsel %vm563, %v671, -inf
    %682 = vmax.xlane.f32.xlu0 %v681
    %v683 = vpop.xlane.xlu0 %682
    %v684 = vsub.f32 %v668, %v674
    %v685 = vsub.f32 %v669, %v677
    %v686 = vsub.f32 %v670, %v680
    %v687 = vsub.f32 %v671, %v683
    %v688 = vmul.f32 %v684, 1.442695
    %v689 = vpow.pop %v688
    %v690 = vmul.f32 %v685, 1.442695
    %v691 = vpow.pop %v690
    %v692 = vmul.f32 %v686, 1.442695
    %v693 = vpow.pop %v692
    %v694 = vmul.f32 %v687, 1.442695
    %v695 = vpow.pop %v694
    %v696 = vsel %vm563, %v689, 0.0
    %697 = vadd.xlane.f32.xlu0 %v696
    %v698 = vpop.xlane.xlu0 %697
    %v699 = vsel %vm563, %v691, 0.0
    %700 = vadd.xlane.f32.xlu0 %v699
    %v701 = vpop.xlane.xlu0 %700
    %v702 = vsel %vm563, %v693, 0.0
    %703 = vadd.xlane.f32.xlu0 %v702
    %v704 = vpop.xlane.xlu0 %703
    %v705 = vsel %vm563, %v695, 0.0
    %706 = vadd.xlane.f32.xlu0 %v705
    %v707 = vpop.xlane.xlu0 %706
    %v708 = vrcp.pop %v698
    %v709 = vrcp.pop %v701
    %v710 = vrcp.pop %v704
    %v711 = vrcp.pop %v707
    %v712 = vmul.f32 %v689, %v708
    %v713 = vmul.f32 %v691, %v709
    %v714 = vmul.f32 %v693, %v710
    %v715 = vmul.f32 %v695, %v711
    %v717 = vsel %vm563, %v712, 0
    %719 = vmatpush.msra.mxu0 0.0
    %720 = vmatpush.msra.mxu0 0.0
    %721 = vmatpush.msra.mxu0 0.0
    %722 = vmatpush.msra.mxu0 0.0
    %723 = vmatpush.msra.mxu0 0.0
    %724 = vmatpush.msra.mxu0 0.0
    %725 = vmatpush.msra.mxu0 0.0
    %726 = vmatpush.msra.mxu0 0.0
    %727 = vmatpush.msra.mxu0 0.0
    %728 = vmatpush.msra.mxu0 0.0
    %729 = vmatpush.msra.mxu0 0.0
    %730 = vmatpush.msra.mxu0 0.0
    %731 = vmatpush.msra.mxu0 0.0
    %732 = vmatpush.msra.mxu0 0.0
    %733 = vmatpush.msra.mxu0 0.0
    %734 = vmatpush.msra.mxu0 %v501
    %735 = vmatmul.f32.gmra.mxu0 %v717
    %v736 = vpop.f32.mrf.mxu0
    %v737 = vadd.f32 0.0, %v736
    %738 = vdwg.mxu0
    %v740 = vsel %vm563, %v713, 0
    %742 = vmatpush.msra.mxu0 0.0
    %743 = vmatpush.msra.mxu0 0.0
    %744 = vmatpush.msra.mxu0 0.0
    %745 = vmatpush.msra.mxu0 0.0
    %746 = vmatpush.msra.mxu0 0.0
    %747 = vmatpush.msra.mxu0 0.0
    %748 = vmatpush.msra.mxu0 0.0
    %749 = vmatpush.msra.mxu0 0.0
    %750 = vmatpush.msra.mxu0 0.0
    %751 = vmatpush.msra.mxu0 0.0
    %752 = vmatpush.msra.mxu0 0.0
    %753 = vmatpush.msra.mxu0 0.0
    %754 = vmatpush.msra.mxu0 0.0
    %755 = vmatpush.msra.mxu0 0.0
    %756 = vmatpush.msra.mxu0 0.0
    %757 = vmatpush.msra.mxu0 %v521
    %758 = vmatmul.f32.gmra.mxu0 %v740
    %v759 = vpop.f32.mrf.mxu0
    %v760 = vadd.f32 0.0, %v759
    %761 = vdwg.mxu0
    %v763 = vsel %vm563, %v714, 0
    %765 = vmatpush.msra.mxu0 0.0
    %766 = vmatpush.msra.mxu0 0.0
    %767 = vmatpush.msra.mxu0 0.0
    %768 = vmatpush.msra.mxu0 0.0
    %769 = vmatpush.msra.mxu0 0.0
    %770 = vmatpush.msra.mxu0 0.0
    %771 = vmatpush.msra.mxu0 0.0
    %772 = vmatpush.msra.mxu0 0.0
    %773 = vmatpush.msra.mxu0 0.0
    %774 = vmatpush.msra.mxu0 0.0
    %775 = vmatpush.msra.mxu0 0.0
    %776 = vmatpush.msra.mxu0 0.0
    %777 = vmatpush.msra.mxu0 0.0
    %778 = vmatpush.msra.mxu0 0.0
    %779 = vmatpush.msra.mxu0 0.0
    %780 = vmatpush.msra.mxu0 %v541
    %781 = vmatmul.f32.gmra.mxu0 %v763
    %v782 = vpop.f32.mrf.mxu0
    %v783 = vadd.f32 0.0, %v782
    %784 = vdwg.mxu0
    %v786 = vsel %vm563, %v715, 0
    %788 = vmatpush.msra.mxu0 0.0
    %789 = vmatpush.msra.mxu0 0.0
    %790 = vmatpush.msra.mxu0 0.0
    %791 = vmatpush.msra.mxu0 0.0
    %792 = vmatpush.msra.mxu0 0.0
    %793 = vmatpush.msra.mxu0 0.0
    %794 = vmatpush.msra.mxu0 0.0
    %795 = vmatpush.msra.mxu0 0.0
    %796 = vmatpush.msra.mxu0 0.0
    %797 = vmatpush.msra.mxu0 0.0
    %798 = vmatpush.msra.mxu0 0.0
    %799 = vmatpush.msra.mxu0 0.0
    %800 = vmatpush.msra.mxu0 0.0
    %801 = vmatpush.msra.mxu0 0.0
    %802 = vmatpush.msra.mxu0 0.0
    %803 = vmatpush.msra.mxu0 %v561
    %804 = vmatmul.f32.gmra.mxu0 %v786
    %v805 = vpop.f32.mrf.mxu0
    %v806 = vadd.f32 0.0, %v805
    %807 = vdwg.mxu0
    %v808 = vld [vmem:[%s12] sm:$0xff]
    %v809 = vld [vmem:[%s12 + $0x8] sm:$0xff]
    %v810 = vld [vmem:[%s12 + $0x10] sm:$0xff]
    %v811 = vld [vmem:[%s12 + $0x18] sm:$0xff]
    %v813 = vsel %vm563, %v737, 0
    %815 = vmatpush.msra.mxu0 0.0
    %816 = vmatpush.msra.mxu0 0.0
    %817 = vmatpush.msra.mxu0 0.0
    %818 = vmatpush.msra.mxu0 0.0
    %819 = vmatpush.msra.mxu0 0.0
    %820 = vmatpush.msra.mxu0 0.0
    %821 = vmatpush.msra.mxu0 0.0
    %822 = vmatpush.msra.mxu0 0.0
    %823 = vmatpush.msra.mxu0 0.0
    %824 = vmatpush.msra.mxu0 0.0
    %825 = vmatpush.msra.mxu0 0.0
    %826 = vmatpush.msra.mxu0 0.0
    %827 = vmatpush.msra.mxu0 0.0
    %828 = vmatpush.msra.mxu0 0.0
    %829 = vmatpush.msra.mxu0 0.0
    %830 = vmatpush.msra.mxu0 %v808
    %831 = vmatmul.f32.gmra.mxu0 %v813
    %v832 = vpop.f32.mrf.mxu0
    %v833 = vadd.f32 0.0, %v832
    %834 = vdwg.mxu0
    %v836 = vsel %vm563, %v760, 0
    %838 = vmatpush.msra.mxu0 0.0
    %839 = vmatpush.msra.mxu0 0.0
    %840 = vmatpush.msra.mxu0 0.0
    %841 = vmatpush.msra.mxu0 0.0
    %842 = vmatpush.msra.mxu0 0.0
    %843 = vmatpush.msra.mxu0 0.0
    %844 = vmatpush.msra.mxu0 0.0
    %845 = vmatpush.msra.mxu0 0.0
    %846 = vmatpush.msra.mxu0 0.0
    %847 = vmatpush.msra.mxu0 0.0
    %848 = vmatpush.msra.mxu0 0.0
    %849 = vmatpush.msra.mxu0 0.0
    %850 = vmatpush.msra.mxu0 0.0
    %851 = vmatpush.msra.mxu0 0.0
    %852 = vmatpush.msra.mxu0 0.0
    %853 = vmatpush.msra.mxu0 %v809
    %854 = vmatmul.f32.gmra.mxu0 %v836
    %v855 = vpop.f32.mrf.mxu0
    %v856 = vadd.f32 0.0, %v855
    %857 = vdwg.mxu0
    %v859 = vsel %vm563, %v783, 0
    %861 = vmatpush.msra.mxu0 0.0
    %862 = vmatpush.msra.mxu0 0.0
    %863 = vmatpush.msra.mxu0 0.0
    %864 = vmatpush.msra.mxu0 0.0
    %865 = vmatpush.msra.mxu0 0.0
    %866 = vmatpush.msra.mxu0 0.0
    %867 = vmatpush.msra.mxu0 0.0
    %868 = vmatpush.msra.mxu0 0.0
    %869 = vmatpush.msra.mxu0 0.0
    %870 = vmatpush.msra.mxu0 0.0
    %871 = vmatpush.msra.mxu0 0.0
    %872 = vmatpush.msra.mxu0 0.0
    %873 = vmatpush.msra.mxu0 0.0
    %874 = vmatpush.msra.mxu0 0.0
    %875 = vmatpush.msra.mxu0 0.0
    %876 = vmatpush.msra.mxu0 %v810
    %877 = vmatmul.f32.gmra.mxu0 %v859
    %v878 = vpop.f32.mrf.mxu0
    %v879 = vadd.f32 0.0, %v878
    %880 = vdwg.mxu0
    %v882 = vsel %vm563, %v806, 0
    %884 = vmatpush.msra.mxu0 0.0
    %885 = vmatpush.msra.mxu0 0.0
    %886 = vmatpush.msra.mxu0 0.0
    %887 = vmatpush.msra.mxu0 0.0
    %888 = vmatpush.msra.mxu0 0.0
    %889 = vmatpush.msra.mxu0 0.0
    %890 = vmatpush.msra.mxu0 0.0
    %891 = vmatpush.msra.mxu0 0.0
    %892 = vmatpush.msra.mxu0 0.0
    %893 = vmatpush.msra.mxu0 0.0
    %894 = vmatpush.msra.mxu0 0.0
    %895 = vmatpush.msra.mxu0 0.0
    %896 = vmatpush.msra.mxu0 0.0
    %897 = vmatpush.msra.mxu0 0.0
    %898 = vmatpush.msra.mxu0 0.0
    %899 = vmatpush.msra.mxu0 %v811
    %900 = vmatmul.f32.gmra.mxu0 %v882
    %v901 = vpop.f32.mrf.mxu0
    %v902 = vadd.f32 0.0, %v901
    %903 = vdwg.mxu0
    %v904 = vadd.f32 %v833, %v856
    %v905 = vadd.f32 %v904, %v879
    %v906 = vadd.f32 %v905, %v902
    %v907 = vld [vmem:[%s13] sm:$0x1]
    %v909 = vperm.slane %v907, 0
    %v911 = vadd.f32 %v906, %v909
    %v912 = vadd.f32 %v223, %v911
    %v913 = vld [vmem:[%s14] sm:$0x1]
    %v914 = vld [vmem:[%s15] sm:$0x1]
    %v915 = vsel %vm186, %v912, 0.0
    %916 = vadd.xlane.f32.xlu0 %v915
    %v917 = vpop.xlane.xlu0 %916
    %v918 = vmul.f32 %v917, %v196
    %v919 = vsub.f32 %v912, %v918
    %v920 = vmul.f32 %v919, %v919
    %v921 = vsel %vm186, %v920, 0.0
    %922 = vadd.xlane.f32.xlu0 %v921
    %v923 = vpop.xlane.xlu0 %922
    %v924 = vmul.f32 %v923, %v196
    %v925 = vadd.f32 %v924, 1e-12
    %v926 = vrsqrt.pop %v925
    %v927 = vmul.f32 %v926, %v925
    %v928 = vmul.f32 %v927, %v926
    %v929 = vmul.f32 0.5, %v928
    %v930 = vsub.f32 1.5, %v929
    %v931 = vmul.f32 %v926, %v930
    %vm932 = vweird.f32 %v925
    %vm933 = vweird.f32 %v926
    %vm934 = vmor %vm932, %vm933
    %v935 = vsel %vm934, %v926, %v931
    %v936 = vmul.f32 %v919, %v935
    %v938 = vperm.slane %v913, 0
    %v940 = vmul.f32 %v936, %v938
    %v942 = vperm.slane %v914, 0
    %v944 = vadd.f32 %v940, %v942
    %v945 = vld [vmem:[%s16] sm:$0xff]
    %v946 = vld [vmem:[%s16 + $0x8] sm:$0xff]
    %v947 = vld [vmem:[%s16 + $0x10] sm:$0xff]
    %v948 = vld [vmem:[%s16 + $0x18] sm:$0xff]
    %v949 = vld [vmem:[%s17] sm:$0x1]
    %v951 = vperm.slane %v949, 0
    %v954 = vsel %vm186, %v944, 0
    %956 = vmatpush.msra.mxu0 0.0
    %957 = vmatpush.msra.mxu0 0.0
    %958 = vmatpush.msra.mxu0 0.0
    %959 = vmatpush.msra.mxu0 0.0
    %960 = vmatpush.msra.mxu0 0.0
    %961 = vmatpush.msra.mxu0 0.0
    %962 = vmatpush.msra.mxu0 0.0
    %963 = vmatpush.msra.mxu0 0.0
    %964 = vmatpush.msra.mxu0 0.0
    %965 = vmatpush.msra.mxu0 0.0
    %966 = vmatpush.msra.mxu0 0.0
    %967 = vmatpush.msra.mxu0 0.0
    %968 = vmatpush.msra.mxu0 %v948
    %969 = vmatpush.msra.mxu0 %v947
    %970 = vmatpush.msra.mxu0 %v946
    %971 = vmatpush.msra.mxu0 %v945
    %972 = vmatmul.f32.gmra.mxu0 %v954
    %v973 = vpop.f32.mrf.mxu0
    %v974 = vadd.f32 %v951, %v973
    %975 = vdwg.mxu0
    %v976 = vmul.f32 %v974, 0.5
    %v977 = vmul.f32 %v974, 0.044715
    %v978 = vmul.f32 %v977, %v974
    %v979 = vmul.f32 %v978, %v974
    %v980 = vadd.f32 %v974, %v979
    %v981 = vmul.f32 %v980, 0.7978846
    %v982 = vtanh.pop %v981
    %v983 = vadd.f32 %v982, 1.0
    %v984 = vmul.f32 %v976, %v983
    %v985 = vld [vmem:[%s18] sm:$0xff]
    %v986 = vld [vmem:[%s18 + $0x8] sm:$0xff]
    %v987 = vld [vmem:[%s18 + $0x10] sm:$0xff]
    %v988 = vld [vmem:[%s18 + $0x18] sm:$0xff]
    %v989 = vld [vmem:[%s18 + $0x20] sm:$0xff]
    %v990 = vld [vmem:[%s18 + $0x28] sm:$0xff]
    %v991 = vld [vmem:[%s18 + $0x30] sm:$0xff]
    %v992 = vld [vmem:[%s18 + $0x38] sm:$0xff]
    %v993 = vld [vmem:[%s18 + $0x40] sm:$0xff]
    %v994 = vld [vmem:[%s18 + $0x48] sm:$0xff]
    %v995 = vld [vmem:[%s18 + $0x50] sm:$0xff]
    %v996 = vld [vmem:[%s18 + $0x58] sm:$0xff]
    %v997 = vld [vmem:[%s18 + $0x60] sm:$0xff]
    %v998 = vld [vmem:[%s18 + $0x68] sm:$0xff]
    %v999 = vld [vmem:[%s18 + $0x70] sm:$0xff]
    %v1000 = vld [vmem:[%s18 + $0x78] sm:$0xff]
    %v1001 = vld [vmem:[%s19] sm:$0x1]
    %v1003 = vperm.slane %v1001, 0
    %1005 = vmatpush.msra.mxu0 %v1000
    %1006 = vmatpush.msra.mxu0 %v999
    %1007 = vmatpush.msra.mxu0 %v998
    %1008 = vmatpush.msra.mxu0 %v997
    %1009 = vmatpush.msra.mxu0 %v996
    %1010 = vmatpush.msra.mxu0 %v995
    %1011 = vmatpush.msra.mxu0 %v994
    %1012 = vmatpush.msra.mxu0 %v993
    %1013 = vmatpush.msra.mxu0 %v992
    %1014 = vmatpush.msra.mxu0 %v991
    %1015 = vmatpush.msra.mxu0 %v990
    %1016 = vmatpush.msra.mxu0 %v989
    %1017 = vmatpush.msra.mxu0 %v988
    %1018 = vmatpush.msra.mxu0 %v987
    %1019 = vmatpush.msra.mxu0 %v986
    %1020 = vmatpush.msra.mxu0 %v985
    %1021 = vmatmul.f32.gmra.mxu0 %v984
    %v1022 = vpop.f32.mrf.mxu0
    %v1023 = vadd.f32 %v1003, %v1022
    %1024 = vdwg.mxu0
    %v1025 = vadd.f32 %v944, %v1023
    %v1026 = vld [vmem:[%s20] sm:$0x1]
    %v1027 = vld [vmem:[%s21] sm:$0x1]
    %v1028 = vsel %vm186, %v1025, 0.0
    %1029 = vadd.xlane.f32.xlu0 %v1028
    %v1030 = vpop.xlane.xlu0 %1029
    %v1031 = vmul.f32 %v1030, %v196
    %v1032 = vsub.f32 %v1025, %v1031
    %v1033 = vmul.f32 %v1032, %v1032
    %v1034 = vsel %vm186, %v1033, 0.0
    %1035 = vadd.xlane.f32.xlu0 %v1034
    %v1036 = vpop.xlane.xlu0 %1035
    %v1037 = vmul.f32 %v1036, %v196
    %v1038 = vadd.f32 %v1037, 1e-12
    %v1039 = vrsqrt.pop %v1038
    %v1040 = vmul.f32 %v1039, %v1038
    %v1041 = vmul.f32 %v1040, %v1039
    %v1042 = vmul.f32 0.5, %v1041
    %v1043 = vsub.f32 1.5, %v1042
    %v1044 = vmul.f32 %v1039, %v1043
    %vm1045 = vweird.f32 %v1038
    %vm1046 = vweird.f32 %v1039
    %vm1047 = vmor %vm1045, %vm1046
    %v1048 = vsel %vm1047, %v1039, %v1044
    %v1049 = vmul.f32 %v1032, %v1048
    %v1051 = vperm.slane %v1026, 0
    %v1053 = vmul.f32 %v1049, %v1051
    %v1055 = vperm.slane %v1027, 0
    %v1057 = vadd.f32 %v1053, %v1055
    %s1058 = scalar_lea.vmem %s6, 128
    %v1059 = vld [vmem:[%s1058] sm:$0xff]
    %v1060 = vld [vmem:[%s1058 + $0x8] sm:$0xff]
    %v1061 = vld [vmem:[%s1058 + $0x10] sm:$0xff]
    %v1062 = vld [vmem:[%s1058 + $0x18] sm:$0xff]
    %v1063 = vld [vmem:[%s1058 + $0x20] sm:$0xff]
    %v1064 = vld [vmem:[%s1058 + $0x28] sm:$0xff]
    %v1065 = vld [vmem:[%s1058 + $0x30] sm:$0xff]
    %v1066 = vld [vmem:[%s1058 + $0x38] sm:$0xff]
    %v1067 = vld [vmem:[%s1058 + $0x40] sm:$0xff]
    %v1068 = vld [vmem:[%s1058 + $0x48] sm:$0xff]
    %v1069 = vld [vmem:[%s1058 + $0x50] sm:$0xff]
    %v1070 = vld [vmem:[%s1058 + $0x58] sm:$0xff]
    %v1071 = vld [vmem:[%s1058 + $0x60] sm:$0xff]
    %v1072 = vld [vmem:[%s1058 + $0x68] sm:$0xff]
    %v1073 = vld [vmem:[%s1058 + $0x70] sm:$0xff]
    %v1074 = vld [vmem:[%s1058 + $0x78] sm:$0xff]
    %s1075 = scalar_lea.vmem %s7, 4
    %v1076 = vld [vmem:[%s1075] sm:$0x1]
    %v1077 = vld [vmem:[%s1075 + $0x1] sm:$0x1]
    %v1078 = vld [vmem:[%s1075 + $0x2] sm:$0x1]
    %v1079 = vld [vmem:[%s1075 + $0x3] sm:$0x1]
    %v1084 = vperm.slane %v1076, 0
    %v1085 = vperm.slane %v1077, 0
    %v1086 = vperm.slane %v1078, 0
    %v1087 = vperm.slane %v1079, 0
    %v1093 = vsel %vm186, %v1057, 0
    %1095 = vmatpush.msra.mxu0 0.0
    %1096 = vmatpush.msra.mxu0 0.0
    %1097 = vmatpush.msra.mxu0 0.0
    %1098 = vmatpush.msra.mxu0 0.0
    %1099 = vmatpush.msra.mxu0 0.0
    %1100 = vmatpush.msra.mxu0 0.0
    %1101 = vmatpush.msra.mxu0 0.0
    %1102 = vmatpush.msra.mxu0 0.0
    %1103 = vmatpush.msra.mxu0 0.0
    %1104 = vmatpush.msra.mxu0 0.0
    %1105 = vmatpush.msra.mxu0 0.0
    %1106 = vmatpush.msra.mxu0 0.0
    %1107 = vmatpush.msra.mxu0 %v1062
    %1108 = vmatpush.msra.mxu0 %v1061
    %1109 = vmatpush.msra.mxu0 %v1060
    %1110 = vmatpush.msra.mxu0 %v1059
    %1111 = vmatmul.f32.gmra.mxu0 %v1093
    %v1112 = vpop.f32.mrf.mxu0
    %v1113 = vadd.f32 %v1084, %v1112
    %1114 = vdwg.mxu0
    %1115 = vmatpush.msra.mxu0 0.0
    %1116 = vmatpush.msra.mxu0 0.0
    %1117 = vmatpush.msra.mxu0 0.0
    %1118 = vmatpush.msra.mxu0 0.0
    %1119 = vmatpush.msra.mxu0 0.0
    %1120 = vmatpush.msra.mxu0 0.0
    %1121 = vmatpush.msra.mxu0 0.0
    %1122 = vmatpush.msra.mxu0 0.0
    %1123 = vmatpush.msra.mxu0 0.0
    %1124 = vmatpush.msra.mxu0 0.0
    %1125 = vmatpush.msra.mxu0 0.0
    %1126 = vmatpush.msra.mxu0 0.0
    %1127 = vmatpush.msra.mxu0 %v1066
    %1128 = vmatpush.msra.mxu0 %v1065
    %1129 = vmatpush.msra.mxu0 %v1064
    %1130 = vmatpush.msra.mxu0 %v1063
    %1131 = vmatmul.f32.gmra.mxu0 %v1093
    %v1132 = vpop.f32.mrf.mxu0
    %v1133 = vadd.f32 %v1085, %v1132
    %1134 = vdwg.mxu0
    %1135 = vmatpush.msra.mxu0 0.0
    %1136 = vmatpush.msra.mxu0 0.0
    %1137 = vmatpush.msra.mxu0 0.0
    %1138 = vmatpush.msra.mxu0 0.0
    %1139 = vmatpush.msra.mxu0 0.0
    %1140 = vmatpush.msra.mxu0 0.0
    %1141 = vmatpush.msra.mxu0 0.0
    %1142 = vmatpush.msra.mxu0 0.0
    %1143 = vmatpush.msra.mxu0 0.0
    %1144 = vmatpush.msra.mxu0 0.0
    %1145 = vmatpush.msra.mxu0 0.0
    %1146 = vmatpush.msra.mxu0 0.0
    %1147 = vmatpush.msra.mxu0 %v1070
    %1148 = vmatpush.msra.mxu0 %v1069
    %1149 = vmatpush.msra.mxu0 %v1068
    %1150 = vmatpush.msra.mxu0 %v1067
    %1151 = vmatmul.f32.gmra.mxu0 %v1093
    %v1152 = vpop.f32.mrf.mxu0
    %v1153 = vadd.f32 %v1086, %v1152
    %1154 = vdwg.mxu0
    %1155 = vmatpush.msra.mxu0 0.0
    %1156 = vmatpush.msra.mxu0 0.0
    %1157 = vmatpush.msra.mxu0 0.0
    %1158 = vmatpush.msra.mxu0 0.0
    %1159 = vmatpush.msra.mxu0 0.0
    %1160 = vmatpush.msra.mxu0 0.0
    %1161 = vmatpush.msra.mxu0 0.0
    %1162 = vmatpush.msra.mxu0 0.0
    %1163 = vmatpush.msra.mxu0 0.0
    %1164 = vmatpush.msra.mxu0 0.0
    %1165 = vmatpush.msra.mxu0 0.0
    %1166 = vmatpush.msra.mxu0 0.0
    %1167 = vmatpush.msra.mxu0 %v1074
    %1168 = vmatpush.msra.mxu0 %v1073
    %1169 = vmatpush.msra.mxu0 %v1072
    %1170 = vmatpush.msra.mxu0 %v1071
    %1171 = vmatmul.f32.gmra.mxu0 %v1093
    %v1172 = vpop.f32.mrf.mxu0
    %v1173 = vadd.f32 %v1087, %v1172
    %1174 = vdwg.mxu0
    %s1175 = scalar_lea.vmem %s8, 128
    %v1176 = vld [vmem:[%s1175] sm:$0xff]
    %v1177 = vld [vmem:[%s1175 + $0x8] sm:$0xff]
    %v1178 = vld [vmem:[%s1175 + $0x10] sm:$0xff]
    %v1179 = vld [vmem:[%s1175 + $0x18] sm:$0xff]
    %v1180 = vld [vmem:[%s1175 + $0x20] sm:$0xff]
    %v1181 = vld [vmem:[%s1175 + $0x28] sm:$0xff]
    %v1182 = vld [vmem:[%s1175 + $0x30] sm:$0xff]
    %v1183 = vld [vmem:[%s1175 + $0x38] sm:$0xff]
    %v1184 = vld [vmem:[%s1175 + $0x40] sm:$0xff]
    %v1185 = vld [vmem:[%s1175 + $0x48] sm:$0xff]
    %v1186 = vld [vmem:[%s1175 + $0x50] sm:$0xff]
    %v1187 = vld [vmem:[%s1175 + $0x58] sm:$0xff]
    %v1188 = vld [vmem:[%s1175 + $0x60] sm:$0xff]
    %v1189 = vld [vmem:[%s1175 + $0x68] sm:$0xff]
    %v1190 = vld [vmem:[%s1175 + $0x70] sm:$0xff]
    %v1191 = vld [vmem:[%s1175 + $0x78] sm:$0xff]
    %s1192 = scalar_lea.vmem %s9, 4
    %v1193 = vld [vmem:[%s1192] sm:$0x1]
    %v1194 = vld [vmem:[%s1192 + $0x1] sm:$0x1]
    %v1195 = vld [vmem:[%s1192 + $0x2] sm:$0x1]
    %v1196 = vld [vmem:[%s1192 + $0x3] sm:$0x1]
    %v1201 = vperm.slane %v1193, 0
    %v1202 = vperm.slane %v1194, 0
    %v1203 = vperm.slane %v1195, 0
    %v1204 = vperm.slane %v1196, 0
    %1209 = vmatpush.msra.mxu0 0.0
    %1210 = vmatpush.msra.mxu0 0.0
    %1211 = vmatpush.msra.mxu0 0.0
    %1212 = vmatpush.msra.mxu0 0.0
    %1213 = vmatpush.msra.mxu0 0.0
    %1214 = vmatpush.msra.mxu0 0.0
    %1215 = vmatpush.msra.mxu0 0.0
    %1216 = vmatpush.msra.mxu0 0.0
    %1217 = vmatpush.msra.mxu0 0.0
    %1218 = vmatpush.msra.mxu0 0.0
    %1219 = vmatpush.msra.mxu0 0.0
    %1220 = vmatpush.msra.mxu0 0.0
    %1221 = vmatpush.msra.mxu0 %v1179
    %1222 = vmatpush.msra.mxu0 %v1178
    %1223 = vmatpush.msra.mxu0 %v1177
    %1224 = vmatpush.msra.mxu0 %v1176
    %1225 = vmatmul.f32.gmra.mxu0 %v1093
    %v1226 = vpop.f32.mrf.mxu0
    %v1227 = vadd.f32 %v1201, %v1226
    %1228 = vdwg.mxu0
    %1229 = vmatpush.msra.mxu0 0.0
    %1230 = vmatpush.msra.mxu0 0.0
    %1231 = vmatpush.msra.mxu0 0.0
    %1232 = vmatpush.msra.mxu0 0.0
    %1233 = vmatpush.msra.mxu0 0.0
    %1234 = vmatpush.msra.mxu0 0.0
    %1235 = vmatpush.msra.mxu0 0.0
    %1236 = vmatpush.msra.mxu0 0.0
    %1237 = vmatpush.msra.mxu0 0.0
    %1238 = vmatpush.msra.mxu0 0.0
    %1239 = vmatpush.msra.mxu0 0.0
    %1240 = vmatpush.msra.mxu0 0.0
    %1241 = vmatpush.msra.mxu0 %v1183
    %1242 = vmatpush.msra.mxu0 %v1182
    %1243 = vmatpush.msra.mxu0 %v1181
    %1244 = vmatpush.msra.mxu0 %v1180
    %1245 = vmatmul.f32.gmra.mxu0 %v1093
    %v1246 = vpop.f32.mrf.mxu0
    %v1247 = vadd.f32 %v1202, %v1246
    %1248 = vdwg.mxu0
    %1249 = vmatpush.msra.mxu0 0.0
    %1250 = vmatpush.msra.mxu0 0.0
    %1251 = vmatpush.msra.mxu0 0.0
    %1252 = vmatpush.msra.mxu0 0.0
    %1253 = vmatpush.msra.mxu0 0.0
    %1254 = vmatpush.msra.mxu0 0.0
    %1255 = vmatpush.msra.mxu0 0.0
    %1256 = vmatpush.msra.mxu0 0.0
    %1257 = vmatpush.msra.mxu0 0.0
    %1258 = vmatpush.msra.mxu0 0.0
    %1259 = vmatpush.msra.mxu0 0.0
    %1260 = vmatpush.msra.mxu0 0.0
    %1261 = vmatpush.msra.mxu0 %v1187
    %1262 = vmatpush.msra.mxu0 %v1186
    %1263 = vmatpush.msra.mxu0 %v1185
    %1264 = vmatpush.msra.mxu0 %v1184
    %1265 = vmatmul.f32.gmra.mxu0 %v1093
    %v1266 = vpop.f32.mrf.mxu0
    %v1267 = vadd.f32 %v1203, %v1266
    %1268 = vdwg.mxu0
    %1269 = vmatpush.msra.mxu0 0.0
    %1270 = vmatpush.msra.mxu0 0.0
    %1271 = vmatpush.msra.mxu0 0.0
    %1272 = vmatpush.msra.mxu0 0.0
    %1273 = vmatpush.msra.mxu0 0.0
    %1274 = vmatpush.msra.mxu0 0.0
    %1275 = vmatpush.msra.mxu0 0.0
    %1276 = vmatpush.msra.mxu0 0.0
    %1277 = vmatpush.msra.mxu0 0.0
    %1278 = vmatpush.msra.mxu0 0.0
    %1279 = vmatpush.msra.mxu0 0.0
    %1280 = vmatpush.msra.mxu0 0.0
    %1281 = vmatpush.msra.mxu0 %v1191
    %1282 = vmatpush.msra.mxu0 %v1190
    %1283 = vmatpush.msra.mxu0 %v1189
    %1284 = vmatpush.msra.mxu0 %v1188
    %1285 = vmatmul.f32.gmra.mxu0 %v1093
    %v1286 = vpop.f32.mrf.mxu0
    %v1287 = vadd.f32 %v1204, %v1286
    %1288 = vdwg.mxu0
    %s1289 = scalar_lea.vmem %s10, 128
    %v1290 = vld [vmem:[%s1289] sm:$0xff]
    %v1291 = vld [vmem:[%s1289 + $0x8] sm:$0xff]
    %v1292 = vld [vmem:[%s1289 + $0x10] sm:$0xff]
    %v1293 = vld [vmem:[%s1289 + $0x18] sm:$0xff]
    %v1294 = vld [vmem:[%s1289 + $0x20] sm:$0xff]
    %v1295 = vld [vmem:[%s1289 + $0x28] sm:$0xff]
    %v1296 = vld [vmem:[%s1289 + $0x30] sm:$0xff]
    %v1297 = vld [vmem:[%s1289 + $0x38] sm:$0xff]
    %v1298 = vld [vmem:[%s1289 + $0x40] sm:$0xff]
    %v1299 = vld [vmem:[%s1289 + $0x48] sm:$0xff]
    %v1300 = vld [vmem:[%s1289 + $0x50] sm:$0xff]
    %v1301 = vld [vmem:[%s1289 + $0x58] sm:$0xff]
    %v1302 = vld [vmem:[%s1289 + $0x60] sm:$0xff]
    %v1303 = vld [vmem:[%s1289 + $0x68] sm:$0xff]
    %v1304 = vld [vmem:[%s1289 + $0x70] sm:$0xff]
    %v1305 = vld [vmem:[%s1289 + $0x78] sm:$0xff]
    %s1306 = scalar_lea.vmem %s11, 4
    %v1307 = vld [vmem:[%s1306] sm:$0x1]
    %v1308 = vld [vmem:[%s1306 + $0x1] sm:$0x1]
    %v1309 = vld [vmem:[%s1306 + $0x2] sm:$0x1]
    %v1310 = vld [vmem:[%s1306 + $0x3] sm:$0x1]
    %v1315 = vperm.slane %v1307, 0
    %v1316 = vperm.slane %v1308, 0
    %v1317 = vperm.slane %v1309, 0
    %v1318 = vperm.slane %v1310, 0
    %1323 = vmatpush.msra.mxu0 0.0
    %1324 = vmatpush.msra.mxu0 0.0
    %1325 = vmatpush.msra.mxu0 0.0
    %1326 = vmatpush.msra.mxu0 0.0
    %1327 = vmatpush.msra.mxu0 0.0
    %1328 = vmatpush.msra.mxu0 0.0
    %1329 = vmatpush.msra.mxu0 0.0
    %1330 = vmatpush.msra.mxu0 0.0
    %1331 = vmatpush.msra.mxu0 0.0
    %1332 = vmatpush.msra.mxu0 0.0
    %1333 = vmatpush.msra.mxu0 0.0
    %1334 = vmatpush.msra.mxu0 0.0
    %1335 = vmatpush.msra.mxu0 %v1293
    %1336 = vmatpush.msra.mxu0 %v1292
    %1337 = vmatpush.msra.mxu0 %v1291
    %1338 = vmatpush.msra.mxu0 %v1290
    %1339 = vmatmul.f32.gmra.mxu0 %v1093
    %v1340 = vpop.f32.mrf.mxu0
    %v1341 = vadd.f32 %v1315, %v1340
    %1342 = vdwg.mxu0
    %1343 = vmatpush.msra.mxu0 0.0
    %1344 = vmatpush.msra.mxu0 0.0
    %1345 = vmatpush.msra.mxu0 0.0
    %1346 = vmatpush.msra.mxu0 0.0
    %1347 = vmatpush.msra.mxu0 0.0
    %1348 = vmatpush.msra.mxu0 0.0
    %1349 = vmatpush.msra.mxu0 0.0
    %1350 = vmatpush.msra.mxu0 0.0
    %1351 = vmatpush.msra.mxu0 0.0
    %1352 = vmatpush.msra.mxu0 0.0
    %1353 = vmatpush.msra.mxu0 0.0
    %1354 = vmatpush.msra.mxu0 0.0
    %1355 = vmatpush.msra.mxu0 %v1297
    %1356 = vmatpush.msra.mxu0 %v1296
    %1357 = vmatpush.msra.mxu0 %v1295
    %1358 = vmatpush.msra.mxu0 %v1294
    %1359 = vmatmul.f32.gmra.mxu0 %v1093
    %v1360 = vpop.f32.mrf.mxu0
    %v1361 = vadd.f32 %v1316, %v1360
    %1362 = vdwg.mxu0
    %1363 = vmatpush.msra.mxu0 0.0
    %1364 = vmatpush.msra.mxu0 0.0
    %1365 = vmatpush.msra.mxu0 0.0
    %1366 = vmatpush.msra.mxu0 0.0
    %1367 = vmatpush.msra.mxu0 0.0
    %1368 = vmatpush.msra.mxu0 0.0
    %1369 = vmatpush.msra.mxu0 0.0
    %1370 = vmatpush.msra.mxu0 0.0
    %1371 = vmatpush.msra.mxu0 0.0
    %1372 = vmatpush.msra.mxu0 0.0
    %1373 = vmatpush.msra.mxu0 0.0
    %1374 = vmatpush.msra.mxu0 0.0
    %1375 = vmatpush.msra.mxu0 %v1301
    %1376 = vmatpush.msra.mxu0 %v1300
    %1377 = vmatpush.msra.mxu0 %v1299
    %1378 = vmatpush.msra.mxu0 %v1298
    %1379 = vmatmul.f32.gmra.mxu0 %v1093
    %v1380 = vpop.f32.mrf.mxu0
    %v1381 = vadd.f32 %v1317, %v1380
    %1382 = vdwg.mxu0
    %1383 = vmatpush.msra.mxu0 0.0
    %1384 = vmatpush.msra.mxu0 0.0
    %1385 = vmatpush.msra.mxu0 0.0
    %1386 = vmatpush.msra.mxu0 0.0
    %1387 = vmatpush.msra.mxu0 0.0
    %1388 = vmatpush.msra.mxu0 0.0
    %1389 = vmatpush.msra.mxu0 0.0
    %1390 = vmatpush.msra.mxu0 0.0
    %1391 = vmatpush.msra.mxu0 0.0
    %1392 = vmatpush.msra.mxu0 0.0
    %1393 = vmatpush.msra.mxu0 0.0
    %1394 = vmatpush.msra.mxu0 0.0
    %1395 = vmatpush.msra.mxu0 %v1305
    %1396 = vmatpush.msra.mxu0 %v1304
    %1397 = vmatpush.msra.mxu0 %v1303
    %1398 = vmatpush.msra.mxu0 %v1302
    %1399 = vmatmul.f32.gmra.mxu0 %v1093
    %v1400 = vpop.f32.mrf.mxu0
    %v1401 = vadd.f32 %v1318, %v1400
    %1402 = vdwg.mxu0
    %v1404 = vsel %vm563, %v1113, 0
    %v1407 = vsel %vm563, %v1227, 0
    %1409 = vmatpush.xpose.msra.mxu0 0.0
    %1410 = vmatpush.xpose.msra.mxu0 0.0
    %1411 = vmatpush.xpose.msra.mxu0 0.0
    %1412 = vmatpush.xpose.msra.mxu0 0.0
    %1413 = vmatpush.xpose.msra.mxu0 0.0
    %1414 = vmatpush.xpose.msra.mxu0 0.0
    %1415 = vmatpush.xpose.msra.mxu0 0.0
    %1416 = vmatpush.xpose.msra.mxu0 0.0
    %1417 = vmatpush.xpose.msra.mxu0 0.0
    %1418 = vmatpush.xpose.msra.mxu0 0.0
    %1419 = vmatpush.xpose.msra.mxu0 0.0
    %1420 = vmatpush.xpose.msra.mxu0 0.0
    %1421 = vmatpush.xpose.msra.mxu0 0.0
    %1422 = vmatpush.xpose.msra.mxu0 0.0
    %1423 = vmatpush.xpose.msra.mxu0 0.0
    %1424 = vmatpush.xpose.msra.mxu0 %v1407
    %1425 = vmatmul.f32.gmra.mxu0 %v1404
    %v1426 = vpop.f32.mrf.mxu0
    %v1427 = vadd.f32 0.0, %v1426
    %1428 = vdwg.mxu0
    %v1430 = vsel %vm563, %v1133, 0
    %v1433 = vsel %vm563, %v1247, 0
    %1435 = vmatpush.xpose.msra.mxu0 0.0
    %1436 = vmatpush.xpose.msra.mxu0 0.0
    %1437 = vmatpush.xpose.msra.mxu0 0.0
    %1438 = vmatpush.xpose.msra.mxu0 0.0
    %1439 = vmatpush.xpose.msra.mxu0 0.0
    %1440 = vmatpush.xpose.msra.mxu0 0.0
    %1441 = vmatpush.xpose.msra.mxu0 0.0
    %1442 = vmatpush.xpose.msra.mxu0 0.0
    %1443 = vmatpush.xpose.msra.mxu0 0.0
    %1444 = vmatpush.xpose.msra.mxu0 0.0
    %1445 = vmatpush.xpose.msra.mxu0 0.0
    %1446 = vmatpush.xpose.msra.mxu0 0.0
    %1447 = vmatpush.xpose.msra.mxu0 0.0
    %1448 = vmatpush.xpose.msra.mxu0 0.0
    %1449 = vmatpush.xpose.msra.mxu0 0.0
    %1450 = vmatpush.xpose.msra.mxu0 %v1433
    %1451 = vmatmul.f32.gmra.mxu0 %v1430
    %v1452 = vpop.f32.mrf.mxu0
    %v1453 = vadd.f32 0.0, %v1452
    %1454 = vdwg.mxu0
    %v1456 = vsel %vm563, %v1153, 0
    %v1459 = vsel %vm563, %v1267, 0
    %1461 = vmatpush.xpose.msra.mxu0 0.0
    %1462 = vmatpush.xpose.msra.mxu0 0.0
    %1463 = vmatpush.xpose.msra.mxu0 0.0
    %1464 = vmatpush.xpose.msra.mxu0 0.0
    %1465 = vmatpush.xpose.msra.mxu0 0.0
    %1466 = vmatpush.xpose.msra.mxu0 0.0
    %1467 = vmatpush.xpose.msra.mxu0 0.0
    %1468 = vmatpush.xpose.msra.mxu0 0.0
    %1469 = vmatpush.xpose.msra.mxu0 0.0
    %1470 = vmatpush.xpose.msra.mxu0 0.0
    %1471 = vmatpush.xpose.msra.mxu0 0.0
    %1472 = vmatpush.xpose.msra.mxu0 0.0
    %1473 = vmatpush.xpose.msra.mxu0 0.0
    %1474 = vmatpush.xpose.msra.mxu0 0.0
    %1475 = vmatpush.xpose.msra.mxu0 0.0
    %1476 = vmatpush.xpose.msra.mxu0 %v1459
    %1477 = vmatmul.f32.gmra.mxu0 %v1456
    %v1478 = vpop.f32.mrf.mxu0
    %v1479 = vadd.f32 0.0, %v1478
    %1480 = vdwg.mxu0
    %v1482 = vsel %vm563, %v1173, 0
    %v1485 = vsel %vm563, %v1287, 0
    %1487 = vmatpush.xpose.msra.mxu0 0.0
    %1488 = vmatpush.xpose.msra.mxu0 0.0
    %1489 = vmatpush.xpose.msra.mxu0 0.0
    %1490 = vmatpush.xpose.msra.mxu0 0.0
    %1491 = vmatpush.xpose.msra.mxu0 0.0
    %1492 = vmatpush.xpose.msra.mxu0 0.0
    %1493 = vmatpush.xpose.msra.mxu0 0.0
    %1494 = vmatpush.xpose.msra.mxu0 0.0
    %1495 = vmatpush.xpose.msra.mxu0 0.0
    %1496 = vmatpush.xpose.msra.mxu0 0.0
    %1497 = vmatpush.xpose.msra.mxu0 0.0
    %1498 = vmatpush.xpose.msra.mxu0 0.0
    %1499 = vmatpush.xpose.msra.mxu0 0.0
    %1500 = vmatpush.xpose.msra.mxu0 0.0
    %1501 = vmatpush.xpose.msra.mxu0 0.0
    %1502 = vmatpush.xpose.msra.mxu0 %v1485
    %1503 = vmatmul.f32.gmra.mxu0 %v1482
    %v1504 = vpop.f32.mrf.mxu0
    %v1505 = vadd.f32 0.0, %v1504
    %1506 = vdwg.mxu0
    %v1507 = vmul.f32 %v1427, 0.35355338
    %v1508 = vmul.f32 %v1453, 0.35355338
    %v1509 = vmul.f32 %v1479, 0.35355338
    %v1510 = vmul.f32 %v1505, 0.35355338
    %v1511 = vsel %vm563, %v1507, -inf
    %1512 = vmax.xlane.f32.xlu0 %v1511
    %v1513 = vpop.xlane.xlu0 %1512
    %v1514 = vsel %vm563, %v1508, -inf
    %1515 = vmax.xlane.f32.xlu0 %v1514
    %v1516 = vpop.xlane.xlu0 %1515
    %v1517 = vsel %vm563, %v1509, -inf
    %1518 = vmax.xlane.f32.xlu0 %v1517
    %v1519 = vpop.xlane.xlu0 %1518
    %v1520 = vsel %vm563, %v1510, -inf
    %1521 = vmax.xlane.f32.xlu0 %v1520
    %v1522 = vpop.xlane.xlu0 %1521
    %v1523 = vsub.f32 %v1507, %v1513
    %v1524 = vsub.f32 %v1508, %v1516
    %v1525 = vsub.f32 %v1509, %v1519
    %v1526 = vsub.f32 %v1510, %v1522
    %v1527 = vmul.f32 %v1523, 1.442695
    %v1528 = vpow.pop %v1527
    %v1529 = vmul.f32 %v1524, 1.442695
    %v1530 = vpow.pop %v1529
    %v1531 = vmul.f32 %v1525, 1.442695
    %v1532 = vpow.pop %v1531
    %v1533 = vmul.f32 %v1526, 1.442695
    %v1534 = vpow.pop %v1533
    %v1535 = vsel %vm563, %v1528, 0.0
    %1536 = vadd.xlane.f32.xlu0 %v1535
    %v1537 = vpop.xlane.xlu0 %1536
    %v1538 = vsel %vm563, %v1530, 0.0
    %1539 = vadd.xlane.f32.xlu0 %v1538
    %v1540 = vpop.xlane.xlu0 %1539
    %v1541 = vsel %vm563, %v1532, 0.0
    %1542 = vadd.xlane.f32.xlu0 %v1541
    %v1543 = vpop.xlane.xlu0 %1542
    %v1544 = vsel %vm563, %v1534, 0.0
    %1545 = vadd.xlane.f32.xlu0 %v1544
    %v1546 = vpop.xlane.xlu0 %1545
    %v1547 = vrcp.pop %v1537
    %v1548 = vrcp.pop %v1540
    %v1549 = vrcp.pop %v1543
    %v1550 = vrcp.pop %v1546
    %v1551 = vmul.f32 %v1528, %v1547
    %v1552 = vmul.f32 %v1530, %v1548
    %v1553 = vmul.f32 %v1532, %v1549
    %v1554 = vmul.f32 %v1534, %v1550
    %v1556 = vsel %vm563, %v1551, 0
    %1558 = vmatpush.msra.mxu0 0.0
    %1559 = vmatpush.msra.mxu0 0.0
    %1560 = vmatpush.msra.mxu0 0.0
    %1561 = vmatpush.msra.mxu0 0.0
    %1562 = vmatpush.msra.mxu0 0.0
    %1563 = vmatpush.msra.mxu0 0.0
    %1564 = vmatpush.msra.mxu0 0.0
    %1565 = vmatpush.msra.mxu0 0.0
    %1566 = vmatpush.msra.mxu0 0.0
    %1567 = vmatpush.msra.mxu0 0.0
    %1568 = vmatpush.msra.mxu0 0.0
    %1569 = vmatpush.msra.mxu0 0.0
    %1570 = vmatpush.msra.mxu0 0.0
    %1571 = vmatpush.msra.mxu0 0.0
    %1572 = vmatpush.msra.mxu0 0.0
    %1573 = vmatpush.msra.mxu0 %v1341
    %1574 = vmatmul.f32.gmra.mxu0 %v1556
    %v1575 = vpop.f32.mrf.mxu0
    %v1576 = vadd.f32 0.0, %v1575
    %1577 = vdwg.mxu0
    %v1579 = vsel %vm563, %v1552, 0
    %1581 = vmatpush.msra.mxu0 0.0
    %1582 = vmatpush.msra.mxu0 0.0
    %1583 = vmatpush.msra.mxu0 0.0
    %1584 = vmatpush.msra.mxu0 0.0
    %1585 = vmatpush.msra.mxu0 0.0
    %1586 = vmatpush.msra.mxu0 0.0
    %1587 = vmatpush.msra.mxu0 0.0
    %1588 = vmatpush.msra.mxu0 0.0
    %1589 = vmatpush.msra.mxu0 0.0
    %1590 = vmatpush.msra.mxu0 0.0
    %1591 = vmatpush.msra.mxu0 0.0
    %1592 = vmatpush.msra.mxu0 0.0
    %1593 = vmatpush.msra.mxu0 0.0
    %1594 = vmatpush.msra.mxu0 0.0
    %1595 = vmatpush.msra.mxu0 0.0
    %1596 = vmatpush.msra.mxu0 %v1361
    %1597 = vmatmul.f32.gmra.mxu0 %v1579
    %v1598 = vpop.f32.mrf.mxu0
    %v1599 = vadd.f32 0.0, %v1598
    %1600 = vdwg.mxu0
    %v1602 = vsel %vm563, %v1553, 0
    %1604 = vmatpush.msra.mxu0 0.0
    %1605 = vmatpush.msra.mxu0 0.0
    %1606 = vmatpush.msra.mxu0 0.0
    %1607 = vmatpush.msra.mxu0 0.0
    %1608 = vmatpush.msra.mxu0 0.0
    %1609 = vmatpush.msra.mxu0 0.0
    %1610 = vmatpush.msra.mxu0 0.0
    %1611 = vmatpush.msra.mxu0 0.0
    %1612 = vmatpush.msra.mxu0 0.0
    %1613 = vmatpush.msra.mxu0 0.0
    %1614 = vmatpush.msra.mxu0 0.0
    %1615 = vmatpush.msra.mxu0 0.0
    %1616 = vmatpush.msra.mxu0 0.0
    %1617 = vmatpush.msra.mxu0 0.0
    %1618 = vmatpush.msra.mxu0 0.0
    %1619 = vmatpush.msra.mxu0 %v1381
    %1620 = vmatmul.f32.gmra.mxu0 %v1602
    %v1621 = vpop.f32.mrf.mxu0
    %v1622 = vadd.f32 0.0, %v1621
    %1623 = vdwg.mxu0
    %v1625 = vsel %vm563, %v1554, 0
    %1627 = vmatpush.msra.mxu0 0.0
    %1628 = vmatpush.msra.mxu0 0.0
    %1629 = vmatpush.msra.mxu0 0.0
    %1630 = vmatpush.msra.mxu0 0.0
    %1631 = vmatpush.msra.mxu0 0.0
    %1632 = vmatpush.msra.mxu0 0.0
    %1633 = vmatpush.msra.mxu0 0.0
    %1634 = vmatpush.msra.mxu0 0.0
    %1635 = vmatpush.msra.mxu0 0.0
    %1636 = vmatpush.msra.mxu0 0.0
    %1637 = vmatpush.msra.mxu0 0.0
    %1638 = vmatpush.msra.mxu0 0.0
    %1639 = vmatpush.msra.mxu0 0.0
    %1640 = vmatpush.msra.mxu0 0.0
    %1641 = vmatpush.msra.mxu0 0.0
    %1642 = vmatpush.msra.mxu0 %v1401
    %1643 = vmatmul.f32.gmra.mxu0 %v1625
    %v1644 = vpop.f32.mrf.mxu0
    %v1645 = vadd.f32 0.0, %v1644
    %1646 = vdwg.mxu0
    %s1647 = scalar_lea.vmem %s12, 32
    %v1648 = vld [vmem:[%s1647] sm:$0xff]
    %v1649 = vld [vmem:[%s1647 + $0x8] sm:$0xff]
    %v1650 = vld [vmem:[%s1647 + $0x10] sm:$0xff]
    %v1651 = vld [vmem:[%s1647 + $0x18] sm:$0xff]
    %v1653 = vsel %vm563, %v1576, 0
    %1655 = vmatpush.msra.mxu0 0.0
    %1656 = vmatpush.msra.mxu0 0.0
    %1657 = vmatpush.msra.mxu0 0.0
    %1658 = vmatpush.msra.mxu0 0.0
    %1659 = vmatpush.msra.mxu0 0.0
    %1660 = vmatpush.msra.mxu0 0.0
    %1661 = vmatpush.msra.mxu0 0.0
    %1662 = vmatpush.msra.mxu0 0.0
    %1663 = vmatpush.msra.mxu0 0.0
    %1664 = vmatpush.msra.mxu0 0.0
    %1665 = vmatpush.msra.mxu0 0.0
    %1666 = vmatpush.msra.mxu0 0.0
    %1667 = vmatpush.msra.mxu0 0.0
    %1668 = vmatpush.msra.mxu0 0.0
    %1669 = vmatpush.msra.mxu0 0.0
    %1670 = vmatpush.msra.mxu0 %v1648
    %1671 = vmatmul.f32.gmra.mxu0 %v1653
    %v1672 = vpop.f32.mrf.mxu0
    %v1673 = vadd.f32 0.0, %v1672
    %1674 = vdwg.mxu0
    %v1676 = vsel %vm563, %v1599, 0
    %1678 = vmatpush.msra.mxu0 0.0
    %1679 = vmatpush.msra.mxu0 0.0
    %1680 = vmatpush.msra.mxu0 0.0
    %1681 = vmatpush.msra.mxu0 0.0
    %1682 = vmatpush.msra.mxu0 0.0
    %1683 = vmatpush.msra.mxu0 0.0
    %1684 = vmatpush.msra.mxu0 0.0
    %1685 = vmatpush.msra.mxu0 0.0
    %1686 = vmatpush.msra.mxu0 0.0
    %1687 = vmatpush.msra.mxu0 0.0
    %1688 = vmatpush.msra.mxu0 0.0
    %1689 = vmatpush.msra.mxu0 0.0
    %1690 = vmatpush.msra.mxu0 0.0
    %1691 = vmatpush.msra.mxu0 0.0
    %1692 = vmatpush.msra.mxu0 0.0
    %1693 = vmatpush.msra.mxu0 %v1649
    %1694 = vmatmul.f32.gmra.mxu0 %v1676
    %v1695 = vpop.f32.mrf.mxu0
    %v1696 = vadd.f32 0.0, %v1695
    %1697 = vdwg.mxu0
    %v1699 = vsel %vm563, %v1622, 0
    %1701 = vmatpush.msra.mxu0 0.0
    %1702 = vmatpush.msra.mxu0 0.0
    %1703 = vmatpush.msra.mxu0 0.0
    %1704 = vmatpush.msra.mxu0 0.0
    %1705 = vmatpush.msra.mxu0 0.0
    %1706 = vmatpush.msra.mxu0 0.0
    %1707 = vmatpush.msra.mxu0 0.0
    %1708 = vmatpush.msra.mxu0 0.0
    %1709 = vmatpush.msra.mxu0 0.0
    %1710 = vmatpush.msra.mxu0 0.0
    %1711 = vmatpush.msra.mxu0 0.0
    %1712 = vmatpush.msra.mxu0 0.0
    %1713 = vmatpush.msra.mxu0 0.0
    %1714 = vmatpush.msra.mxu0 0.0
    %1715 = vmatpush.msra.mxu0 0.0
    %1716 = vmatpush.msra.mxu0 %v1650
    %1717 = vmatmul.f32.gmra.mxu0 %v1699
    %v1718 = vpop.f32.mrf.mxu0
    %v1719 = vadd.f32 0.0, %v1718
    %1720 = vdwg.mxu0
    %v1722 = vsel %vm563, %v1645, 0
    %1724 = vmatpush.msra.mxu0 0.0
    %1725 = vmatpush.msra.mxu0 0.0
    %1726 = vmatpush.msra.mxu0 0.0
    %1727 = vmatpush.msra.mxu0 0.0
    %1728 = vmatpush.msra.mxu0 0.0
    %1729 = vmatpush.msra.mxu0 0.0
    %1730 = vmatpush.msra.mxu0 0.0
    %1731 = vmatpush.msra.mxu0 0.0
    %1732 = vmatpush.msra.mxu0 0.0
    %1733 = vmatpush.msra.mxu0 0.0
    %1734 = vmatpush.msra.mxu0 0.0
    %1735 = vmatpush.msra.mxu0 0.0
    %1736 = vmatpush.msra.mxu0 0.0
    %1737 = vmatpush.msra.mxu0 0.0
    %1738 = vmatpush.msra.mxu0 0.0
    %1739 = vmatpush.msra.mxu0 %v1651
    %1740 = vmatmul.f32.gmra.mxu0 %v1722
    %v1741 = vpop.f32.mrf.mxu0
    %v1742 = vadd.f32 0.0, %v1741
    %1743 = vdwg.mxu0
    %v1744 = vadd.f32 %v1673, %v1696
    %v1745 = vadd.f32 %v1744, %v1719
    %v1746 = vadd.f32 %v1745, %v1742
    %s1747 = scalar_lea.vmem %s13, 1
    %v1748 = vld [vmem:[%s1747] sm:$0x1]
    %v1750 = vperm.slane %v1748, 0
    %v1752 = vadd.f32 %v1746, %v1750
    %v1753 = vadd.f32 %v1057, %v1752
    %s1754 = scalar_lea.vmem %s14, 1
    %v1755 = vld [vmem:[%s1754] sm:$0x1]
    %s1756 = scalar_lea.vmem %s15, 1
    %v1757 = vld [vmem:[%s1756] sm:$0x1]
    %v1758 = vsel %vm186, %v1753, 0.0
    %1759 = vadd.xlane.f32.xlu0 %v1758
    %v1760 = vpop.xlane.xlu0 %1759
    %v1761 = vmul.f32 %v1760, %v196
    %v1762 = vsub.f32 %v1753, %v1761
    %v1763 = vmul.f32 %v1762, %v1762
    %v1764 = vsel %vm186, %v1763, 0.0
    %1765 = vadd.xlane.f32.xlu0 %v1764
    %v1766 = vpop.xlane.xlu0 %1765
    %v1767 = vmul.f32 %v1766, %v196
    %v1768 = vadd.f32 %v1767, 1e-12
    %v1769 = vrsqrt.pop %v1768
    %v1770 = vmul.f32 %v1769, %v1768
    %v1771 = vmul.f32 %v1770, %v1769
    %v1772 = vmul.f32 0.5, %v1771
    %v1773 = vsub.f32 1.5, %v1772
    %v1774 = vmul.f32 %v1769, %v1773
    %vm1775 = vweird.f32 %v1768
    %vm1776 = vweird.f32 %v1769
    %vm1777 = vmor %vm1775, %vm1776
    %v1778 = vsel %vm1777, %v1769, %v1774
    %v1779 = vmul.f32 %v1762, %v1778
    %v1781 = vperm.slane %v1755, 0
    %v1783 = vmul.f32 %v1779, %v1781
    %v1785 = vperm.slane %v1757, 0
    %v1787 = vadd.f32 %v1783, %v1785
    %s1788 = scalar_lea.vmem %s16, 32
    %v1789 = vld [vmem:[%s1788] sm:$0xff]
    %v1790 = vld [vmem:[%s1788 + $0x8] sm:$0xff]
    %v1791 = vld [vmem:[%s1788 + $0x10] sm:$0xff]
    %v1792 = vld [vmem:[%s1788 + $0x18] sm:$0xff]
    %s1793 = scalar_lea.vmem %s17, 1
    %v1794 = vld [vmem:[%s1793] sm:$0x1]
    %v1796 = vperm.slane %v1794, 0
    %v1799 = vsel %vm186, %v1787, 0
    %1801 = vmatpush.msra.mxu0 0.0
    %1802 = vmatpush.msra.mxu0 0.0
    %1803 = vmatpush.msra.mxu0 0.0
    %1804 = vmatpush.msra.mxu0 0.0
    %1805 = vmatpush.msra.mxu0 0.0
    %1806 = vmatpush.msra.mxu0 0.0
    %1807 = vmatpush.msra.mxu0 0.0
    %1808 = vmatpush.msra.mxu0 0.0
    %1809 = vmatpush.msra.mxu0 0.0
    %1810 = vmatpush.msra.mxu0 0.0
    %1811 = vmatpush.msra.mxu0 0.0
    %1812 = vmatpush.msra.mxu0 0.0
    %1813 = vmatpush.msra.mxu0 %v1792
    %1814 = vmatpush.msra.mxu0 %v1791
    %1815 = vmatpush.msra.mxu0 %v1790
    %1816 = vmatpush.msra.mxu0 %v1789
    %1817 = vmatmul.f32.gmra.mxu0 %v1799
    %v1818 = vpop.f32.mrf.mxu0
    %v1819 = vadd.f32 %v1796, %v1818
    %1820 = vdwg.mxu0
    %v1821 = vmul.f32 %v1819, 0.5
    %v1822 = vmul.f32 %v1819, 0.044715
    %v1823 = vmul.f32 %v1822, %v1819
    %v1824 = vmul.f32 %v1823, %v1819
    %v1825 = vadd.f32 %v1819, %v1824
    %v1826 = vmul.f32 %v1825, 0.7978846
    %v1827 = vtanh.pop %v1826
    %v1828 = vadd.f32 %v1827, 1.0
    %v1829 = vmul.f32 %v1821, %v1828
    %s1830 = scalar_lea.vmem %s18, 128
    %v1831 = vld [vmem:[%s1830] sm:$0xff]
    %v1832 = vld [vmem:[%s1830 + $0x8] sm:$0xff]
    %v1833 = vld [vmem:[%s1830 + $0x10] sm:$0xff]
    %v1834 = vld [vmem:[%s1830 + $0x18] sm:$0xff]
    %v1835 = vld [vmem:[%s1830 + $0x20] sm:$0xff]
    %v1836 = vld [vmem:[%s1830 + $0x28] sm:$0xff]
    %v1837 = vld [vmem:[%s1830 + $0x30] sm:$0xff]
    %v1838 = vld [vmem:[%s1830 + $0x38] sm:$0xff]
    %v1839 = vld [vmem:[%s1830 + $0x40] sm:$0xff]
    %v1840 = vld [vmem:[%s1830 + $0x48] sm:$0xff]
    %v1841 = vld [vmem:[%s1830 + $0x50] sm:$0xff]
    %v1842 = vld [vmem:[%s1830 + $0x58] sm:$0xff]
    %v1843 = vld [vmem:[%s1830 + $0x60] sm:$0xff]
    %v1844 = vld [vmem:[%s1830 + $0x68] sm:$0xff]
    %v1845 = vld [vmem:[%s1830 + $0x70] sm:$0xff]
    %v1846 = vld [vmem:[%s1830 + $0x78] sm:$0xff]
    %s1847 = scalar_lea.vmem %s19, 1
    %v1848 = vld [vmem:[%s1847] sm:$0x1]
    %v1850 = vperm.slane %v1848, 0
    %1852 = vmatpush.msra.mxu0 %v1846
    %1853 = vmatpush.msra.mxu0 %v1845
    %1854 = vmatpush.msra.mxu0 %v1844
    %1855 = vmatpush.msra.mxu0 %v1843
    %1856 = vmatpush.msra.mxu0 %v1842
    %1857 = vmatpush.msra.mxu0 %v1841
    %1858 = vmatpush.msra.mxu0 %v1840
    %1859 = vmatpush.msra.mxu0 %v1839
    %1860 = vmatpush.msra.mxu0 %v1838
    %1861 = vmatpush.msra.mxu0 %v1837
    %1862 = vmatpush.msra.mxu0 %v1836
    %1863 = vmatpush.msra.mxu0 %v1835
    %1864 = vmatpush.msra.mxu0 %v1834
    %1865 = vmatpush.msra.mxu0 %v1833
    %1866 = vmatpush.msra.mxu0 %v1832
    %1867 = vmatpush.msra.mxu0 %v1831
    %1868 = vmatmul.f32.gmra.mxu0 %v1829
    %v1869 = vpop.f32.mrf.mxu0
    %v1870 = vadd.f32 %v1850, %v1869
    %1871 = vdwg.mxu0
    %v1872 = vadd.f32 %v1787, %v1870
    %s1873 = scalar_lea.vmem %s20, 1
    %v1874 = vld [vmem:[%s1873] sm:$0x1]
    %s1875 = scalar_lea.vmem %s21, 1
    %v1876 = vld [vmem:[%s1875] sm:$0x1]
    %v1877 = vsel %vm186, %v1872, 0.0
    %1878 = vadd.xlane.f32.xlu0 %v1877
    %v1879 = vpop.xlane.xlu0 %1878
    %v1880 = vmul.f32 %v1879, %v196
    %v1881 = vsub.f32 %v1872, %v1880
    %v1882 = vmul.f32 %v1881, %v1881
    %v1883 = vsel %vm186, %v1882, 0.0
    %1884 = vadd.xlane.f32.xlu0 %v1883
    %v1885 = vpop.xlane.xlu0 %1884
    %v1886 = vmul.f32 %v1885, %v196
    %v1887 = vadd.f32 %v1886, 1e-12
    %v1888 = vrsqrt.pop %v1887
    %v1889 = vmul.f32 %v1888, %v1887
    %v1890 = vmul.f32 %v1889, %v1888
    %v1891 = vmul.f32 0.5, %v1890
    %v1892 = vsub.f32 1.5, %v1891
    %v1893 = vmul.f32 %v1888, %v1892
    %vm1894 = vweird.f32 %v1887
    %vm1895 = vweird.f32 %v1888
    %vm1896 = vmor %vm1894, %vm1895
    %v1897 = vsel %vm1896, %v1888, %v1893
    %v1898 = vmul.f32 %v1881, %v1897
    %v1900 = vperm.slane %v1874, 0
    %v1902 = vmul.f32 %v1898, %v1900
    %v1904 = vperm.slane %v1876, 0
    %v1906 = vadd.f32 %v1902, %v1904
    %v1907 = vld [vmem:[%s22] sm:$0xff]
    %v1908 = vld [vmem:[%s22 + $0x8] sm:$0xff]
    %v1909 = vld [vmem:[%s22 + $0x10] sm:$0xff]
    %v1910 = vld [vmem:[%s22 + $0x18] sm:$0xff]
    %v1911 = vld [vmem:[%s23] sm:$0x1]
    %v1913 = vperm.slane %v1911, 0
    %v1916 = vsel %vm186, %v1906, 0
    %1918 = vmatpush.msra.mxu0 0.0
    %1919 = vmatpush.msra.mxu0 0.0
    %1920 = vmatpush.msra.mxu0 0.0
    %1921 = vmatpush.msra.mxu0 0.0
    %1922 = vmatpush.msra.mxu0 0.0
    %1923 = vmatpush.msra.mxu0 0.0
    %1924 = vmatpush.msra.mxu0 0.0
    %1925 = vmatpush.msra.mxu0 0.0
    %1926 = vmatpush.msra.mxu0 0.0
    %1927 = vmatpush.msra.mxu0 0.0
    %1928 = vmatpush.msra.mxu0 0.0
    %1929 = vmatpush.msra.mxu0 0.0
    %1930 = vmatpush.msra.mxu0 %v1910
    %1931 = vmatpush.msra.mxu0 %v1909
    %1932 = vmatpush.msra.mxu0 %v1908
    %1933 = vmatpush.msra.mxu0 %v1907
    %1934 = vmatmul.f32.gmra.mxu0 %v1916
    %v1935 = vpop.f32.mrf.mxu0
    %v1936 = vadd.f32 %v1913, %v1935
    %1937 = vdwg.mxu0
    %vm1938 = vcmask 39936
    %1939 = vst.msk [vmem:[#allocation5] sm:$0xff] %vm1938, %v1936
    %v1940 = vld [vmem:[%s24] sm:$0x1f]
    %vm1941 = vcmp.eq.s32.totalorder %v135, 3
    %v1942 = vsel %vm1941, 0.0, -10000.0
    loop: start=0, step=1, limit=8
    $region106: #{_forward_impl.1} parent=1 // loop_pre_header
      _
    $region107: #{_forward_impl.1} parent=1 // loop_header
      %s1944 = sphi 0, %s1948
      %p1945 = scmp.ge.s32.totalorder %s1944, 8
      %v1949 = vphi %v1942, %v2032
      %v1950 = vphi 0, %v1991
    $region108: #{_forward_impl.1} parent=1 // loop_header_branch
      %1947 = sbr.rel (%p1945) target = $region112
    $region109: #{_forward_impl.1} parent=1 // loop_body
      %v1951 = vperm.slane %v1949, 0
      %v1952 = vadd.f32 %v1951, %v1940
      %vm1953 = vcmask 36864
      %v1954 = vsel %vm1953, %v1952, -inf
      %1955 = vmax.xlane.f32.xlu0 %v1954
      %v1956 = vpop.xlane.xlu0 %1955
      %vm1957 = vcmp.eq.f32.partialorder %v1952, %v1956
      %v1958 = vsel %vm1957, %v135, 5
      %v1959 = vsel %vm1953, %v1958, 2147483647
      %v1960 = vand.u32 %v1959, 65535
      %v1961 = vshra.s32 %v1959, 16
      %v1962 = vcvt.s32.f32 %v1960
      %v1963 = vcvt.s32.f32 %v1961
      %1964 = vmin.xlane.f32.xlu0 %v1963
      %v1965 = vpop.xlane.xlu0 %1964
      %vm1966 = vcmp.eq.f32.partialorder %v1963, %v1965
      %v1967 = vsel %vm1966, %v1962, inf
      %1968 = vmin.xlane.f32.xlu0 %v1967
      %v1969 = vpop.xlane.xlu0 %1968
      %v1970 = vcvt.f32.s32 %v1969
      %v1971 = vcvt.f32.s32 %v1965
      %v1972 = vshll.u32 %v1971, 16
      %v1973 = vadd.s32 %v1972, %v1970
      %v1974 = vstv %s1944
      %vm1975 = vcmp.eq.s32.totalorder %v101, %v1974
      %v1976 = vsel %vm1975, 1, 0
      %vm1977 = vcmp.eq.s32.totalorder %v1976, 1
      %v1978 = vperm.slane %v1973, %v135
      %vm1979 = vcmask 1042434
      %v1980 = vsel %vm1979, %v1978, %v1978
      %vm1981 = vcmask 1043459
      %v1982 = vsel %vm1981, %v1978, %v1980
      %vm1983 = vcmask 1044484
      %v1984 = vsel %vm1983, %v1978, %v1982
      %vm1985 = vcmask 1045509
      %v1986 = vsel %vm1985, %v1978, %v1984
      %vm1987 = vcmask 1046534
      %v1988 = vsel %vm1987, %v1978, %v1986
      %vm1989 = vcmask 1047559
      %v1990 = vsel %vm1989, %v1978, %v1988
      %v1991 = vsel %vm1977, %v1990, %v1950
      %v1992 = vsel %vm1977, %v1936, 0.0
      %v1993 = vsel %vm1938, %v1992, 0.0
      %v1994 = vrot.slane %v1993, 4
      %v1995 = vadd.f32 %v1993, %v1994
      %v1996 = vrot.slane %v1995, 2
      %v1997 = vadd.f32 %v1995, %v1996
      %v1998 = vrot.slane %v1997, 1
      %v1999 = vadd.f32 %v1997, %v1998
      %2000 = vxpose.xlu0.b32.start [1/16] %v1956, 128
      %2001 = vxpose.xlu0.b32.cont [2/16] 0.0, 128
      %2002 = vxpose.xlu0.b32.cont [3/16] 0.0, 128
      %2003 = vxpose.xlu0.b32.cont [4/16] 0.0, 128
      %2004 = vxpose.xlu0.b32.cont [5/16] 0.0, 128
      %2005 = vxpose.xlu0.b32.cont [6/16] 0.0, 128
      %2006 = vxpose.xlu0.b32.cont [7/16] 0.0, 128
      %2007 = vxpose.xlu0.b32.cont [8/16] 0.0, 128
      %2008 = vxpose.xlu0.b32.cont [9/16] 0.0, 128
      %2009 = vxpose.xlu0.b32.cont [10/16] 0.0, 128
      %2010 = vxpose.xlu0.b32.cont [11/16] 0.0, 128
      %2011 = vxpose.xlu0.b32.cont [12/16] 0.0, 128
      %2012 = vxpose.xlu0.b32.cont [13/16] 0.0, 128
      %2013 = vxpose.xlu0.b32.cont [14/16] 0.0, 128
      %2014 = vxpose.xlu0.b32.cont [15/16] 0.0, 128
      %2015 = vxpose.xlu0.b32.end [16/16] 0.0, 128
      %v2016 = vpop.trf.xlu0
      %v2017 = vpop.trf.xlu0
      %v2018 = vpop.trf.xlu0
      %v2019 = vpop.trf.xlu0
      %v2020 = vpop.trf.xlu0
      %v2021 = vpop.trf.xlu0
      %v2022 = vpop.trf.xlu0
      %v2023 = vpop.trf.xlu0
      %v2024 = vpop.trf.xlu0
      %v2025 = vpop.trf.xlu0
      %v2026 = vpop.trf.xlu0
      %v2027 = vpop.trf.xlu0
      %v2028 = vpop.trf.xlu0
      %v2029 = vpop.trf.xlu0
      %v2030 = vpop.trf.xlu0
      %v2031 = vpop.trf.xlu0
      %v2032 = vadd.f32 %v2016, %v1999
    $region110: #{_forward_impl.1} parent=1 // loop_footer
      %s1948 = sadd.s32 1, %s1944
    $region111: #{_forward_impl.1} parent=1 // loop_footer_branch
      %1943 = sbr.rel target = $region107
    $region112: #{_forward_impl.1} parent=1 // loop_exit
      _
    %v2034 = vrot.slane %v1940, 4
    %v2036 = vadd.f32 %v1949, %v2034
    %vm2037 = vcmask 32768
    %v2038 = vsel %vm2037, %v2036, -inf
    %2039 = vmax.xlane.f32.xlu0 %v2038
    %v2040 = vpop.xlane.xlu0 %2039
    %vm2041 = vcmp.eq.f32.partialorder %v2036, %v2040
    %v2042 = vsel %vm2041, %v135, 5
    %v2043 = vsel %vm2037, %v2042, 2147483647
    %v2044 = vand.u32 %v2043, 65535
    %v2045 = vshra.s32 %v2043, 16
    %v2046 = vcvt.s32.f32 %v2044
    %v2047 = vcvt.s32.f32 %v2045
    %2048 = vmin.xlane.f32.xlu0 %v2047
    %v2049 = vpop.xlane.xlu0 %2048
    %vm2050 = vcmp.eq.f32.partialorder %v2047, %v2049
    %v2051 = vsel %vm2050, %v2046, inf
    %2052 = vmin.xlane.f32.xlu0 %v2051
    %v2053 = vpop.xlane.xlu0 %2052
    %v2054 = vcvt.f32.s32 %v2053
    %v2055 = vcvt.f32.s32 %v2049
    %v2056 = vshll.u32 %v2055, 16
    %v2057 = vadd.s32 %v2056, %v2054
    %vm2058 = vcmask 0
    %2059 = vst.msk [vmem:[#allocation8] sm:$0x1] %vm2058, %v2040
    %vm2060 = vcmp.eq.s32.totalorder %v135, 7
    %v2061 = vsel %vm2060, %v2057, 0
    loop: start=0, step=1, limit=7
    $region113: #{_forward_impl.1} parent=1 // loop_pre_header
      _
    $region114: #{_forward_impl.1} parent=1 // loop_header
      %s2063 = sphi 0, %s2067
      %p2064 = scmp.ge.s32.totalorder %s2063, 7
      %v2068 = vphi %v2057, %v2097
      %v2069 = vphi %v2061, %v2101
    $region115: #{_forward_impl.1} parent=1 // loop_header_branch
      %2066 = sbr.rel (%p2064) target = $region119
    $region116: #{_forward_impl.1} parent=1 // loop_body
      %s2070 = ssub.s32 7, %s2063
      %v2071 = vstv %s2070
      %vm2072 = vcmp.eq.s32.totalorder %v101, %v2071
      %v2073 = vsel %vm2072, 1, 0
      %vm2074 = vcmp.eq.s32.totalorder %v2073, 1
      %v2075 = vsel %vm2074, %v1950, 0
      %v2076 = vsel %vm1938, %v2075, 0
      %v2077 = vrot.slane %v2076, 4
      %v2078 = vadd.s32 %v2076, %v2077
      %v2079 = vrot.slane %v2078, 2
      %v2080 = vadd.s32 %v2078, %v2079
      %v2081 = vrot.slane %v2080, 1
      %v2082 = vadd.s32 %v2080, %v2081
      %vm2083 = vcmp.eq.s32.totalorder %v135, %v2068
      %v2084 = vsel %vm2083, %v2082, 0
      %v2085 = vsel %vm2037, %v2084, 0
      %v2086 = vand.u32 %v2085, 65535
      %v2087 = vshrl.u32 %v2085, 16
      %v2088 = vcvt.s32.f32 %v2086
      %v2089 = vcvt.s32.f32 %v2087
      %2090 = vadd.xlane.f32.xlu0 %v2088
      %v2091 = vpop.xlane.xlu0 %2090
      %2092 = vadd.xlane.f32.xlu0 %v2089
      %v2093 = vpop.xlane.xlu0 %2092
      %v2094 = vcvt.f32.s32 %v2091
      %v2095 = vcvt.f32.s32 %v2093
      %v2096 = vshll.u32 %v2095, 16
      %v2097 = vadd.s32 %v2096, %v2094
      %s2098 = ssub.s32 6, %s2063
      %v2099 = vstv %s2098
      %vm2100 = vcmp.eq.s32.totalorder %v135, %v2099
      %v2101 = vsel %vm2100, %v2097, %v2069
    $region117: #{_forward_impl.1} parent=1 // loop_footer
      %s2067 = sadd.s32 1, %s2063
    $region118: #{_forward_impl.1} parent=1 // loop_footer_branch
      %2062 = sbr.rel target = $region114
    $region119: #{_forward_impl.1} parent=1 // loop_exit
      _
    %v2102 = vsel %vm102, 1, 0
    %vm2103 = vcmp.eq.s32.totalorder %v2102, 1
    %v2104 = vsel %vm2103, %v1950, 0
    %v2105 = vsel %vm1938, %v2104, 0
    %v2106 = vrot.slane %v2105, 4
    %v2107 = vadd.s32 %v2105, %v2106
    %v2108 = vrot.slane %v2107, 2
    %v2109 = vadd.s32 %v2107, %v2108
    %v2110 = vrot.slane %v2109, 1
    %v2111 = vadd.s32 %v2109, %v2110
    %vm2112 = vcmp.eq.s32.totalorder %v135, %v2068
    %v2113 = vsel %vm2112, %v2111, 0
    %v2114 = vsel %vm2037, %v2113, 0
    %v2115 = vand.u32 %v2114, 65535
    %v2116 = vshrl.u32 %v2114, 16
    %v2117 = vcvt.s32.f32 %v2115
    %v2118 = vcvt.s32.f32 %v2116
    %2119 = vadd.xlane.f32.xlu0 %v2117
    %v2120 = vpop.xlane.xlu0 %2119
    %2121 = vadd.xlane.f32.xlu0 %v2118
    %v2122 = vpop.xlane.xlu0 %2121
    %v2123 = vcvt.f32.s32 %v2120
    %v2124 = vcvt.f32.s32 %v2122
    %v2125 = vshll.u32 %v2124, 16
    %v2126 = vadd.s32 %v2125, %v2123
    %vm2127 = vcmask 57344
    %2128 = vst.msk [vmem:[#allocation6] sm:$0x1] %vm2127, %v2069
    %2129 = vst.msk [vmem:[#allocation9] sm:$0x1] %vm2058, %v2126
    // Predicated region
    $region120: #{_forward_impl.1} parent=1 // pred_check
      _
    $region121: #{_forward_impl.1} parent=1 // pred_check_branch
      %2131 = sbr.rel (0) target = $region123
    $region122: #{_forward_impl.1} parent=1 // pred_region
      %2133 = vsyncadd [#allocation3], 0
      %s2135 = sshll.u32 [#allocation5], 4
      %s2136 = int_to_ptr.vmem [resolvable:$true] %s2135
      %s2137 = sshll.u32 %s25, 4
      %s2138 = int_to_ptr.hbm [resolvable:$true] %s2137
      %2140 = dma.vmem_to_hbm [thread:$0]  %s2136, 128, %s2138, [#allocation3]
    $region123: #{_forward_impl.1} parent=1 // pred_fallthru
      _
    // Predicated region
    $region124: #{_forward_impl.1} parent=1 // pred_check
      _
    $region125: #{_forward_impl.1} parent=1 // pred_check_branch
      %2142 = sbr.rel (0) target = $region127
    $region126: #{_forward_impl.1} parent=1 // pred_region
      %2144 = vsyncadd [#allocation7], 0
      %s2146 = sshll.u32 [#allocation6], 4
      %s2147 = int_to_ptr.vmem [resolvable:$true] %s2146
      %s2148 = sshll.u32 %s26, 4
      %s2149 = int_to_ptr.hbm [resolvable:$true] %s2148
      %2151 = dma.vmem_to_hbm [thread:$0]  %s2147, 16, %s2149, [#allocation7]
    $region127: #{_forward_impl.1} parent=1 // pred_fallthru
      _
    // Predicated region
    $region128: #{_forward_impl.1} parent=1 // pred_check
      _
    $region129: #{_forward_impl.1} parent=1 // pred_check_branch
      %2153 = sbr.rel (0) target = $region131
    $region130: #{_forward_impl.1} parent=1 // pred_region
      %2155 = vsyncadd [#allocation7], 0
      %s2157 = sshll.u32 [#allocation8], 4
      %s2158 = int_to_ptr.vmem [resolvable:$true] %s2157
      %s2159 = sshll.u32 %s27, 4
      %s2160 = int_to_ptr.hbm [resolvable:$true] %s2159
      %2162 = dma.vmem_to_hbm [thread:$0]  %s2158, 16, %s2160, [#allocation7]
    $region131: #{_forward_impl.1} parent=1 // pred_fallthru
      _
    // Predicated region
    $region132: #{_forward_impl.1} parent=1 // pred_check
      _
    $region133: #{_forward_impl.1} parent=1 // pred_check_branch
      %2164 = sbr.rel (0) target = $region135
    $region134: #{_forward_impl.1} parent=1 // pred_region
      %2166 = vsyncadd [#allocation10], 0
      %s2168 = sshll.u32 [#allocation9], 4
      %s2169 = int_to_ptr.vmem [resolvable:$true] %s2168
      %s2170 = sshll.u32 %s28, 4
      %s2171 = int_to_ptr.hbm [resolvable:$true] %s2170
      %2173 = dma.vmem_to_hbm [thread:$0]  %s2169, 16, %s2171, [#allocation10]
    $region135: #{_forward_impl.1} parent=1 // pred_fallthru
      _
    // Predicated region
    $region136: #{_forward_impl.1} parent=1 // pred_check
      _
    $region137: #{_forward_impl.1} parent=1 // pred_check_branch
      %2175 = sbr.rel (0) target = $region139
    $region138: #{_forward_impl.1} parent=1 // pred_region
      %2177 = dma.done [#allocation3], 128
    $region139: #{_forward_impl.1} parent=1 // pred_fallthru
      _
    // Predicated region
    $region140: #{_forward_impl.1} parent=1 // pred_check
      _
    $region141: #{_forward_impl.1} parent=1 // pred_check_branch
      %2179 = sbr.rel (0) target = $region143
    $region142: #{_forward_impl.1} parent=1 // pred_region
      %2181 = dma.done [#allocation7], 16
    $region143: #{_forward_impl.1} parent=1 // pred_fallthru
      _
    // Predicated region
    $region144: #{_forward_impl.1} parent=1 // pred_check
      _
    $region145: #{_forward_impl.1} parent=1 // pred_check_branch
      %2183 = sbr.rel (0) target = $region147
    $region146: #{_forward_impl.1} parent=1 // pred_region
      %2185 = dma.done [#allocation7], 16
    $region147: #{_forward_impl.1} parent=1 // pred_fallthru
      _
    // Predicated region
    $region148: #{_forward_impl.1} parent=1 // pred_check
      _
    $region149: #{_forward_impl.1} parent=1 // pred_check_branch
      %2187 = sbr.rel (0) target = $region151
    $region150: #{_forward_impl.1} parent=1 // pred_region
      %2189 = dma.done [#allocation10], 16
    $region151: #{_forward_impl.1} parent=1 // pred_fallthru
      _
    %2190 = vsyncpa [#allocation3], 1
    %2191 = vsyncpa [#allocation7], 1
    %2192 = vsyncpa [#allocation10], 1
    %2193 = vsyncpa [#allocation4], 1

</llo_original>
